<compile_context>
chip_gen: v6e
topology: v6e:2x2x1
jax: 0.10.0
libtpu: 0.0.40
codegen_flags: <defaults>
</compile_context>

<pallas_src>
import jax
import jax.numpy as jnp
from jax import lax
from jax.experimental import pallas as pl
from jax.experimental.pallas import tpu as pltpu


def _gru_baseline_kernel(x_ref, e_ref, w_enc_ref, w_ih_ref, w_hh_ref, bias_ref,
                         out_ref, gi_scr, h_scr):
    f32 = jnp.float32
    Bt = x_ref.shape[0]            # batch tile (multiple of 8 sublanes)
    HP = w_enc_ref.shape[1]        # lane-padded hidden width (multiple of 128)
    T = h_scr.shape[0]
    E = e_ref.shape[2]

    # Packed [1, 7*HP] bias row: [ b0 | b_ih(+b_hh_rz) r,z,n | b_hh_n | w_v | b_v ]
    b0 = bias_ref[:, 0:HP]
    b_ihz = bias_ref[:, HP:4 * HP]
    b_hh_n = bias_ref[:, 4 * HP:5 * HP]
    w_v = bias_ref[:, 5 * HP:6 * HP]
    b_v = bias_ref[:, 6 * HP:6 * HP + 1]

    # ---------------- off the serial path ----------------
    # object_encoder (Linear) + Identity layer-norm; sender/receiver hidden-state offsets
    # are pre-summed into b0 by the wrapper.  Dropout(p=0) masks are all ones -> no-op.
    h0 = jnp.dot(x_ref[...], w_enc_ref[...], preferred_element_type=f32) + b0

    # Input-to-hidden projection of every step's cell input, hoisted out of the
    # recurrence as ONE matmul: [T*Bt, E] @ [E, 3*HP].  The leading-dim merge reshape is
    # layout-preserving because Bt is a multiple of 8 sublanes.  The r/z recurrent biases
    # are already folded into b_ihz by the wrapper.
    e2 = e_ref[...].reshape(T * Bt, E)
    gi_scr[...] = jnp.dot(e2, w_ih_ref[...], preferred_element_type=f32) + b_ihz
    # TODO(synk): at realistic sizes, cast e2/w_ih to bf16 (preferred_element_type=f32)
    #             for ~3x MXU throughput on this bulk projection (kept f32 for exactness).

    # Hoist the single remaining per-step bias broadcast out of the loop
    # (JAX does not CSE broadcast_in_dim; the unrolled loop would re-broadcast T times).
    b_hh_n_b = jnp.broadcast_to(b_hh_n, (Bt, HP))

    # -------- latency-critical serial chain: per-gate matmuls + elementwise gates --------
    # Recurrent weights are read from the VMEM ref inside the loop (no [HP,3HP] value held
    # live across unrolled iterations -> no register spills on the chain).
    # TODO(synk): weight-stationary MXU staging (pltpu.matmul_push_rhs once, then
    #             matmul_acc_lhs/matmul_pop per step, per-gate mxu_index placement) would
    #             remove the per-step RHS re-push entirely.
    def step(t, h):
        row = pl.multiple_of(t * Bt, Bt)               # Bt % 8 == 0 -> sublane-aligned
        gi = gi_scr[pl.ds(row, Bt), :]                 # [Bt, 3*HP], whole-tile load
        gh_r = jnp.dot(h, w_hh_ref[:, 0:HP], preferred_element_type=f32)
        gh_z = jnp.dot(h, w_hh_ref[:, HP:2 * HP], preferred_element_type=f32)
        gh_n = jnp.dot(h, w_hh_ref[:, 2 * HP:3 * HP], preferred_element_type=f32)
        # Gate blocks padded to 128 lanes -> all slices are whole-vreg, lane-aligned.
        r = jax.nn.sigmoid(gi[:, 0:HP] + gh_r)                     # b_hr folded into gi
        z = jax.nn.sigmoid(gi[:, HP:2 * HP] + gh_z)                # b_hz folded into gi
        n = jnp.tanh(gi[:, 2 * HP:3 * HP] + r * (gh_n + b_hh_n_b)) # b_hn must stay inside
        h_new = (1.0 - z) * n + z * h
        # layer_norm = Identity, residual connection disabled (module defaults).
        h_scr[t] = h_new                               # defer value head off the chain
        return h_new

    lax.fori_loop(0, T, step, h0, unroll=min(T, 8))    # cap unroll: bounded vreg pressure

    # -------- deferred value head: VPU multiply + lane reduce (no N=1 MXU matmul) --------
    vals = jnp.sum(h_scr[...] * w_v, axis=-1) + b_v    # [T, Bt]; batch on the lane axis
    out_ref[...] = vals


def input_dependent_baseline(x, message, params, *, hidden_size, vocab_size=None):
    """Forward pass of InputDependentBaseline (GRU cell, no LN, no residual, p=0)."""
    del vocab_size  # embedding lookup is a wrapper-side gather; vocab size is implicit
    f32 = jnp.float32
    B, F = x.shape
    T = message.shape[1]
    H = hidden_size
    E = params['emb'].shape[1]
    HP = ((H + 127) // 128) * 128      # pad hidden / per-gate width to full 128-lane vregs
    BP = ((B + 7) // 8) * 8            # pad batch to whole sublane tiles

    # Batch tile for the parallel grid (toy sizes -> single block of the full padded batch).
    Btile = BP
    for cand in (512, 256, 128):
        if BP > cand and BP % cand == 0:
            Btile = cand
            break
    nb = BP // Btile

    def pad_lanes(a):                  # [rows, H] -> [rows, HP]  (exact zero pad)
        return jnp.pad(a, ((0, 0), (0, HP - a.shape[1])))

    def pad_gates(a):                  # [rows, 3H] -> [rows, 3*HP], one 128-lane block/gate
        return jnp.concatenate(
            [pad_lanes(a[:, g * H:(g + 1) * H]) for g in range(3)], axis=1)

    # Lane/gate padded parameters (padding is exact zeros -> numerics unchanged).
    w_enc_p = pad_lanes(params['w_enc'])                                        # [F, HP]
    w_ih_p = pad_gates(params['w_ih_t'])                                        # [E, 3HP]
    w_hh_p = jnp.pad(pad_gates(params['w_hh_t']), ((0, HP - H), (0, 0)))        # [HP, 3HP]

    # Packed bias/value row: [ b0 | b_ih(+b_hh_rz) | b_hh_n | w_v | b_v ] -> [1, 7*HP].
    # Only the r/z columns of b_hh may be folded into the input projection; the n-gate
    # recurrent bias must stay inside r*(gh_n + b_hn).
    b_hh = params['b_hh']
    b_ihz = params['b_ih'] + jnp.concatenate(
        [b_hh[:, 0:H], b_hh[:, H:2 * H], jnp.zeros((1, H), f32)], axis=1)
    bias_pack = jnp.concatenate([
        pad_lanes(params['b_enc'] + params['sender_h'] + params['recv_h']),     # b0
        pad_gates(b_ihz),                                                       # b_ih + rz
        pad_lanes(b_hh[:, 2 * H:3 * H]),                                        # b_hh_n
        pad_lanes(params['w_v'].T),                                             # w_v row
        jnp.pad(params['b_v'], ((0, 0), (0, HP - 1))),                          # b_v @ lane0
    ], axis=1)                                                                  # [1, 7HP]

    # Cell inputs per step: e[0] = bos, e[t] = emb[message[:, t-1]].  The last message
    # token is never consumed (matches the PyTorch loop); the data-dependent gather stays
    # in the wrapper so the kernel never sees `message`.  Batch padded to BP (zeros).
    bos = jnp.broadcast_to(params['bos'], (B, E))[:, None, :]                   # [B, 1, E]
    emb_prev = params['emb'][message[:, :T - 1]]                                # [B,T-1,E]
    e_bte = jnp.concatenate([bos, emb_prev], axis=1)                            # [B, T, E]
    e3 = jnp.transpose(e_bte, (1, 0, 2))                                        # [T, B, E]
    e3 = jnp.pad(e3, ((0, 0), (0, BP - B), (0, 0)))                             # [T, BP, E]
    x_p = jnp.pad(x, ((0, BP - B), (0, 0)))                                     # [BP, F]

    # Per-block VMEM budget (scratch + double-buffered I/O) -> explicit vmem limit.
    scratch_bytes = (T * Btile * 3 * HP + T * Btile * HP) * 4
    io_bytes = (Btile * F + T * Btile * E + F * HP + E * 3 * HP
                + HP * 3 * HP + 7 * HP + T * Btile) * 4
    vmem_limit = min(max(32 * 1024 * 1024, scratch_bytes + 2 * io_bytes + (4 << 20)),
                     120 * 1024 * 1024)

    out_tb = pl.pallas_call(
        _gru_baseline_kernel,
        out_shape=jax.ShapeDtypeStruct((T, BP), f32),
        grid=(nb,),
        in_specs=[
            pl.BlockSpec((Btile, F), lambda b: (b, 0)),          # x
            pl.BlockSpec((T, Btile, E), lambda b: (0, b, 0)),    # step inputs e
            pl.BlockSpec((F, HP), lambda b: (0, 0)),             # w_enc
            pl.BlockSpec((E, 3 * HP), lambda b: (0, 0)),         # w_ih
            pl.BlockSpec((HP, 3 * HP), lambda b: (0, 0)),        # w_hh
            pl.BlockSpec((1, 7 * HP), lambda b: (0, 0)),         # packed biases / w_v
        ],
        out_specs=pl.BlockSpec((T, Btile), lambda b: (0, b)),
        scratch_shapes=[pltpu.VMEM((T * Btile, 3 * HP), f32),    # gi for all steps
                        pltpu.VMEM((T, Btile, HP), f32)],        # h for all steps
        compiler_params=pltpu.CompilerParams(
            dimension_semantics=("parallel",),
            vmem_limit_bytes=vmem_limit),
    )(x_p, e3, w_enc_p, w_ih_p, w_hh_p, bias_pack)

    # Layout plumbing only: kernel emits [T, BP]; module returns [B, T].
    return out_tb[:, :B].T


def _reference(x, message, params, *, hidden_size):
    """Pure-JAX replica of the PyTorch forward (GRU, no LN, no residual, p=0)."""
    H = hidden_size
    h = x @ params['w_enc'] + params['b_enc']
    h = h + params['sender_h'] + params['recv_h']
    e = jnp.broadcast_to(params['bos'], (x.shape[0], params['bos'].shape[1]))
    outs = []
    for step in range(message.shape[1]):
        gi = e @ params['w_ih_t'] + params['b_ih']
        gh = h @ params['w_hh_t'] + params['b_hh']
        r = jax.nn.sigmoid(gi[:, 0:H] + gh[:, 0:H])
        z = jax.nn.sigmoid(gi[:, H:2 * H] + gh[:, H:2 * H])
        n = jnp.tanh(gi[:, 2 * H:3 * H] + r * gh[:, 2 * H:3 * H])
        h = (1.0 - z) * n + z * h
        outs.append((h @ params['w_v'] + params['b_v'])[:, 0])
        e = params['emb'][message[:, step]]
    return jnp.stack(outs, axis=1)


if __name__ == "__main__":
    B, F, E, H, V, T = 2, 16, 32, 32, 16, 8

    ks = jax.random.split(jax.random.PRNGKey(0), 12)

    params = {
        # object_encoder: Linear(F, H)
        'w_enc': 0.1 * jax.random.normal(ks[0], (F, H), jnp.float32),
        'b_enc': 0.1 * jax.random.normal(ks[1], (1, H), jnp.float32),
        # sender / receiver hidden-state parameters: zeros at init (as in the module)
        'sender_h': jnp.zeros((1, H), jnp.float32),
        'recv_h': jnp.zeros((1, H), jnp.float32),
        # bos_embedding: normal_() in reset_parameters
        'bos': jax.random.normal(ks[2], (1, E), jnp.float32),
        # Embedding(V, E)
        'emb': 0.1 * jax.random.normal(ks[3], (V, E), jnp.float32),
        # GRUCell(E, H): weight_ih [3H,E], weight_hh [3H,H] -> pre-transposed (r,z,n)
        'w_ih_t': 0.1 * jax.random.normal(ks[4], (E, 3 * H), jnp.float32),
        'w_hh_t': 0.1 * jax.random.normal(ks[5], (H, 3 * H), jnp.float32),
        'b_ih': 0.1 * jax.random.normal(ks[6], (1, 3 * H), jnp.float32),
        'b_hh': 0.1 * jax.random.normal(ks[7], (1, 3 * H), jnp.float32),
        # value_estimator: Linear(H, 1)
        'w_v': 0.1 * jax.random.normal(ks[8], (H, 1), jnp.float32),
        'b_v': 0.1 * jax.random.normal(ks[9], (1, 1), jnp.float32),
    }

    x = jax.random.normal(ks[10], (B, F), jnp.float32)
    message = jax.random.randint(ks[11], (B, T), 0, V, jnp.int32)

    out = input_dependent_baseline(x, message, params, hidden_size=H, vocab_size=V)
    out = jax.block_until_ready(out)

    ref = _reference(x, message, params, hidden_size=H)
    assert out.shape == (B, T)
    assert jnp.allclose(out, ref, atol=5e-5, rtol=5e-5), (out, ref)

    # TODO(synk): LSTM / RNN cell variants, LayerNorm, residual connection and dropout>0
    #             branches are not exercised (module defaults fix the GRU / Identity path).
    print("KERNEL_OK")
</pallas_src>

<mosaic_0001>
module attributes {stable_mosaic.version = 11 : i64} {
  func.func @_gru_baseline_kernel(%arg0: i32, %arg1: memref<8x16xf32, #tpu.memory_space<vmem>>, %arg2: memref<8x8x32xf32, #tpu.memory_space<vmem>>, %arg3: memref<16x128xf32, #tpu.memory_space<vmem>>, %arg4: memref<32x384xf32, #tpu.memory_space<vmem>>, %arg5: memref<128x384xf32, #tpu.memory_space<vmem>>, %arg6: memref<1x896xf32, #tpu.memory_space<vmem>>, %arg7: memref<8x8xf32, #tpu.memory_space<vmem>>, %arg8: memref<64x384xf32, #tpu.memory_space<vmem>>, %arg9: memref<8x8x128xf32, #tpu.memory_space<vmem>>) attributes {dimension_semantics = [#tpu.dimension_semantics<parallel>], iteration_bounds = array<i64: 1>, scalar_prefetch = 0 : i64, scratch_operands = 2 : i64, tpu.core_type = #tpu.core_type<tc>, window_params = [{transform_indices = @transform_0, window_bounds = array<i64: 8, 16>}, {transform_indices = @transform_1, window_bounds = array<i64: 8, 8, 32>}, {pipeline_mode = #tpu.pipeline_mode<synchronous>, transform_indices = @transform_2, window_bounds = array<i64: 16, 128>}, {pipeline_mode = #tpu.pipeline_mode<synchronous>, transform_indices = @transform_3, window_bounds = array<i64: 32, 384>}, {pipeline_mode = #tpu.pipeline_mode<synchronous>, transform_indices = @transform_4, window_bounds = array<i64: 128, 384>}, {pipeline_mode = #tpu.pipeline_mode<synchronous>, transform_indices = @transform_5, window_bounds = array<i64: 1, 896>}, {transform_indices = @transform_6, window_bounds = array<i64: 8, 8>}]} {
    %c0 = arith.constant 0 : index
    %c0_0 = arith.constant 0 : index
    %0 = vector.load %arg6[%c0, %c0_0] : memref<1x896xf32, #tpu.memory_space<vmem>>, vector<1x128xf32>
    %c0_1 = arith.constant 0 : index
    %c128 = arith.constant 128 : index
    %1 = vector.load %arg6[%c0_1, %c128] : memref<1x896xf32, #tpu.memory_space<vmem>>, vector<1x384xf32>
    %c0_2 = arith.constant 0 : index
    %c512 = arith.constant 512 : index
    %2 = vector.load %arg6[%c0_2, %c512] : memref<1x896xf32, #tpu.memory_space<vmem>>, vector<1x128xf32>
    %c0_3 = arith.constant 0 : index
    %c640 = arith.constant 640 : index
    %3 = vector.load %arg6[%c0_3, %c640] : memref<1x896xf32, #tpu.memory_space<vmem>>, vector<1x128xf32>
    %c0_4 = arith.constant 0 : index
    %c768 = arith.constant 768 : index
    %4 = vector.load %arg6[%c0_4, %c768] : memref<1x896xf32, #tpu.memory_space<vmem>>, vector<1x1xf32>
    %c0_5 = arith.constant 0 : index
    %c0_6 = arith.constant 0 : index
    %5 = vector.load %arg1[%c0_5, %c0_6] : memref<8x16xf32, #tpu.memory_space<vmem>>, vector<8x16xf32>
    %c0_7 = arith.constant 0 : index
    %c0_8 = arith.constant 0 : index
    %6 = vector.load %arg3[%c0_7, %c0_8] : memref<16x128xf32, #tpu.memory_space<vmem>>, vector<16x128xf32>
    %cst = arith.constant dense<0.000000e+00> : vector<8x128xf32>
    %7 = tpu.matmul %5, %6, %cst {dimension_numbers = #tpu.dot_dimension_numbers<[1], [0], [0], [1], [0, 0, 1, 1], [], []>} : vector<8x16xf32>, vector<16x128xf32>, vector<8x128xf32> -> vector<8x128xf32>
    %8 = vector.broadcast %0 : vector<1x128xf32> to vector<8x128xf32>
    %9 = arith.addf %7, %8 : vector<8x128xf32>
    %c0_9 = arith.constant 0 : index
    %c0_10 = arith.constant 0 : index
    %c0_11 = arith.constant 0 : index
    %10 = vector.load %arg2[%c0_9, %c0_10, %c0_11] : memref<8x8x32xf32, #tpu.memory_space<vmem>>, vector<8x8x32xf32>
    %11 = vector.shape_cast %10 : vector<8x8x32xf32> to vector<64x32xf32>
    %c0_12 = arith.constant 0 : index
    %c0_13 = arith.constant 0 : index
    %12 = vector.load %arg4[%c0_12, %c0_13] : memref<32x384xf32, #tpu.memory_space<vmem>>, vector<32x384xf32>
    %cst_14 = arith.constant dense<0.000000e+00> : vector<64x384xf32>
    %13 = tpu.matmul %11, %12, %cst_14 {dimension_numbers = #tpu.dot_dimension_numbers<[1], [0], [0], [1], [0, 0, 1, 1], [], []>} : vector<64x32xf32>, vector<32x384xf32>, vector<64x384xf32> -> vector<64x384xf32>
    %14 = vector.broadcast %1 : vector<1x384xf32> to vector<64x384xf32>
    %15 = arith.addf %13, %14 : vector<64x384xf32>
    %c0_15 = arith.constant 0 : index
    %c0_16 = arith.constant 0 : index
    %16 = vector.load %arg8[%c0_15, %c0_16] : memref<64x384xf32, #tpu.memory_space<vmem>>, vector<64x384xf32>
    tpu.vector_store %arg8[%c0_15, %c0_16], %15 {strides = array<i32>} : memref<64x384xf32, #tpu.memory_space<vmem>>, vector<64x384xf32>,
    %17 = vector.shape_cast %2 : vector<1x128xf32> to vector<1x128xf32>
    %18 = vector.broadcast %17 : vector<1x128xf32> to vector<8x128xf32>
    %c0_i32 = arith.constant 0 : i32
    %c8_i32 = arith.constant 8 : i32
    %19 = arith.muli %c0_i32, %c8_i32 : i32
    %20 = tpu.assume_multiple %19, 8 : i32
    %21 = arith.index_cast %20 : i32 to index
    %c0_17 = arith.constant 0 : index
    %22 = vector.load %arg8[%21, %c0_17] : memref<64x384xf32, #tpu.memory_space<vmem>>, vector<8x384xf32>
    %c0_18 = arith.constant 0 : index
    %c0_19 = arith.constant 0 : index
    %23 = vector.load %arg5[%c0_18, %c0_19] : memref<128x384xf32, #tpu.memory_space<vmem>>, vector<128x128xf32>
    %cst_20 = arith.constant dense<0.000000e+00> : vector<8x128xf32>
    %24 = tpu.matmul %9, %23, %cst_20 {dimension_numbers = #tpu.dot_dimension_numbers<[1], [0], [0], [1], [0, 0, 1, 1], [], []>} : vector<8x128xf32>, vector<128x128xf32>, vector<8x128xf32> -> vector<8x128xf32>
    %c0_21 = arith.constant 0 : index
    %c128_22 = arith.constant 128 : index
    %25 = vector.load %arg5[%c0_21, %c128_22] : memref<128x384xf32, #tpu.memory_space<vmem>>, vector<128x128xf32>
    %cst_23 = arith.constant dense<0.000000e+00> : vector<8x128xf32>
    %26 = tpu.matmul %9, %25, %cst_23 {dimension_numbers = #tpu.dot_dimension_numbers<[1], [0], [0], [1], [0, 0, 1, 1], [], []>} : vector<8x128xf32>, vector<128x128xf32>, vector<8x128xf32> -> vector<8x128xf32>
    %c0_24 = arith.constant 0 : index
    %c256 = arith.constant 256 : index
    %27 = vector.load %arg5[%c0_24, %c256] : memref<128x384xf32, #tpu.memory_space<vmem>>, vector<128x128xf32>
    %cst_25 = arith.constant dense<0.000000e+00> : vector<8x128xf32>
    %28 = tpu.matmul %9, %27, %cst_25 {dimension_numbers = #tpu.dot_dimension_numbers<[1], [0], [0], [1], [0, 0, 1, 1], [], []>} : vector<8x128xf32>, vector<128x128xf32>, vector<8x128xf32> -> vector<8x128xf32>
    %29 = vector.extract_strided_slice %22 {offsets = [0, 0], sizes = [8, 128], strides = [1, 1]} : vector<8x384xf32> to vector<8x128xf32>
    %30 = arith.addf %29, %24 : vector<8x128xf32>
    %31 = arith.negf %30 : vector<8x128xf32>
    %32 = math.exp %31 : vector<8x128xf32>
    %cst_26 = arith.constant 1.000000e+00 : f32
    %33 = vector.broadcast %cst_26 : f32 to vector<8x128xf32>
    %34 = arith.addf %33, %32 : vector<8x128xf32>
    %35 = arith.divf %33, %34 : vector<8x128xf32>
    %36 = vector.extract_strided_slice %22 {offsets = [0, 128], sizes = [8, 128], strides = [1, 1]} : vector<8x384xf32> to vector<8x128xf32>
    %37 = arith.addf %36, %26 : vector<8x128xf32>
    %38 = arith.negf %37 : vector<8x128xf32>
    %39 = math.exp %38 : vector<8x128xf32>
    %cst_27 = arith.constant 1.000000e+00 : f32
    %40 = vector.broadcast %cst_27 : f32 to vector<8x128xf32>
    %41 = arith.addf %40, %39 : vector<8x128xf32>
    %42 = arith.divf %40, %41 : vector<8x128xf32>
    %43 = vector.extract_strided_slice %22 {offsets = [0, 256], sizes = [8, 128], strides = [1, 1]} : vector<8x384xf32> to vector<8x128xf32>
    %44 = arith.addf %28, %18 : vector<8x128xf32>
    %45 = arith.mulf %35, %44 : vector<8x128xf32>
    %46 = arith.addf %43, %45 : vector<8x128xf32>
    %47 = math.tanh %46 : vector<8x128xf32>
    %cst_28 = arith.constant 1.000000e+00 : f32
    %48 = vector.broadcast %cst_28 : f32 to vector<8x128xf32>
    %49 = arith.subf %48, %42 : vector<8x128xf32>
    %50 = arith.mulf %49, %47 : vector<8x128xf32>
    %51 = arith.mulf %42, %9 : vector<8x128xf32>
    %52 = arith.addf %50, %51 : vector<8x128xf32>
    %53 = arith.index_cast %c0_i32 : i32 to index
    %c0_29 = arith.constant 0 : index
    %c0_30 = arith.constant 0 : index
    %54 = vector.load %arg9[%53, %c0_29, %c0_30] : memref<8x8x128xf32, #tpu.memory_space<vmem>>, vector<1x8x128xf32>
    %55 = vector.shape_cast %54 : vector<1x8x128xf32> to vector<8x128xf32>
    %56 = vector.shape_cast %52 : vector<8x128xf32> to vector<1x8x128xf32>
    tpu.vector_store %arg9[%53, %c0_29, %c0_30], %56 {strides = array<i32>} : memref<8x8x128xf32, #tpu.memory_space<vmem>>, vector<1x8x128xf32>,
    %c1_i32 = arith.constant 1 : i32
    %c8_i32_31 = arith.constant 8 : i32
    %57 = arith.muli %c1_i32, %c8_i32_31 : i32
    %58 = tpu.assume_multiple %57, 8 : i32
    %59 = arith.index_cast %58 : i32 to index
    %c0_32 = arith.constant 0 : index
    %60 = vector.load %arg8[%59, %c0_32] : memref<64x384xf32, #tpu.memory_space<vmem>>, vector<8x384xf32>
    %c0_33 = arith.constant 0 : index
    %c0_34 = arith.constant 0 : index
    %61 = vector.load %arg5[%c0_33, %c0_34] : memref<128x384xf32, #tpu.memory_space<vmem>>, vector<128x128xf32>
    %cst_35 = arith.constant dense<0.000000e+00> : vector<8x128xf32>
    %62 = tpu.matmul %52, %61, %cst_35 {dimension_numbers = #tpu.dot_dimension_numbers<[1], [0], [0], [1], [0, 0, 1, 1], [], []>} : vector<8x128xf32>, vector<128x128xf32>, vector<8x128xf32> -> vector<8x128xf32>
    %c0_36 = arith.constant 0 : index
    %c128_37 = arith.constant 128 : index
    %63 = vector.load %arg5[%c0_36, %c128_37] : memref<128x384xf32, #tpu.memory_space<vmem>>, vector<128x128xf32>
    %cst_38 = arith.constant dense<0.000000e+00> : vector<8x128xf32>
    %64 = tpu.matmul %52, %63, %cst_38 {dimension_numbers = #tpu.dot_dimension_numbers<[1], [0], [0], [1], [0, 0, 1, 1], [], []>} : vector<8x128xf32>, vector<128x128xf32>, vector<8x128xf32> -> vector<8x128xf32>
    %c0_39 = arith.constant 0 : index
    %c256_40 = arith.constant 256 : index
    %65 = vector.load %arg5[%c0_39, %c256_40] : memref<128x384xf32, #tpu.memory_space<vmem>>, vector<128x128xf32>
    %cst_41 = arith.constant dense<0.000000e+00> : vector<8x128xf32>
    %66 = tpu.matmul %52, %65, %cst_41 {dimension_numbers = #tpu.dot_dimension_numbers<[1], [0], [0], [1], [0, 0, 1, 1], [], []>} : vector<8x128xf32>, vector<128x128xf32>, vector<8x128xf32> -> vector<8x128xf32>
    %67 = vector.extract_strided_slice %60 {offsets = [0, 0], sizes = [8, 128], strides = [1, 1]} : vector<8x384xf32> to vector<8x128xf32>
    %68 = arith.addf %67, %62 : vector<8x128xf32>
    %69 = arith.negf %68 : vector<8x128xf32>
    %70 = math.exp %69 : vector<8x128xf32>
    %cst_42 = arith.constant 1.000000e+00 : f32
    %71 = vector.broadcast %cst_42 : f32 to vector<8x128xf32>
    %72 = arith.addf %71, %70 : vector<8x128xf32>
    %73 = arith.divf %71, %72 : vector<8x128xf32>
    %74 = vector.extract_strided_slice %60 {offsets = [0, 128], sizes = [8, 128], strides = [1, 1]} : vector<8x384xf32> to vector<8x128xf32>
    %75 = arith.addf %74, %64 : vector<8x128xf32>
    %76 = arith.negf %75 : vector<8x128xf32>
    %77 = math.exp %76 : vector<8x128xf32>
    %cst_43 = arith.constant 1.000000e+00 : f32
    %78 = vector.broadcast %cst_43 : f32 to vector<8x128xf32>
    %79 = arith.addf %78, %77 : vector<8x128xf32>
    %80 = arith.divf %78, %79 : vector<8x128xf32>
    %81 = vector.extract_strided_slice %60 {offsets = [0, 256], sizes = [8, 128], strides = [1, 1]} : vector<8x384xf32> to vector<8x128xf32>
    %82 = arith.addf %66, %18 : vector<8x128xf32>
    %83 = arith.mulf %73, %82 : vector<8x128xf32>
    %84 = arith.addf %81, %83 : vector<8x128xf32>
    %85 = math.tanh %84 : vector<8x128xf32>
    %cst_44 = arith.constant 1.000000e+00 : f32
    %86 = vector.broadcast %cst_44 : f32 to vector<8x128xf32>
    %87 = arith.subf %86, %80 : vector<8x128xf32>
    %88 = arith.mulf %87, %85 : vector<8x128xf32>
    %89 = arith.mulf %80, %52 : vector<8x128xf32>
    %90 = arith.addf %88, %89 : vector<8x128xf32>
    %91 = arith.index_cast %c1_i32 : i32 to index
    %c0_45 = arith.constant 0 : index
    %c0_46 = arith.constant 0 : index
    %92 = vector.load %arg9[%91, %c0_45, %c0_46] : memref<8x8x128xf32, #tpu.memory_space<vmem>>, vector<1x8x128xf32>
    %93 = vector.shape_cast %92 : vector<1x8x128xf32> to vector<8x128xf32>
    %94 = vector.shape_cast %90 : vector<8x128xf32> to vector<1x8x128xf32>
    tpu.vector_store %arg9[%91, %c0_45, %c0_46], %94 {strides = array<i32>} : memref<8x8x128xf32, #tpu.memory_space<vmem>>, vector<1x8x128xf32>,
    %c2_i32 = arith.constant 2 : i32
    %c8_i32_47 = arith.constant 8 : i32
    %95 = arith.muli %c2_i32, %c8_i32_47 : i32
    %96 = tpu.assume_multiple %95, 8 : i32
    %97 = arith.index_cast %96 : i32 to index
    %c0_48 = arith.constant 0 : index
    %98 = vector.load %arg8[%97, %c0_48] : memref<64x384xf32, #tpu.memory_space<vmem>>, vector<8x384xf32>
    %c0_49 = arith.constant 0 : index
    %c0_50 = arith.constant 0 : index
    %99 = vector.load %arg5[%c0_49, %c0_50] : memref<128x384xf32, #tpu.memory_space<vmem>>, vector<128x128xf32>
    %cst_51 = arith.constant dense<0.000000e+00> : vector<8x128xf32>
    %100 = tpu.matmul %90, %99, %cst_51 {dimension_numbers = #tpu.dot_dimension_numbers<[1], [0], [0], [1], [0, 0, 1, 1], [], []>} : vector<8x128xf32>, vector<128x128xf32>, vector<8x128xf32> -> vector<8x128xf32>
    %c0_52 = arith.constant 0 : index
    %c128_53 = arith.constant 128 : index
    %101 = vector.load %arg5[%c0_52, %c128_53] : memref<128x384xf32, #tpu.memory_space<vmem>>, vector<128x128xf32>
    %cst_54 = arith.constant dense<0.000000e+00> : vector<8x128xf32>
    %102 = tpu.matmul %90, %101, %cst_54 {dimension_numbers = #tpu.dot_dimension_numbers<[1], [0], [0], [1], [0, 0, 1, 1], [], []>} : vector<8x128xf32>, vector<128x128xf32>, vector<8x128xf32> -> vector<8x128xf32>
    %c0_55 = arith.constant 0 : index
    %c256_56 = arith.constant 256 : index
    %103 = vector.load %arg5[%c0_55, %c256_56] : memref<128x384xf32, #tpu.memory_space<vmem>>, vector<128x128xf32>
    %cst_57 = arith.constant dense<0.000000e+00> : vector<8x128xf32>
    %104 = tpu.matmul %90, %103, %cst_57 {dimension_numbers = #tpu.dot_dimension_numbers<[1], [0], [0], [1], [0, 0, 1, 1], [], []>} : vector<8x128xf32>, vector<128x128xf32>, vector<8x128xf32> -> vector<8x128xf32>
    %105 = vector.extract_strided_slice %98 {offsets = [0, 0], sizes = [8, 128], strides = [1, 1]} : vector<8x384xf32> to vector<8x128xf32>
    %106 = arith.addf %105, %100 : vector<8x128xf32>
    %107 = arith.negf %106 : vector<8x128xf32>
    %108 = math.exp %107 : vector<8x128xf32>
    %cst_58 = arith.constant 1.000000e+00 : f32
    %109 = vector.broadcast %cst_58 : f32 to vector<8x128xf32>
    %110 = arith.addf %109, %108 : vector<8x128xf32>
    %111 = arith.divf %109, %110 : vector<8x128xf32>
    %112 = vector.extract_strided_slice %98 {offsets = [0, 128], sizes = [8, 128], strides = [1, 1]} : vector<8x384xf32> to vector<8x128xf32>
    %113 = arith.addf %112, %102 : vector<8x128xf32>
    %114 = arith.negf %113 : vector<8x128xf32>
    %115 = math.exp %114 : vector<8x128xf32>
    %cst_59 = arith.constant 1.000000e+00 : f32
    %116 = vector.broadcast %cst_59 : f32 to vector<8x128xf32>
    %117 = arith.addf %116, %115 : vector<8x128xf32>
    %118 = arith.divf %116, %117 : vector<8x128xf32>
    %119 = vector.extract_strided_slice %98 {offsets = [0, 256], sizes = [8, 128], strides = [1, 1]} : vector<8x384xf32> to vector<8x128xf32>
    %120 = arith.addf %104, %18 : vector<8x128xf32>
    %121 = arith.mulf %111, %120 : vector<8x128xf32>
    %122 = arith.addf %119, %121 : vector<8x128xf32>
    %123 = math.tanh %122 : vector<8x128xf32>
    %cst_60 = arith.constant 1.000000e+00 : f32
    %124 = vector.broadcast %cst_60 : f32 to vector<8x128xf32>
    %125 = arith.subf %124, %118 : vector<8x128xf32>
    %126 = arith.mulf %125, %123 : vector<8x128xf32>
    %127 = arith.mulf %118, %90 : vector<8x128xf32>
    %128 = arith.addf %126, %127 : vector<8x128xf32>
    %129 = arith.index_cast %c2_i32 : i32 to index
    %c0_61 = arith.constant 0 : index
    %c0_62 = arith.constant 0 : index
    %130 = vector.load %arg9[%129, %c0_61, %c0_62] : memref<8x8x128xf32, #tpu.memory_space<vmem>>, vector<1x8x128xf32>
    %131 = vector.shape_cast %130 : vector<1x8x128xf32> to vector<8x128xf32>
    %132 = vector.shape_cast %128 : vector<8x128xf32> to vector<1x8x128xf32>
    tpu.vector_store %arg9[%129, %c0_61, %c0_62], %132 {strides = array<i32>} : memref<8x8x128xf32, #tpu.memory_space<vmem>>, vector<1x8x128xf32>,
    %c3_i32 = arith.constant 3 : i32
    %c8_i32_63 = arith.constant 8 : i32
    %133 = arith.muli %c3_i32, %c8_i32_63 : i32
    %134 = tpu.assume_multiple %133, 8 : i32
    %135 = arith.index_cast %134 : i32 to index
    %c0_64 = arith.constant 0 : index
    %136 = vector.load %arg8[%135, %c0_64] : memref<64x384xf32, #tpu.memory_space<vmem>>, vector<8x384xf32>
    %c0_65 = arith.constant 0 : index
    %c0_66 = arith.constant 0 : index
    %137 = vector.load %arg5[%c0_65, %c0_66] : memref<128x384xf32, #tpu.memory_space<vmem>>, vector<128x128xf32>
    %cst_67 = arith.constant dense<0.000000e+00> : vector<8x128xf32>
    %138 = tpu.matmul %128, %137, %cst_67 {dimension_numbers = #tpu.dot_dimension_numbers<[1], [0], [0], [1], [0, 0, 1, 1], [], []>} : vector<8x128xf32>, vector<128x128xf32>, vector<8x128xf32> -> vector<8x128xf32>
    %c0_68 = arith.constant 0 : index
    %c128_69 = arith.constant 128 : index
    %139 = vector.load %arg5[%c0_68, %c128_69] : memref<128x384xf32, #tpu.memory_space<vmem>>, vector<128x128xf32>
    %cst_70 = arith.constant dense<0.000000e+00> : vector<8x128xf32>
    %140 = tpu.matmul %128, %139, %cst_70 {dimension_numbers = #tpu.dot_dimension_numbers<[1], [0], [0], [1], [0, 0, 1, 1], [], []>} : vector<8x128xf32>, vector<128x128xf32>, vector<8x128xf32> -> vector<8x128xf32>
    %c0_71 = arith.constant 0 : index
    %c256_72 = arith.constant 256 : index
    %141 = vector.load %arg5[%c0_71, %c256_72] : memref<128x384xf32, #tpu.memory_space<vmem>>, vector<128x128xf32>
    %cst_73 = arith.constant dense<0.000000e+00> : vector<8x128xf32>
    %142 = tpu.matmul %128, %141, %cst_73 {dimension_numbers = #tpu.dot_dimension_numbers<[1], [0], [0], [1], [0, 0, 1, 1], [], []>} : vector<8x128xf32>, vector<128x128xf32>, vector<8x128xf32> -> vector<8x128xf32>
    %143 = vector.extract_strided_slice %136 {offsets = [0, 0], sizes = [8, 128], strides = [1, 1]} : vector<8x384xf32> to vector<8x128xf32>
    %144 = arith.addf %143, %138 : vector<8x128xf32>
    %145 = arith.negf %144 : vector<8x128xf32>
    %146 = math.exp %145 : vector<8x128xf32>
    %cst_74 = arith.constant 1.000000e+00 : f32
    %147 = vector.broadcast %cst_74 : f32 to vector<8x128xf32>
    %148 = arith.addf %147, %146 : vector<8x128xf32>
    %149 = arith.divf %147, %148 : vector<8x128xf32>
    %150 = vector.extract_strided_slice %136 {offsets = [0, 128], sizes = [8, 128], strides = [1, 1]} : vector<8x384xf32> to vector<8x128xf32>
    %151 = arith.addf %150, %140 : vector<8x128xf32>
    %152 = arith.negf %151 : vector<8x128xf32>
    %153 = math.exp %152 : vector<8x128xf32>
    %cst_75 = arith.constant 1.000000e+00 : f32
    %154 = vector.broadcast %cst_75 : f32 to vector<8x128xf32>
    %155 = arith.addf %154, %153 : vector<8x128xf32>
    %156 = arith.divf %154, %155 : vector<8x128xf32>
    %157 = vector.extract_strided_slice %136 {offsets = [0, 256], sizes = [8, 128], strides = [1, 1]} : vector<8x384xf32> to vector<8x128xf32>
    %158 = arith.addf %142, %18 : vector<8x128xf32>
    %159 = arith.mulf %149, %158 : vector<8x128xf32>
    %160 = arith.addf %157, %159 : vector<8x128xf32>
    %161 = math.tanh %160 : vector<8x128xf32>
    %cst_76 = arith.constant 1.000000e+00 : f32
    %162 = vector.broadcast %cst_76 : f32 to vector<8x128xf32>
    %163 = arith.subf %162, %156 : vector<8x128xf32>
    %164 = arith.mulf %163, %161 : vector<8x128xf32>
    %165 = arith.mulf %156, %128 : vector<8x128xf32>
    %166 = arith.addf %164, %165 : vector<8x128xf32>
    %167 = arith.index_cast %c3_i32 : i32 to index
    %c0_77 = arith.constant 0 : index
    %c0_78 = arith.constant 0 : index
    %168 = vector.load %arg9[%167, %c0_77, %c0_78] : memref<8x8x128xf32, #tpu.memory_space<vmem>>, vector<1x8x128xf32>
    %169 = vector.shape_cast %168 : vector<1x8x128xf32> to vector<8x128xf32>
    %170 = vector.shape_cast %166 : vector<8x128xf32> to vector<1x8x128xf32>
    tpu.vector_store %arg9[%167, %c0_77, %c0_78], %170 {strides = array<i32>} : memref<8x8x128xf32, #tpu.memory_space<vmem>>, vector<1x8x128xf32>,
    %c4_i32 = arith.constant 4 : i32
    %c8_i32_79 = arith.constant 8 : i32
    %171 = arith.muli %c4_i32, %c8_i32_79 : i32
    %172 = tpu.assume_multiple %171, 8 : i32
    %173 = arith.index_cast %172 : i32 to index
    %c0_80 = arith.constant 0 : index
    %174 = vector.load %arg8[%173, %c0_80] : memref<64x384xf32, #tpu.memory_space<vmem>>, vector<8x384xf32>
    %c0_81 = arith.constant 0 : index
    %c0_82 = arith.constant 0 : index
    %175 = vector.load %arg5[%c0_81, %c0_82] : memref<128x384xf32, #tpu.memory_space<vmem>>, vector<128x128xf32>
    %cst_83 = arith.constant dense<0.000000e+00> : vector<8x128xf32>
    %176 = tpu.matmul %166, %175, %cst_83 {dimension_numbers = #tpu.dot_dimension_numbers<[1], [0], [0], [1], [0, 0, 1, 1], [], []>} : vector<8x128xf32>, vector<128x128xf32>, vector<8x128xf32> -> vector<8x128xf32>
    %c0_84 = arith.constant 0 : index
    %c128_85 = arith.constant 128 : index
    %177 = vector.load %arg5[%c0_84, %c128_85] : memref<128x384xf32, #tpu.memory_space<vmem>>, vector<128x128xf32>
    %cst_86 = arith.constant dense<0.000000e+00> : vector<8x128xf32>
    %178 = tpu.matmul %166, %177, %cst_86 {dimension_numbers = #tpu.dot_dimension_numbers<[1], [0], [0], [1], [0, 0, 1, 1], [], []>} : vector<8x128xf32>, vector<128x128xf32>, vector<8x128xf32> -> vector<8x128xf32>
    %c0_87 = arith.constant 0 : index
    %c256_88 = arith.constant 256 : index
    %179 = vector.load %arg5[%c0_87, %c256_88] : memref<128x384xf32, #tpu.memory_space<vmem>>, vector<128x128xf32>
    %cst_89 = arith.constant dense<0.000000e+00> : vector<8x128xf32>
    %180 = tpu.matmul %166, %179, %cst_89 {dimension_numbers = #tpu.dot_dimension_numbers<[1], [0], [0], [1], [0, 0, 1, 1], [], []>} : vector<8x128xf32>, vector<128x128xf32>, vector<8x128xf32> -> vector<8x128xf32>
    %181 = vector.extract_strided_slice %174 {offsets = [0, 0], sizes = [8, 128], strides = [1, 1]} : vector<8x384xf32> to vector<8x128xf32>
    %182 = arith.addf %181, %176 : vector<8x128xf32>
    %183 = arith.negf %182 : vector<8x128xf32>
    %184 = math.exp %183 : vector<8x128xf32>
    %cst_90 = arith.constant 1.000000e+00 : f32
    %185 = vector.broadcast %cst_90 : f32 to vector<8x128xf32>
    %186 = arith.addf %185, %184 : vector<8x128xf32>
    %187 = arith.divf %185, %186 : vector<8x128xf32>
    %188 = vector.extract_strided_slice %174 {offsets = [0, 128], sizes = [8, 128], strides = [1, 1]} : vector<8x384xf32> to vector<8x128xf32>
    %189 = arith.addf %188, %178 : vector<8x128xf32>
    %190 = arith.negf %189 : vector<8x128xf32>
    %191 = math.exp %190 : vector<8x128xf32>
    %cst_91 = arith.constant 1.000000e+00 : f32
    %192 = vector.broadcast %cst_91 : f32 to vector<8x128xf32>
    %193 = arith.addf %192, %191 : vector<8x128xf32>
    %194 = arith.divf %192, %193 : vector<8x128xf32>
    %195 = vector.extract_strided_slice %174 {offsets = [0, 256], sizes = [8, 128], strides = [1, 1]} : vector<8x384xf32> to vector<8x128xf32>
    %196 = arith.addf %180, %18 : vector<8x128xf32>
    %197 = arith.mulf %187, %196 : vector<8x128xf32>
    %198 = arith.addf %195, %197 : vector<8x128xf32>
    %199 = math.tanh %198 : vector<8x128xf32>
    %cst_92 = arith.constant 1.000000e+00 : f32
    %200 = vector.broadcast %cst_92 : f32 to vector<8x128xf32>
    %201 = arith.subf %200, %194 : vector<8x128xf32>
    %202 = arith.mulf %201, %199 : vector<8x128xf32>
    %203 = arith.mulf %194, %166 : vector<8x128xf32>
    %204 = arith.addf %202, %203 : vector<8x128xf32>
    %205 = arith.index_cast %c4_i32 : i32 to index
    %c0_93 = arith.constant 0 : index
    %c0_94 = arith.constant 0 : index
    %206 = vector.load %arg9[%205, %c0_93, %c0_94] : memref<8x8x128xf32, #tpu.memory_space<vmem>>, vector<1x8x128xf32>
    %207 = vector.shape_cast %206 : vector<1x8x128xf32> to vector<8x128xf32>
    %208 = vector.shape_cast %204 : vector<8x128xf32> to vector<1x8x128xf32>
    tpu.vector_store %arg9[%205, %c0_93, %c0_94], %208 {strides = array<i32>} : memref<8x8x128xf32, #tpu.memory_space<vmem>>, vector<1x8x128xf32>,
    %c5_i32 = arith.constant 5 : i32
    %c8_i32_95 = arith.constant 8 : i32
    %209 = arith.muli %c5_i32, %c8_i32_95 : i32
    %210 = tpu.assume_multiple %209, 8 : i32
    %211 = arith.index_cast %210 : i32 to index
    %c0_96 = arith.constant 0 : index
    %212 = vector.load %arg8[%211, %c0_96] : memref<64x384xf32, #tpu.memory_space<vmem>>, vector<8x384xf32>
    %c0_97 = arith.constant 0 : index
    %c0_98 = arith.constant 0 : index
    %213 = vector.load %arg5[%c0_97, %c0_98] : memref<128x384xf32, #tpu.memory_space<vmem>>, vector<128x128xf32>
    %cst_99 = arith.constant dense<0.000000e+00> : vector<8x128xf32>
    %214 = tpu.matmul %204, %213, %cst_99 {dimension_numbers = #tpu.dot_dimension_numbers<[1], [0], [0], [1], [0, 0, 1, 1], [], []>} : vector<8x128xf32>, vector<128x128xf32>, vector<8x128xf32> -> vector<8x128xf32>
    %c0_100 = arith.constant 0 : index
    %c128_101 = arith.constant 128 : index
    %215 = vector.load %arg5[%c0_100, %c128_101] : memref<128x384xf32, #tpu.memory_space<vmem>>, vector<128x128xf32>
    %cst_102 = arith.constant dense<0.000000e+00> : vector<8x128xf32>
    %216 = tpu.matmul %204, %215, %cst_102 {dimension_numbers = #tpu.dot_dimension_numbers<[1], [0], [0], [1], [0, 0, 1, 1], [], []>} : vector<8x128xf32>, vector<128x128xf32>, vector<8x128xf32> -> vector<8x128xf32>
    %c0_103 = arith.constant 0 : index
    %c256_104 = arith.constant 256 : index
    %217 = vector.load %arg5[%c0_103, %c256_104] : memref<128x384xf32, #tpu.memory_space<vmem>>, vector<128x128xf32>
    %cst_105 = arith.constant dense<0.000000e+00> : vector<8x128xf32>
    %218 = tpu.matmul %204, %217, %cst_105 {dimension_numbers = #tpu.dot_dimension_numbers<[1], [0], [0], [1], [0, 0, 1, 1], [], []>} : vector<8x128xf32>, vector<128x128xf32>, vector<8x128xf32> -> vector<8x128xf32>
    %219 = vector.extract_strided_slice %212 {offsets = [0, 0], sizes = [8, 128], strides = [1, 1]} : vector<8x384xf32> to vector<8x128xf32>
    %220 = arith.addf %219, %214 : vector<8x128xf32>
    %221 = arith.negf %220 : vector<8x128xf32>
    %222 = math.exp %221 : vector<8x128xf32>
    %cst_106 = arith.constant 1.000000e+00 : f32
    %223 = vector.broadcast %cst_106 : f32 to vector<8x128xf32>
    %224 = arith.addf %223, %222 : vector<8x128xf32>
    %225 = arith.divf %223, %224 : vector<8x128xf32>
    %226 = vector.extract_strided_slice %212 {offsets = [0, 128], sizes = [8, 128], strides = [1, 1]} : vector<8x384xf32> to vector<8x128xf32>
    %227 = arith.addf %226, %216 : vector<8x128xf32>
    %228 = arith.negf %227 : vector<8x128xf32>
    %229 = math.exp %228 : vector<8x128xf32>
    %cst_107 = arith.constant 1.000000e+00 : f32
    %230 = vector.broadcast %cst_107 : f32 to vector<8x128xf32>
    %231 = arith.addf %230, %229 : vector<8x128xf32>
    %232 = arith.divf %230, %231 : vector<8x128xf32>
    %233 = vector.extract_strided_slice %212 {offsets = [0, 256], sizes = [8, 128], strides = [1, 1]} : vector<8x384xf32> to vector<8x128xf32>
    %234 = arith.addf %218, %18 : vector<8x128xf32>
    %235 = arith.mulf %225, %234 : vector<8x128xf32>
    %236 = arith.addf %233, %235 : vector<8x128xf32>
    %237 = math.tanh %236 : vector<8x128xf32>
    %cst_108 = arith.constant 1.000000e+00 : f32
    %238 = vector.broadcast %cst_108 : f32 to vector<8x128xf32>
    %239 = arith.subf %238, %232 : vector<8x128xf32>
    %240 = arith.mulf %239, %237 : vector<8x128xf32>
    %241 = arith.mulf %232, %204 : vector<8x128xf32>
    %242 = arith.addf %240, %241 : vector<8x128xf32>
    %243 = arith.index_cast %c5_i32 : i32 to index
    %c0_109 = arith.constant 0 : index
    %c0_110 = arith.constant 0 : index
    %244 = vector.load %arg9[%243, %c0_109, %c0_110] : memref<8x8x128xf32, #tpu.memory_space<vmem>>, vector<1x8x128xf32>
    %245 = vector.shape_cast %244 : vector<1x8x128xf32> to vector<8x128xf32>
    %246 = vector.shape_cast %242 : vector<8x128xf32> to vector<1x8x128xf32>
    tpu.vector_store %arg9[%243, %c0_109, %c0_110], %246 {strides = array<i32>} : memref<8x8x128xf32, #tpu.memory_space<vmem>>, vector<1x8x128xf32>,
    %c6_i32 = arith.constant 6 : i32
    %c8_i32_111 = arith.constant 8 : i32
    %247 = arith.muli %c6_i32, %c8_i32_111 : i32
    %248 = tpu.assume_multiple %247, 8 : i32
    %249 = arith.index_cast %248 : i32 to index
    %c0_112 = arith.constant 0 : index
    %250 = vector.load %arg8[%249, %c0_112] : memref<64x384xf32, #tpu.memory_space<vmem>>, vector<8x384xf32>
    %c0_113 = arith.constant 0 : index
    %c0_114 = arith.constant 0 : index
    %251 = vector.load %arg5[%c0_113, %c0_114] : memref<128x384xf32, #tpu.memory_space<vmem>>, vector<128x128xf32>
    %cst_115 = arith.constant dense<0.000000e+00> : vector<8x128xf32>
    %252 = tpu.matmul %242, %251, %cst_115 {dimension_numbers = #tpu.dot_dimension_numbers<[1], [0], [0], [1], [0, 0, 1, 1], [], []>} : vector<8x128xf32>, vector<128x128xf32>, vector<8x128xf32> -> vector<8x128xf32>
    %c0_116 = arith.constant 0 : index
    %c128_117 = arith.constant 128 : index
    %253 = vector.load %arg5[%c0_116, %c128_117] : memref<128x384xf32, #tpu.memory_space<vmem>>, vector<128x128xf32>
    %cst_118 = arith.constant dense<0.000000e+00> : vector<8x128xf32>
    %254 = tpu.matmul %242, %253, %cst_118 {dimension_numbers = #tpu.dot_dimension_numbers<[1], [0], [0], [1], [0, 0, 1, 1], [], []>} : vector<8x128xf32>, vector<128x128xf32>, vector<8x128xf32> -> vector<8x128xf32>
    %c0_119 = arith.constant 0 : index
    %c256_120 = arith.constant 256 : index
    %255 = vector.load %arg5[%c0_119, %c256_120] : memref<128x384xf32, #tpu.memory_space<vmem>>, vector<128x128xf32>
    %cst_121 = arith.constant dense<0.000000e+00> : vector<8x128xf32>
    %256 = tpu.matmul %242, %255, %cst_121 {dimension_numbers = #tpu.dot_dimension_numbers<[1], [0], [0], [1], [0, 0, 1, 1], [], []>} : vector<8x128xf32>, vector<128x128xf32>, vector<8x128xf32> -> vector<8x128xf32>
    %257 = vector.extract_strided_slice %250 {offsets = [0, 0], sizes = [8, 128], strides = [1, 1]} : vector<8x384xf32> to vector<8x128xf32>
    %258 = arith.addf %257, %252 : vector<8x128xf32>
    %259 = arith.negf %258 : vector<8x128xf32>
    %260 = math.exp %259 : vector<8x128xf32>
    %cst_122 = arith.constant 1.000000e+00 : f32
    %261 = vector.broadcast %cst_122 : f32 to vector<8x128xf32>
    %262 = arith.addf %261, %260 : vector<8x128xf32>
    %263 = arith.divf %261, %262 : vector<8x128xf32>
    %264 = vector.extract_strided_slice %250 {offsets = [0, 128], sizes = [8, 128], strides = [1, 1]} : vector<8x384xf32> to vector<8x128xf32>
    %265 = arith.addf %264, %254 : vector<8x128xf32>
    %266 = arith.negf %265 : vector<8x128xf32>
    %267 = math.exp %266 : vector<8x128xf32>
    %cst_123 = arith.constant 1.000000e+00 : f32
    %268 = vector.broadcast %cst_123 : f32 to vector<8x128xf32>
    %269 = arith.addf %268, %267 : vector<8x128xf32>
    %270 = arith.divf %268, %269 : vector<8x128xf32>
    %271 = vector.extract_strided_slice %250 {offsets = [0, 256], sizes = [8, 128], strides = [1, 1]} : vector<8x384xf32> to vector<8x128xf32>
    %272 = arith.addf %256, %18 : vector<8x128xf32>
    %273 = arith.mulf %263, %272 : vector<8x128xf32>
    %274 = arith.addf %271, %273 : vector<8x128xf32>
    %275 = math.tanh %274 : vector<8x128xf32>
    %cst_124 = arith.constant 1.000000e+00 : f32
    %276 = vector.broadcast %cst_124 : f32 to vector<8x128xf32>
    %277 = arith.subf %276, %270 : vector<8x128xf32>
    %278 = arith.mulf %277, %275 : vector<8x128xf32>
    %279 = arith.mulf %270, %242 : vector<8x128xf32>
    %280 = arith.addf %278, %279 : vector<8x128xf32>
    %281 = arith.index_cast %c6_i32 : i32 to index
    %c0_125 = arith.constant 0 : index
    %c0_126 = arith.constant 0 : index
    %282 = vector.load %arg9[%281, %c0_125, %c0_126] : memref<8x8x128xf32, #tpu.memory_space<vmem>>, vector<1x8x128xf32>
    %283 = vector.shape_cast %282 : vector<1x8x128xf32> to vector<8x128xf32>
    %284 = vector.shape_cast %280 : vector<8x128xf32> to vector<1x8x128xf32>
    tpu.vector_store %arg9[%281, %c0_125, %c0_126], %284 {strides = array<i32>} : memref<8x8x128xf32, #tpu.memory_space<vmem>>, vector<1x8x128xf32>,
    %c7_i32 = arith.constant 7 : i32
    %c8_i32_127 = arith.constant 8 : i32
    %285 = arith.muli %c7_i32, %c8_i32_127 : i32
    %286 = tpu.assume_multiple %285, 8 : i32
    %287 = arith.index_cast %286 : i32 to index
    %c0_128 = arith.constant 0 : index
    %288 = vector.load %arg8[%287, %c0_128] : memref<64x384xf32, #tpu.memory_space<vmem>>, vector<8x384xf32>
    %c0_129 = arith.constant 0 : index
    %c0_130 = arith.constant 0 : index
    %289 = vector.load %arg5[%c0_129, %c0_130] : memref<128x384xf32, #tpu.memory_space<vmem>>, vector<128x128xf32>
    %cst_131 = arith.constant dense<0.000000e+00> : vector<8x128xf32>
    %290 = tpu.matmul %280, %289, %cst_131 {dimension_numbers = #tpu.dot_dimension_numbers<[1], [0], [0], [1], [0, 0, 1, 1], [], []>} : vector<8x128xf32>, vector<128x128xf32>, vector<8x128xf32> -> vector<8x128xf32>
    %c0_132 = arith.constant 0 : index
    %c128_133 = arith.constant 128 : index
    %291 = vector.load %arg5[%c0_132, %c128_133] : memref<128x384xf32, #tpu.memory_space<vmem>>, vector<128x128xf32>
    %cst_134 = arith.constant dense<0.000000e+00> : vector<8x128xf32>
    %292 = tpu.matmul %280, %291, %cst_134 {dimension_numbers = #tpu.dot_dimension_numbers<[1], [0], [0], [1], [0, 0, 1, 1], [], []>} : vector<8x128xf32>, vector<128x128xf32>, vector<8x128xf32> -> vector<8x128xf32>
    %c0_135 = arith.constant 0 : index
    %c256_136 = arith.constant 256 : index
    %293 = vector.load %arg5[%c0_135, %c256_136] : memref<128x384xf32, #tpu.memory_space<vmem>>, vector<128x128xf32>
    %cst_137 = arith.constant dense<0.000000e+00> : vector<8x128xf32>
    %294 = tpu.matmul %280, %293, %cst_137 {dimension_numbers = #tpu.dot_dimension_numbers<[1], [0], [0], [1], [0, 0, 1, 1], [], []>} : vector<8x128xf32>, vector<128x128xf32>, vector<8x128xf32> -> vector<8x128xf32>
    %295 = vector.extract_strided_slice %288 {offsets = [0, 0], sizes = [8, 128], strides = [1, 1]} : vector<8x384xf32> to vector<8x128xf32>
    %296 = arith.addf %295, %290 : vector<8x128xf32>
    %297 = arith.negf %296 : vector<8x128xf32>
    %298 = math.exp %297 : vector<8x128xf32>
    %cst_138 = arith.constant 1.000000e+00 : f32
    %299 = vector.broadcast %cst_138 : f32 to vector<8x128xf32>
    %300 = arith.addf %299, %298 : vector<8x128xf32>
    %301 = arith.divf %299, %300 : vector<8x128xf32>
    %302 = vector.extract_strided_slice %288 {offsets = [0, 128], sizes = [8, 128], strides = [1, 1]} : vector<8x384xf32> to vector<8x128xf32>
    %303 = arith.addf %302, %292 : vector<8x128xf32>
    %304 = arith.negf %303 : vector<8x128xf32>
    %305 = math.exp %304 : vector<8x128xf32>
    %cst_139 = arith.constant 1.000000e+00 : f32
    %306 = vector.broadcast %cst_139 : f32 to vector<8x128xf32>
    %307 = arith.addf %306, %305 : vector<8x128xf32>
    %308 = arith.divf %306, %307 : vector<8x128xf32>
    %309 = vector.extract_strided_slice %288 {offsets = [0, 256], sizes = [8, 128], strides = [1, 1]} : vector<8x384xf32> to vector<8x128xf32>
    %310 = arith.addf %294, %18 : vector<8x128xf32>
    %311 = arith.mulf %301, %310 : vector<8x128xf32>
    %312 = arith.addf %309, %311 : vector<8x128xf32>
    %313 = math.tanh %312 : vector<8x128xf32>
    %cst_140 = arith.constant 1.000000e+00 : f32
    %314 = vector.broadcast %cst_140 : f32 to vector<8x128xf32>
    %315 = arith.subf %314, %308 : vector<8x128xf32>
    %316 = arith.mulf %315, %313 : vector<8x128xf32>
    %317 = arith.mulf %308, %280 : vector<8x128xf32>
    %318 = arith.addf %316, %317 : vector<8x128xf32>
    %319 = arith.index_cast %c7_i32 : i32 to index
    %c0_141 = arith.constant 0 : index
    %c0_142 = arith.constant 0 : index
    %320 = vector.load %arg9[%319, %c0_141, %c0_142] : memref<8x8x128xf32, #tpu.memory_space<vmem>>, vector<1x8x128xf32>
    %321 = vector.shape_cast %320 : vector<1x8x128xf32> to vector<8x128xf32>
    %322 = vector.shape_cast %318 : vector<8x128xf32> to vector<1x8x128xf32>
    tpu.vector_store %arg9[%319, %c0_141, %c0_142], %322 {strides = array<i32>} : memref<8x8x128xf32, #tpu.memory_space<vmem>>, vector<1x8x128xf32>,
    %c8_i32_143 = arith.constant 8 : i32
    %c0_144 = arith.constant 0 : index
    %c0_145 = arith.constant 0 : index
    %c0_146 = arith.constant 0 : index
    %323 = vector.load %arg9[%c0_144, %c0_145, %c0_146] : memref<8x8x128xf32, #tpu.memory_space<vmem>>, vector<8x8x128xf32>
    %324 = vector.shape_cast %3 : vector<1x128xf32> to vector<1x1x128xf32>
    %325 = vector.broadcast %324 : vector<1x1x128xf32> to vector<8x8x128xf32>
    %326 = arith.mulf %323, %325 : vector<8x8x128xf32>
    %cst_147 = arith.constant dense<0.000000e+00> : vector<8x8xf32>
    %327 = vector.multi_reduction <add>, %326, %cst_147 [2] : vector<8x8x128xf32> to vector<8x8xf32>
    %328 = vector.broadcast %4 : vector<1x1xf32> to vector<8x8xf32>
    %329 = arith.addf %327, %328 : vector<8x8xf32>
    %c0_148 = arith.constant 0 : index
    %c0_149 = arith.constant 0 : index
    %330 = vector.load %arg7[%c0_148, %c0_149] : memref<8x8xf32, #tpu.memory_space<vmem>>, vector<8x8xf32>
    tpu.vector_store %arg7[%c0_148, %c0_149], %329 {strides = array<i32>} : memref<8x8xf32, #tpu.memory_space<vmem>>, vector<8x8xf32>,
    return
  }
  func.func @transform_0(%arg0: i32) -> (i32, i32) {
    %c0_i32 = arith.constant 0 : i32
    %c0_i32_0 = arith.constant 0 : i32
    return %arg0, %c0_i32 : i32, i32
  }
  func.func @transform_1(%arg0: i32) -> (i32, i32, i32) {
    %c0_i32 = arith.constant 0 : i32
    %c0_i32_0 = arith.constant 0 : i32
    %c0_i32_1 = arith.constant 0 : i32
    return %c0_i32, %arg0, %c0_i32_0 : i32, i32, i32
  }
  func.func @transform_2(%arg0: i32) -> (i32, i32) {
    %c0_i32 = arith.constant 0 : i32
    %c0_i32_0 = arith.constant 0 : i32
    %c0_i32_1 = arith.constant 0 : i32
    return %c0_i32, %c0_i32_0 : i32, i32
  }
  func.func @transform_3(%arg0: i32) -> (i32, i32) {
    %c0_i32 = arith.constant 0 : i32
    %c0_i32_0 = arith.constant 0 : i32
    %c0_i32_1 = arith.constant 0 : i32
    return %c0_i32, %c0_i32_0 : i32, i32
  }
  func.func @transform_4(%arg0: i32) -> (i32, i32) {
    %c0_i32 = arith.constant 0 : i32
    %c0_i32_0 = arith.constant 0 : i32
    %c0_i32_1 = arith.constant 0 : i32
    return %c0_i32, %c0_i32_0 : i32, i32
  }
  func.func @transform_5(%arg0: i32) -> (i32, i32) {
    %c0_i32 = arith.constant 0 : i32
    %c0_i32_0 = arith.constant 0 : i32
    %c0_i32_1 = arith.constant 0 : i32
    return %c0_i32, %c0_i32_0 : i32, i32
  }
  func.func @transform_6(%arg0: i32) -> (i32, i32) {
    %c0_i32 = arith.constant 0 : i32
    %c0_i32_0 = arith.constant 0 : i32
    return %c0_i32, %arg0 : i32, i32
  }
}

</mosaic_0001>

<llo_original>
// kernel: tpu_custom_call.1
$region0: #{tpu_custom_call.1}
  #allocation0 [shape = 'u32[]', space=smem, size = 0x4, offset = 0x4, fixed_abs, tag = 'smem constant byte address 0x4 - core index']
  #allocation1 [shape = 'u32[144,128]{1,0:T(1,128)}', space=vmem, size = 0x12000, scoped, tag = 'internal scratch']
  #allocation2 [shape = 'f32[64,384]{1,0:T(8,128)}', space=vmem, size = 0x18000, scoped, tag = 'scratch operand']
  #allocation3 [shape = 'f32[8,8,128]{2,1,0:T(8,128)}', space=vmem, size = 0x8000, scoped, tag = 'scratch operand']
  %s0 = inlined_call_operand.hbm [shape: f32[8,16], index: 0, kind: input, shape index: {}]
  %s1 = inlined_call_operand.hbm [shape: f32[8,8,32], index: 1, kind: input, shape index: {}]
  %s2 = inlined_call_operand.hbm [shape: f32[16,128], index: 2, kind: input, shape index: {}]
  %s3 = inlined_call_operand.hbm [shape: f32[32,384], index: 3, kind: input, shape index: {}]
  %s4 = inlined_call_operand.hbm [shape: f32[128,384], index: 4, kind: input, shape index: {}]
  %s5 = inlined_call_operand.vmem [shape: f32[1,896], index: 5, kind: input, shape index: {}]
  %s6 = inlined_call_operand.hbm [shape: f32[8,8], index: 6, kind: output, shape index: {}]
  %s7 = sld [smem:[#allocation0]]
  $region54: #{tpu_custom_call.1} parent=0
    _
  %s9 = ssub.s32 1, %s7
  %s10 = scalar_select 0, %s9, %s7
  $region1: #{tpu_custom_call.1} parent=0
    #allocation4 [shape = 'u8[4096]{0}', space=vmem, size = 0x1000, scoped, tag = 'input window, operand 0, single buffered']
    #allocation5 [shape = 's32[1]{0}', space=sflag, size = 0x4, scoped, tag = 'scoped memory for tpu_custom_call.1']
    #allocation6 [shape = 's32[1]{0}', space=sflag, size = 0x4, scoped, tag = 'scoped memory for tpu_custom_call.1']
    #allocation7 [shape = 'u8[32768]{0}', space=vmem, size = 0x8000, scoped, tag = 'input window, operand 1, single buffered']
    #allocation8 [shape = 's32[1]{0}', space=sflag, size = 0x4, scoped, tag = 'scoped memory for tpu_custom_call.1']
    #allocation9 [shape = 'u8[8192]{0}', space=vmem, size = 0x2000, scoped, tag = 'input window, operand 2, single buffered']
    #allocation10 [shape = 'u8[49152]{0}', space=vmem, size = 0xc000, scoped, tag = 'input window, operand 3, single buffered']
    #allocation11 [shape = 's32[1]{0}', space=sflag, size = 0x4, scoped, tag = 'scoped memory for tpu_custom_call.1']
    #allocation12 [shape = 'u8[196608]{0}', space=vmem, size = 0x30000, scoped, tag = 'input window, operand 4, single buffered']
    #allocation13 [shape = 'u8[4096]{0}', space=vmem, size = 0x1000, scoped, tag = 'output window, operand 0, single buffered']
    %11 = vsyncpa [#allocation5], 0
    %12 = vsyncpa [#allocation8], 0
    %13 = vsyncpa [#allocation11], 0
    %14 = vsyncpa [#allocation6], 0
    // Predicated region
    $region2: #{tpu_custom_call.1} parent=1 // pred_check
      _
    $region3: #{tpu_custom_call.1} parent=1 // pred_check_branch
      %16 = sbr.rel (0) target = $region5
    $region4: #{tpu_custom_call.1} parent=1 // pred_region
      %s18 = ssub.s32 128, 128
      %19 = vsyncadd [#allocation5], %s18
      %s21 = sshll.u32 [#allocation4], 4
      %s22 = int_to_ptr.vmem [resolvable:$true] %s21
      %24 = dma.hbm_to_vmem [thread:$0]  %s0, 128, %s22, [#allocation5]
    $region5: #{tpu_custom_call.1} parent=1 // pred_fallthru
      _
    // Predicated region
    $region6: #{tpu_custom_call.1} parent=1 // pred_check
      _
    $region7: #{tpu_custom_call.1} parent=1 // pred_check_branch
      %26 = sbr.rel (0) target = $region9
    $region8: #{tpu_custom_call.1} parent=1 // pred_region
      %s28 = ssub.s32 1024, 1024
      %29 = vsyncadd [#allocation8], %s28
      %s30 = sshll.u32 [#allocation7], 4
      %s31 = int_to_ptr.vmem [resolvable:$true] %s30
      %36 = dma.hbm_to_vmem [thread:$0]  %s1, 1024, %s31, [#allocation8], 128, 128, 8
    $region9: #{tpu_custom_call.1} parent=1 // pred_fallthru
      _
    // Predicated region
    $region10: #{tpu_custom_call.1} parent=1 // pred_check
      _
    $region11: #{tpu_custom_call.1} parent=1 // pred_check_branch
      %38 = sbr.rel (0) target = $region13
    $region12: #{tpu_custom_call.1} parent=1 // pred_region
      %s40 = ssub.s32 256, 256
      %41 = vsyncadd [#allocation8], %s40
      %s42 = sshll.u32 [#allocation9], 4
      %s43 = int_to_ptr.vmem [resolvable:$true] %s42
      %48 = dma.hbm_to_vmem [thread:$0]  %s2, 256, %s43, [#allocation8], 128, 128, 8
    $region13: #{tpu_custom_call.1} parent=1 // pred_fallthru
      _
    // Predicated region
    $region14: #{tpu_custom_call.1} parent=1 // pred_check
      _
    $region15: #{tpu_custom_call.1} parent=1 // pred_check_branch
      %50 = sbr.rel (0) target = $region17
    $region16: #{tpu_custom_call.1} parent=1 // pred_region
      %s52 = ssub.s32 1536, 1536
      %53 = vsyncadd [#allocation11], %s52
      %s54 = sshll.u32 [#allocation10], 4
      %s55 = int_to_ptr.vmem [resolvable:$true] %s54
      %60 = dma.hbm_to_vmem [thread:$0]  %s3, 1536, %s55, [#allocation11], 384, 384, 24
    $region17: #{tpu_custom_call.1} parent=1 // pred_fallthru
      _
    // Predicated region
    $region18: #{tpu_custom_call.1} parent=1 // pred_check
      _
    $region19: #{tpu_custom_call.1} parent=1 // pred_check_branch
      %62 = sbr.rel (0) target = $region21
    $region20: #{tpu_custom_call.1} parent=1 // pred_region
      %s64 = ssub.s32 6144, 6144
      %65 = vsyncadd [#allocation11], %s64
      %s66 = sshll.u32 [#allocation12], 4
      %s67 = int_to_ptr.vmem [resolvable:$true] %s66
      %72 = dma.hbm_to_vmem [thread:$0]  %s4, 6144, %s67, [#allocation11], 384, 384, 24
    $region21: #{tpu_custom_call.1} parent=1 // pred_fallthru
      _
    // Predicated region
    $region22: #{tpu_custom_call.1} parent=1 // pred_check
      _
    $region23: #{tpu_custom_call.1} parent=1 // pred_check_branch
      %74 = sbr.rel (0) target = $region25
    $region24: #{tpu_custom_call.1} parent=1 // pred_region
      _
    $region25: #{tpu_custom_call.1} parent=1 // pred_fallthru
      _
    // Predicated region
    $region26: #{tpu_custom_call.1} parent=1 // pred_check
      _
    $region27: #{tpu_custom_call.1} parent=1 // pred_check_branch
      %76 = sbr.rel (0) target = $region29
    $region28: #{tpu_custom_call.1} parent=1 // pred_region
      %77 = dma.done [#allocation5], 128
    $region29: #{tpu_custom_call.1} parent=1 // pred_fallthru
      _
    // Predicated region
    $region30: #{tpu_custom_call.1} parent=1 // pred_check
      _
    $region31: #{tpu_custom_call.1} parent=1 // pred_check_branch
      %79 = sbr.rel (0) target = $region33
    $region32: #{tpu_custom_call.1} parent=1 // pred_region
      %80 = dma.done [#allocation8], 1024
    $region33: #{tpu_custom_call.1} parent=1 // pred_fallthru
      _
    // Predicated region
    $region34: #{tpu_custom_call.1} parent=1 // pred_check
      _
    $region35: #{tpu_custom_call.1} parent=1 // pred_check_branch
      %82 = sbr.rel (0) target = $region37
    $region36: #{tpu_custom_call.1} parent=1 // pred_region
      %83 = dma.done [#allocation8], 256
    $region37: #{tpu_custom_call.1} parent=1 // pred_fallthru
      _
    // Predicated region
    $region38: #{tpu_custom_call.1} parent=1 // pred_check
      _
    $region39: #{tpu_custom_call.1} parent=1 // pred_check_branch
      %85 = sbr.rel (0) target = $region41
    $region40: #{tpu_custom_call.1} parent=1 // pred_region
      %86 = dma.done [#allocation11], 1536
    $region41: #{tpu_custom_call.1} parent=1 // pred_fallthru
      _
    // Predicated region
    $region42: #{tpu_custom_call.1} parent=1 // pred_check
      _
    $region43: #{tpu_custom_call.1} parent=1 // pred_check_branch
      %88 = sbr.rel (0) target = $region45
    $region44: #{tpu_custom_call.1} parent=1 // pred_region
      %89 = dma.done [#allocation11], 6144
    $region45: #{tpu_custom_call.1} parent=1 // pred_fallthru
      _
    %v90 = vld [vmem:[%s5] sm:$0x1]
    %v91 = vld [vmem:[%s5 + $0x1] sm:$0x7]
    %v92 = vld [vmem:[%s5 + $0x4] sm:$0x1]
    %v93 = vld [vmem:[%s5 + $0x5] sm:$0x1]
    %v94 = vld [vmem:[%s5 + $0x6] sm:$0x1]
    %v95 = vld [vmem:[#allocation4] sm:$0xff]
    %v96 = vld [vmem:[#allocation9] sm:$0xff]
    %v97 = vld [vmem:[#allocation9 + $0x8] sm:$0xff]
    %v99 = vlaneseq
    %v100 = vshrl.u32 %v99, 7
    %v101 = vsub.s32 0, %v100
    %v102 = vrot.slane %v90, %v101
    %vm104 = vcmask 130048
    %v106 = vsel %vm104, %v95, 0
    %108 = vmatprep.subr.mxu0 0.0
    %109 = vmatpush1.msra.mxu0 0.0
    %110 = vmatprep.subr.mxu0 0.0
    %111 = vmatpush1.msra.mxu0 0.0
    %112 = vmatprep.subr.mxu0 0.0
    %113 = vmatpush1.msra.mxu0 0.0
    %114 = vmatprep.subr.mxu0 0.0
    %115 = vmatpush1.msra.mxu0 0.0
    %116 = vmatprep.subr.mxu0 0.0
    %117 = vmatpush1.msra.mxu0 0.0
    %118 = vmatprep.subr.mxu0 0.0
    %119 = vmatpush1.msra.mxu0 0.0
    %120 = vmatprep.subr.mxu0 0.0
    %121 = vmatpush1.msra.mxu0 0.0
    %122 = vmatprep.subr.mxu0 0.0
    %123 = vmatpush1.msra.mxu0 0.0
    %124 = vmatprep.subr.mxu0 0.0
    %125 = vmatpush1.msra.mxu0 0.0
    %126 = vmatprep.subr.mxu0 0.0
    %127 = vmatpush1.msra.mxu0 0.0
    %128 = vmatprep.subr.mxu0 0.0
    %129 = vmatpush1.msra.mxu0 0.0
    %130 = vmatprep.subr.mxu0 0.0
    %131 = vmatpush1.msra.mxu0 0.0
    %132 = vmatprep.subr.mxu0 0.0
    %133 = vmatpush1.msra.mxu0 0.0
    %134 = vmatprep.subr.mxu0 0.0
    %135 = vmatpush1.msra.mxu0 0.0
    %136 = vmatprep.subr.mxu0 0.0
    %137 = vmatpush1.msra.mxu0 %v97
    %138 = vmatprep.subr.mxu0 0.0
    %139 = vmatpush1.msra.mxu0 %v96
    %140 = vmatprep.subr.mxu0 0.0
    %141 = vmatpush2.msra.mxu0 0.0
    %142 = vmatprep.subr.mxu0 0.0
    %143 = vmatpush2.msra.mxu0 0.0
    %144 = vmatprep.subr.mxu0 0.0
    %145 = vmatpush2.msra.mxu0 0.0
    %146 = vmatprep.subr.mxu0 0.0
    %147 = vmatpush2.msra.mxu0 0.0
    %148 = vmatprep.subr.mxu0 0.0
    %149 = vmatpush2.msra.mxu0 0.0
    %150 = vmatprep.subr.mxu0 0.0
    %151 = vmatpush2.msra.mxu0 0.0
    %152 = vmatprep.subr.mxu0 0.0
    %153 = vmatpush2.msra.mxu0 0.0
    %154 = vmatprep.subr.mxu0 0.0
    %155 = vmatpush2.msra.mxu0 0.0
    %156 = vmatprep.subr.mxu0 0.0
    %157 = vmatpush2.msra.mxu0 0.0
    %158 = vmatprep.subr.mxu0 0.0
    %159 = vmatpush2.msra.mxu0 0.0
    %160 = vmatprep.subr.mxu0 0.0
    %161 = vmatpush2.msra.mxu0 0.0
    %162 = vmatprep.subr.mxu0 0.0
    %163 = vmatpush2.msra.mxu0 0.0
    %164 = vmatprep.subr.mxu0 0.0
    %165 = vmatpush2.msra.mxu0 0.0
    %166 = vmatprep.subr.mxu0 0.0
    %167 = vmatpush2.msra.mxu0 0.0
    %168 = vmatprep.subr.mxu0 0.0
    %169 = vmatpush2.msra.mxu0 0.0
    %170 = vmatprep.subr.mxu0 0.0
    %171 = vmatpush2.msra.mxu0 0.0
    %172 = vmatprep.mubr.f32.mxu0 0.0
    %173 = vmatmul.mubr.f32.gmra.mxu0 %v106
    %v174 = vpop.f32.mrf.mxu0
    %v175 = vadd.f32 %v102, %v174
    %v176 = vpop.f32.mrf.mxu0
    %177 = vdwg.mxu0
    %v178 = vld [vmem:[#allocation7] sm:$0xff]
    %v179 = vld [vmem:[#allocation7 + $0x8] sm:$0xff]
    %v180 = vld [vmem:[#allocation7 + $0x10] sm:$0xff]
    %v181 = vld [vmem:[#allocation7 + $0x18] sm:$0xff]
    %v182 = vld [vmem:[#allocation7 + $0x20] sm:$0xff]
    %v183 = vld [vmem:[#allocation7 + $0x28] sm:$0xff]
    %v184 = vld [vmem:[#allocation7 + $0x30] sm:$0xff]
    %v185 = vld [vmem:[#allocation7 + $0x38] sm:$0xff]
    %v186 = vld [vmem:[#allocation10] sm:$0xff]
    %v187 = vld [vmem:[#allocation10 + $0x8] sm:$0xff]
    %v188 = vld [vmem:[#allocation10 + $0x10] sm:$0xff]
    %v189 = vld [vmem:[#allocation10 + $0x18] sm:$0xff]
    %v190 = vld [vmem:[#allocation10 + $0x20] sm:$0xff]
    %v191 = vld [vmem:[#allocation10 + $0x28] sm:$0xff]
    %v192 = vld [vmem:[#allocation10 + $0x30] sm:$0xff]
    %v193 = vld [vmem:[#allocation10 + $0x38] sm:$0xff]
    %v194 = vld [vmem:[#allocation10 + $0x40] sm:$0xff]
    %v195 = vld [vmem:[#allocation10 + $0x48] sm:$0xff]
    %v196 = vld [vmem:[#allocation10 + $0x50] sm:$0xff]
    %v197 = vld [vmem:[#allocation10 + $0x58] sm:$0xff]
    %v199 = vlaneseq
    %v200 = vshrl.u32 %v199, 7
    %v201 = vsub.s32 0, %v200
    %v202 = vrot.slane %v91, %v201
    %v203 = vlaneseq
    %v204 = vshrl.u32 %v203, 7
    %v205 = vsub.s32 1, %v204
    %v206 = vrot.slane %v91, %v205
    %v207 = vlaneseq
    %v208 = vshrl.u32 %v207, 7
    %v209 = vsub.s32 2, %v208
    %v210 = vrot.slane %v91, %v209
    %vm214 = vcmask 261120
    %v216 = vsel %vm214, %v178, 0
    %v219 = vsel %vm214, %v179, 0
    %v222 = vsel %vm214, %v180, 0
    %v225 = vsel %vm214, %v181, 0
    %v228 = vsel %vm214, %v182, 0
    %v231 = vsel %vm214, %v183, 0
    %v234 = vsel %vm214, %v184, 0
    %v237 = vsel %vm214, %v185, 0
    %239 = vmatprep.subr.mxu0 0.0
    %240 = vmatpush1.msra.mxu0 0.0
    %241 = vmatprep.subr.mxu0 0.0
    %242 = vmatpush1.msra.mxu0 0.0
    %243 = vmatprep.subr.mxu0 0.0
    %244 = vmatpush1.msra.mxu0 0.0
    %245 = vmatprep.subr.mxu0 0.0
    %246 = vmatpush1.msra.mxu0 0.0
    %247 = vmatprep.subr.mxu0 0.0
    %248 = vmatpush1.msra.mxu0 0.0
    %249 = vmatprep.subr.mxu0 0.0
    %250 = vmatpush1.msra.mxu0 0.0
    %251 = vmatprep.subr.mxu0 0.0
    %252 = vmatpush1.msra.mxu0 0.0
    %253 = vmatprep.subr.mxu0 0.0
    %254 = vmatpush1.msra.mxu0 0.0
    %255 = vmatprep.subr.mxu0 0.0
    %256 = vmatpush1.msra.mxu0 0.0
    %257 = vmatprep.subr.mxu0 0.0
    %258 = vmatpush1.msra.mxu0 0.0
    %259 = vmatprep.subr.mxu0 0.0
    %260 = vmatpush1.msra.mxu0 0.0
    %261 = vmatprep.subr.mxu0 0.0
    %262 = vmatpush1.msra.mxu0 0.0
    %263 = vmatprep.subr.mxu0 %v196
    %264 = vmatpush1.msra.mxu0 %v195
    %265 = vmatprep.subr.mxu0 %v193
    %266 = vmatpush1.msra.mxu0 %v192
    %267 = vmatprep.subr.mxu0 %v190
    %268 = vmatpush1.msra.mxu0 %v189
    %269 = vmatprep.subr.mxu0 %v187
    %270 = vmatpush1.msra.mxu0 %v186
    %271 = vmatprep.subr.mxu0 0.0
    %272 = vmatpush2.msra.mxu0 0.0
    %273 = vmatprep.subr.mxu0 0.0
    %274 = vmatpush2.msra.mxu0 0.0
    %275 = vmatprep.subr.mxu0 0.0
    %276 = vmatpush2.msra.mxu0 0.0
    %277 = vmatprep.subr.mxu0 0.0
    %278 = vmatpush2.msra.mxu0 0.0
    %279 = vmatprep.subr.mxu0 0.0
    %280 = vmatpush2.msra.mxu0 0.0
    %281 = vmatprep.subr.mxu0 0.0
    %282 = vmatpush2.msra.mxu0 0.0
    %283 = vmatprep.subr.mxu0 0.0
    %284 = vmatpush2.msra.mxu0 0.0
    %285 = vmatprep.subr.mxu0 0.0
    %286 = vmatpush2.msra.mxu0 0.0
    %287 = vmatprep.subr.mxu0 0.0
    %288 = vmatpush2.msra.mxu0 0.0
    %289 = vmatprep.subr.mxu0 0.0
    %290 = vmatpush2.msra.mxu0 0.0
    %291 = vmatprep.subr.mxu0 0.0
    %292 = vmatpush2.msra.mxu0 0.0
    %293 = vmatprep.subr.mxu0 0.0
    %294 = vmatpush2.msra.mxu0 0.0
    %295 = vmatprep.subr.mxu0 0.0
    %296 = vmatpush2.msra.mxu0 0.0
    %297 = vmatprep.subr.mxu0 0.0
    %298 = vmatpush2.msra.mxu0 0.0
    %299 = vmatprep.subr.mxu0 0.0
    %300 = vmatpush2.msra.mxu0 0.0
    %301 = vmatprep.subr.mxu0 0.0
    %302 = vmatpush2.msra.mxu0 0.0
    %303 = vmatprep.mubr.f32.mxu0 0.0
    %304 = vmatmul.mubr.f32.gmra.mxu0 %v216
    %v305 = vpop.f32.mrf.mxu0
    %v306 = vadd.f32 %v202, %v305
    %v307 = vpop.f32.mrf.mxu0
    %v308 = vadd.f32 %v206, %v307
    %309 = vmatprep.mubr.f32.mxu0 0.0
    %310 = vmatmul.mubr.f32.gmra.mxu0 %v219
    %v311 = vpop.f32.mrf.mxu0
    %v312 = vadd.f32 %v202, %v311
    %v313 = vpop.f32.mrf.mxu0
    %v314 = vadd.f32 %v206, %v313
    %315 = vmatprep.mubr.f32.mxu0 0.0
    %316 = vmatmul.mubr.f32.gmra.mxu0 %v222
    %v317 = vpop.f32.mrf.mxu0
    %v318 = vadd.f32 %v202, %v317
    %v319 = vpop.f32.mrf.mxu0
    %v320 = vadd.f32 %v206, %v319
    %321 = vmatprep.mubr.f32.mxu0 0.0
    %322 = vmatmul.mubr.f32.gmra.mxu0 %v225
    %v323 = vpop.f32.mrf.mxu0
    %v324 = vadd.f32 %v202, %v323
    %v325 = vpop.f32.mrf.mxu0
    %v326 = vadd.f32 %v206, %v325
    %327 = vmatprep.mubr.f32.mxu0 0.0
    %328 = vmatmul.mubr.f32.gmra.mxu0 %v228
    %v329 = vpop.f32.mrf.mxu0
    %v330 = vadd.f32 %v202, %v329
    %v331 = vpop.f32.mrf.mxu0
    %v332 = vadd.f32 %v206, %v331
    %333 = vmatprep.mubr.f32.mxu0 0.0
    %334 = vmatmul.mubr.f32.gmra.mxu0 %v231
    %v335 = vpop.f32.mrf.mxu0
    %v336 = vadd.f32 %v202, %v335
    %v337 = vpop.f32.mrf.mxu0
    %v338 = vadd.f32 %v206, %v337
    %339 = vmatprep.mubr.f32.mxu0 0.0
    %340 = vmatmul.mubr.f32.gmra.mxu0 %v234
    %v341 = vpop.f32.mrf.mxu0
    %v342 = vadd.f32 %v202, %v341
    %v343 = vpop.f32.mrf.mxu0
    %v344 = vadd.f32 %v206, %v343
    %345 = vmatprep.mubr.f32.mxu0 0.0
    %346 = vmatmul.mubr.f32.gmra.mxu0 %v237
    %v347 = vpop.f32.mrf.mxu0
    %v348 = vadd.f32 %v202, %v347
    %v349 = vpop.f32.mrf.mxu0
    %v350 = vadd.f32 %v206, %v349
    %351 = vdwg.mxu0
    %352 = vmatprep.subr.mxu0 0.0
    %353 = vmatpush1.msra.mxu0 0.0
    %354 = vmatprep.subr.mxu0 0.0
    %355 = vmatpush1.msra.mxu0 0.0
    %356 = vmatprep.subr.mxu0 0.0
    %357 = vmatpush1.msra.mxu0 0.0
    %358 = vmatprep.subr.mxu0 0.0
    %359 = vmatpush1.msra.mxu0 0.0
    %360 = vmatprep.subr.mxu0 0.0
    %361 = vmatpush1.msra.mxu0 0.0
    %362 = vmatprep.subr.mxu0 0.0
    %363 = vmatpush1.msra.mxu0 0.0
    %364 = vmatprep.subr.mxu0 0.0
    %365 = vmatpush1.msra.mxu0 0.0
    %366 = vmatprep.subr.mxu0 0.0
    %367 = vmatpush1.msra.mxu0 0.0
    %368 = vmatprep.subr.mxu0 0.0
    %369 = vmatpush1.msra.mxu0 0.0
    %370 = vmatprep.subr.mxu0 0.0
    %371 = vmatpush1.msra.mxu0 0.0
    %372 = vmatprep.subr.mxu0 0.0
    %373 = vmatpush1.msra.mxu0 0.0
    %374 = vmatprep.subr.mxu0 0.0
    %375 = vmatpush1.msra.mxu0 0.0
    %376 = vmatprep.subr.mxu0 0.0
    %377 = vmatpush1.msra.mxu0 %v197
    %378 = vmatprep.subr.mxu0 0.0
    %379 = vmatpush1.msra.mxu0 %v194
    %380 = vmatprep.subr.mxu0 0.0
    %381 = vmatpush1.msra.mxu0 %v191
    %382 = vmatprep.subr.mxu0 0.0
    %383 = vmatpush1.msra.mxu0 %v188
    %384 = vmatprep.subr.mxu0 0.0
    %385 = vmatpush2.msra.mxu0 0.0
    %386 = vmatprep.subr.mxu0 0.0
    %387 = vmatpush2.msra.mxu0 0.0
    %388 = vmatprep.subr.mxu0 0.0
    %389 = vmatpush2.msra.mxu0 0.0
    %390 = vmatprep.subr.mxu0 0.0
    %391 = vmatpush2.msra.mxu0 0.0
    %392 = vmatprep.subr.mxu0 0.0
    %393 = vmatpush2.msra.mxu0 0.0
    %394 = vmatprep.subr.mxu0 0.0
    %395 = vmatpush2.msra.mxu0 0.0
    %396 = vmatprep.subr.mxu0 0.0
    %397 = vmatpush2.msra.mxu0 0.0
    %398 = vmatprep.subr.mxu0 0.0
    %399 = vmatpush2.msra.mxu0 0.0
    %400 = vmatprep.subr.mxu0 0.0
    %401 = vmatpush2.msra.mxu0 0.0
    %402 = vmatprep.subr.mxu0 0.0
    %403 = vmatpush2.msra.mxu0 0.0
    %404 = vmatprep.subr.mxu0 0.0
    %405 = vmatpush2.msra.mxu0 0.0
    %406 = vmatprep.subr.mxu0 0.0
    %407 = vmatpush2.msra.mxu0 0.0
    %408 = vmatprep.subr.mxu0 0.0
    %409 = vmatpush2.msra.mxu0 0.0
    %410 = vmatprep.subr.mxu0 0.0
    %411 = vmatpush2.msra.mxu0 0.0
    %412 = vmatprep.subr.mxu0 0.0
    %413 = vmatpush2.msra.mxu0 0.0
    %414 = vmatprep.subr.mxu0 0.0
    %415 = vmatpush2.msra.mxu0 0.0
    %416 = vmatprep.mubr.f32.mxu0 0.0
    %417 = vmatmul.mubr.f32.gmra.mxu0 %v216
    %v418 = vpop.f32.mrf.mxu0
    %v419 = vadd.f32 %v210, %v418
    %v420 = vpop.f32.mrf.mxu0
    %421 = vmatprep.mubr.f32.mxu0 0.0
    %422 = vmatmul.mubr.f32.gmra.mxu0 %v219
    %v423 = vpop.f32.mrf.mxu0
    %v424 = vadd.f32 %v210, %v423
    %v425 = vpop.f32.mrf.mxu0
    %426 = vmatprep.mubr.f32.mxu0 0.0
    %427 = vmatmul.mubr.f32.gmra.mxu0 %v222
    %v428 = vpop.f32.mrf.mxu0
    %v429 = vadd.f32 %v210, %v428
    %v430 = vpop.f32.mrf.mxu0
    %431 = vmatprep.mubr.f32.mxu0 0.0
    %432 = vmatmul.mubr.f32.gmra.mxu0 %v225
    %v433 = vpop.f32.mrf.mxu0
    %v434 = vadd.f32 %v210, %v433
    %v435 = vpop.f32.mrf.mxu0
    %436 = vmatprep.mubr.f32.mxu0 0.0
    %437 = vmatmul.mubr.f32.gmra.mxu0 %v228
    %v438 = vpop.f32.mrf.mxu0
    %v439 = vadd.f32 %v210, %v438
    %v440 = vpop.f32.mrf.mxu0
    %441 = vmatprep.mubr.f32.mxu0 0.0
    %442 = vmatmul.mubr.f32.gmra.mxu0 %v231
    %v443 = vpop.f32.mrf.mxu0
    %v444 = vadd.f32 %v210, %v443
    %v445 = vpop.f32.mrf.mxu0
    %446 = vmatprep.mubr.f32.mxu0 0.0
    %447 = vmatmul.mubr.f32.gmra.mxu0 %v234
    %v448 = vpop.f32.mrf.mxu0
    %v449 = vadd.f32 %v210, %v448
    %v450 = vpop.f32.mrf.mxu0
    %451 = vmatprep.mubr.f32.mxu0 0.0
    %452 = vmatmul.mubr.f32.gmra.mxu0 %v237
    %v453 = vpop.f32.mrf.mxu0
    %v454 = vadd.f32 %v210, %v453
    %v455 = vpop.f32.mrf.mxu0
    %456 = vdwg.mxu0
    %457 = vst [vmem:[#allocation2] sm:$0xff] %v306
    %458 = vst [vmem:[#allocation2 + $0x8] sm:$0xff] %v308
    %459 = vst [vmem:[#allocation2 + $0x10] sm:$0xff] %v419
    %460 = vst [vmem:[#allocation2 + $0x18] sm:$0xff] %v312
    %461 = vst [vmem:[#allocation2 + $0x20] sm:$0xff] %v314
    %462 = vst [vmem:[#allocation2 + $0x28] sm:$0xff] %v424
    %463 = vst [vmem:[#allocation2 + $0x30] sm:$0xff] %v318
    %464 = vst [vmem:[#allocation2 + $0x38] sm:$0xff] %v320
    %465 = vst [vmem:[#allocation2 + $0x40] sm:$0xff] %v429
    %466 = vst [vmem:[#allocation2 + $0x48] sm:$0xff] %v324
    %467 = vst [vmem:[#allocation2 + $0x50] sm:$0xff] %v326
    %468 = vst [vmem:[#allocation2 + $0x58] sm:$0xff] %v434
    %469 = vst [vmem:[#allocation2 + $0x60] sm:$0xff] %v330
    %470 = vst [vmem:[#allocation2 + $0x68] sm:$0xff] %v332
    %471 = vst [vmem:[#allocation2 + $0x70] sm:$0xff] %v439
    %472 = vst [vmem:[#allocation2 + $0x78] sm:$0xff] %v336
    %473 = vst [vmem:[#allocation2 + $0x80] sm:$0xff] %v338
    %474 = vst [vmem:[#allocation2 + $0x88] sm:$0xff] %v444
    %475 = vst [vmem:[#allocation2 + $0x90] sm:$0xff] %v342
    %476 = vst [vmem:[#allocation2 + $0x98] sm:$0xff] %v344
    %477 = vst [vmem:[#allocation2 + $0xa0] sm:$0xff] %v449
    %478 = vst [vmem:[#allocation2 + $0xa8] sm:$0xff] %v348
    %479 = vst [vmem:[#allocation2 + $0xb0] sm:$0xff] %v350
    %480 = vst [vmem:[#allocation2 + $0xb8] sm:$0xff] %v454
    %v482 = vlaneseq
    %v483 = vshrl.u32 %v482, 7
    %v484 = vsub.s32 0, %v483
    %v485 = vrot.slane %v92, %v484
    %s487 = smul.u32 0, 3
    %s488 = smul.addr %s487, 8
    %s489 = scalar_lea.vmem [#allocation2], %s488
    %v490 = vld [vmem:[%s489] sm:$0xff]
    %v491 = vld [vmem:[%s489 + $0x8] sm:$0xff]
    %v492 = vld [vmem:[%s489 + $0x10] sm:$0xff]
    %v493 = vld [vmem:[#allocation12] sm:$0xff]
    %v494 = vld [vmem:[#allocation12 + $0x18] sm:$0xff]
    %v495 = vld [vmem:[#allocation12 + $0x30] sm:$0xff]
    %v496 = vld [vmem:[#allocation12 + $0x48] sm:$0xff]
    %v497 = vld [vmem:[#allocation12 + $0x60] sm:$0xff]
    %v498 = vld [vmem:[#allocation12 + $0x78] sm:$0xff]
    %v499 = vld [vmem:[#allocation12 + $0x90] sm:$0xff]
    %v500 = vld [vmem:[#allocation12 + $0xa8] sm:$0xff]
    %v501 = vld [vmem:[#allocation12 + $0xc0] sm:$0xff]
    %v502 = vld [vmem:[#allocation12 + $0xd8] sm:$0xff]
    %v503 = vld [vmem:[#allocation12 + $0xf0] sm:$0xff]
    %v504 = vld [vmem:[#allocation12 + $0x108] sm:$0xff]
    %v505 = vld [vmem:[#allocation12 + $0x120] sm:$0xff]
    %v506 = vld [vmem:[#allocation12 + $0x138] sm:$0xff]
    %v507 = vld [vmem:[#allocation12 + $0x150] sm:$0xff]
    %v508 = vld [vmem:[#allocation12 + $0x168] sm:$0xff]
    %509 = vmatprep.subr.mxu0 0.0
    %510 = vmatpush1.msra.mxu0 %v508
    %511 = vmatprep.subr.mxu0 0.0
    %512 = vmatpush1.msra.mxu0 %v507
    %513 = vmatprep.subr.mxu0 0.0
    %514 = vmatpush1.msra.mxu0 %v506
    %515 = vmatprep.subr.mxu0 0.0
    %516 = vmatpush1.msra.mxu0 %v505
    %517 = vmatprep.subr.mxu0 0.0
    %518 = vmatpush1.msra.mxu0 %v504
    %519 = vmatprep.subr.mxu0 0.0
    %520 = vmatpush1.msra.mxu0 %v503
    %521 = vmatprep.subr.mxu0 0.0
    %522 = vmatpush1.msra.mxu0 %v502
    %523 = vmatprep.subr.mxu0 0.0
    %524 = vmatpush1.msra.mxu0 %v501
    %525 = vmatprep.subr.mxu0 0.0
    %526 = vmatpush1.msra.mxu0 %v500
    %527 = vmatprep.subr.mxu0 0.0
    %528 = vmatpush1.msra.mxu0 %v499
    %529 = vmatprep.subr.mxu0 0.0
    %530 = vmatpush1.msra.mxu0 %v498
    %531 = vmatprep.subr.mxu0 0.0
    %532 = vmatpush1.msra.mxu0 %v497
    %533 = vmatprep.subr.mxu0 0.0
    %534 = vmatpush1.msra.mxu0 %v496
    %535 = vmatprep.subr.mxu0 0.0
    %536 = vmatpush1.msra.mxu0 %v495
    %537 = vmatprep.subr.mxu0 0.0
    %538 = vmatpush1.msra.mxu0 %v494
    %539 = vmatprep.subr.mxu0 0.0
    %540 = vmatpush1.msra.mxu0 %v493
    %541 = vmatprep.subr.mxu0 0.0
    %542 = vmatpush2.msra.mxu0 0.0
    %543 = vmatprep.subr.mxu0 0.0
    %544 = vmatpush2.msra.mxu0 0.0
    %545 = vmatprep.subr.mxu0 0.0
    %546 = vmatpush2.msra.mxu0 0.0
    %547 = vmatprep.subr.mxu0 0.0
    %548 = vmatpush2.msra.mxu0 0.0
    %549 = vmatprep.subr.mxu0 0.0
    %550 = vmatpush2.msra.mxu0 0.0
    %551 = vmatprep.subr.mxu0 0.0
    %552 = vmatpush2.msra.mxu0 0.0
    %553 = vmatprep.subr.mxu0 0.0
    %554 = vmatpush2.msra.mxu0 0.0
    %555 = vmatprep.subr.mxu0 0.0
    %556 = vmatpush2.msra.mxu0 0.0
    %557 = vmatprep.subr.mxu0 0.0
    %558 = vmatpush2.msra.mxu0 0.0
    %559 = vmatprep.subr.mxu0 0.0
    %560 = vmatpush2.msra.mxu0 0.0
    %561 = vmatprep.subr.mxu0 0.0
    %562 = vmatpush2.msra.mxu0 0.0
    %563 = vmatprep.subr.mxu0 0.0
    %564 = vmatpush2.msra.mxu0 0.0
    %565 = vmatprep.subr.mxu0 0.0
    %566 = vmatpush2.msra.mxu0 0.0
    %567 = vmatprep.subr.mxu0 0.0
    %568 = vmatpush2.msra.mxu0 0.0
    %569 = vmatprep.subr.mxu0 0.0
    %570 = vmatpush2.msra.mxu0 0.0
    %571 = vmatprep.subr.mxu0 0.0
    %572 = vmatpush2.msra.mxu0 0.0
    %573 = vmatprep.mubr.f32.mxu0 0.0
    %574 = vmatmul.mubr.f32.gmra.mxu0 %v175
    %v575 = vpop.f32.mrf.mxu0
    %v576 = vadd.f32 0.0, %v575
    %v577 = vpop.f32.mrf.mxu0
    %578 = vdwg.mxu0
    %v579 = vld [vmem:[#allocation12 + $0x8] sm:$0xff]
    %v580 = vld [vmem:[#allocation12 + $0x20] sm:$0xff]
    %v581 = vld [vmem:[#allocation12 + $0x38] sm:$0xff]
    %v582 = vld [vmem:[#allocation12 + $0x50] sm:$0xff]
    %v583 = vld [vmem:[#allocation12 + $0x68] sm:$0xff]
    %v584 = vld [vmem:[#allocation12 + $0x80] sm:$0xff]
    %v585 = vld [vmem:[#allocation12 + $0x98] sm:$0xff]
    %v586 = vld [vmem:[#allocation12 + $0xb0] sm:$0xff]
    %v587 = vld [vmem:[#allocation12 + $0xc8] sm:$0xff]
    %v588 = vld [vmem:[#allocation12 + $0xe0] sm:$0xff]
    %v589 = vld [vmem:[#allocation12 + $0xf8] sm:$0xff]
    %v590 = vld [vmem:[#allocation12 + $0x110] sm:$0xff]
    %v591 = vld [vmem:[#allocation12 + $0x128] sm:$0xff]
    %v592 = vld [vmem:[#allocation12 + $0x140] sm:$0xff]
    %v593 = vld [vmem:[#allocation12 + $0x158] sm:$0xff]
    %v594 = vld [vmem:[#allocation12 + $0x170] sm:$0xff]
    %595 = vmatprep.subr.mxu0 0.0
    %596 = vmatpush1.msra.mxu0 %v594
    %597 = vmatprep.subr.mxu0 0.0
    %598 = vmatpush1.msra.mxu0 %v593
    %599 = vmatprep.subr.mxu0 0.0
    %600 = vmatpush1.msra.mxu0 %v592
    %601 = vmatprep.subr.mxu0 0.0
    %602 = vmatpush1.msra.mxu0 %v591
    %603 = vmatprep.subr.mxu0 0.0
    %604 = vmatpush1.msra.mxu0 %v590
    %605 = vmatprep.subr.mxu0 0.0
    %606 = vmatpush1.msra.mxu0 %v589
    %607 = vmatprep.subr.mxu0 0.0
    %608 = vmatpush1.msra.mxu0 %v588
    %609 = vmatprep.subr.mxu0 0.0
    %610 = vmatpush1.msra.mxu0 %v587
    %611 = vmatprep.subr.mxu0 0.0
    %612 = vmatpush1.msra.mxu0 %v586
    %613 = vmatprep.subr.mxu0 0.0
    %614 = vmatpush1.msra.mxu0 %v585
    %615 = vmatprep.subr.mxu0 0.0
    %616 = vmatpush1.msra.mxu0 %v584
    %617 = vmatprep.subr.mxu0 0.0
    %618 = vmatpush1.msra.mxu0 %v583
    %619 = vmatprep.subr.mxu0 0.0
    %620 = vmatpush1.msra.mxu0 %v582
    %621 = vmatprep.subr.mxu0 0.0
    %622 = vmatpush1.msra.mxu0 %v581
    %623 = vmatprep.subr.mxu0 0.0
    %624 = vmatpush1.msra.mxu0 %v580
    %625 = vmatprep.subr.mxu0 0.0
    %626 = vmatpush1.msra.mxu0 %v579
    %627 = vmatprep.subr.mxu0 0.0
    %628 = vmatpush2.msra.mxu0 0.0
    %629 = vmatprep.subr.mxu0 0.0
    %630 = vmatpush2.msra.mxu0 0.0
    %631 = vmatprep.subr.mxu0 0.0
    %632 = vmatpush2.msra.mxu0 0.0
    %633 = vmatprep.subr.mxu0 0.0
    %634 = vmatpush2.msra.mxu0 0.0
    %635 = vmatprep.subr.mxu0 0.0
    %636 = vmatpush2.msra.mxu0 0.0
    %637 = vmatprep.subr.mxu0 0.0
    %638 = vmatpush2.msra.mxu0 0.0
    %639 = vmatprep.subr.mxu0 0.0
    %640 = vmatpush2.msra.mxu0 0.0
    %641 = vmatprep.subr.mxu0 0.0
    %642 = vmatpush2.msra.mxu0 0.0
    %643 = vmatprep.subr.mxu0 0.0
    %644 = vmatpush2.msra.mxu0 0.0
    %645 = vmatprep.subr.mxu0 0.0
    %646 = vmatpush2.msra.mxu0 0.0
    %647 = vmatprep.subr.mxu0 0.0
    %648 = vmatpush2.msra.mxu0 0.0
    %649 = vmatprep.subr.mxu0 0.0
    %650 = vmatpush2.msra.mxu0 0.0
    %651 = vmatprep.subr.mxu0 0.0
    %652 = vmatpush2.msra.mxu0 0.0
    %653 = vmatprep.subr.mxu0 0.0
    %654 = vmatpush2.msra.mxu0 0.0
    %655 = vmatprep.subr.mxu0 0.0
    %656 = vmatpush2.msra.mxu0 0.0
    %657 = vmatprep.subr.mxu0 0.0
    %658 = vmatpush2.msra.mxu0 0.0
    %659 = vmatprep.mubr.f32.mxu0 0.0
    %660 = vmatmul.mubr.f32.gmra.mxu0 %v175
    %v661 = vpop.f32.mrf.mxu0
    %v662 = vadd.f32 0.0, %v661
    %v663 = vpop.f32.mrf.mxu0
    %664 = vdwg.mxu0
    %v665 = vld [vmem:[#allocation12 + $0x10] sm:$0xff]
    %v666 = vld [vmem:[#allocation12 + $0x28] sm:$0xff]
    %v667 = vld [vmem:[#allocation12 + $0x40] sm:$0xff]
    %v668 = vld [vmem:[#allocation12 + $0x58] sm:$0xff]
    %v669 = vld [vmem:[#allocation12 + $0x70] sm:$0xff]
    %v670 = vld [vmem:[#allocation12 + $0x88] sm:$0xff]
    %v671 = vld [vmem:[#allocation12 + $0xa0] sm:$0xff]
    %v672 = vld [vmem:[#allocation12 + $0xb8] sm:$0xff]
    %v673 = vld [vmem:[#allocation12 + $0xd0] sm:$0xff]
    %v674 = vld [vmem:[#allocation12 + $0xe8] sm:$0xff]
    %v675 = vld [vmem:[#allocation12 + $0x100] sm:$0xff]
    %v676 = vld [vmem:[#allocation12 + $0x118] sm:$0xff]
    %v677 = vld [vmem:[#allocation12 + $0x130] sm:$0xff]
    %v678 = vld [vmem:[#allocation12 + $0x148] sm:$0xff]
    %v679 = vld [vmem:[#allocation12 + $0x160] sm:$0xff]
    %v680 = vld [vmem:[#allocation12 + $0x178] sm:$0xff]
    %v681 = vadd.f32 %v490, %v576
    %v682 = vxor.u32 %v681, 2147483648
    %v683 = vmul.f32 %v682, 1.442695
    %v684 = vpow.pop %v683
    %v685 = vadd.f32 %v684, 1.0
    %v686 = vrcp.pop %v685
    %v687 = vmul.f32 1.0, %v686
    %v688 = vadd.f32 %v491, %v662
    %v689 = vxor.u32 %v688, 2147483648
    %v690 = vmul.f32 %v689, 1.442695
    %v691 = vpow.pop %v690
    %v692 = vadd.f32 %v691, 1.0
    %v693 = vrcp.pop %v692
    %v694 = vmul.f32 1.0, %v693
    %695 = vmatprep.subr.mxu0 0.0
    %696 = vmatpush1.msra.mxu0 %v680
    %697 = vmatprep.subr.mxu0 0.0
    %698 = vmatpush1.msra.mxu0 %v679
    %699 = vmatprep.subr.mxu0 0.0
    %700 = vmatpush1.msra.mxu0 %v678
    %701 = vmatprep.subr.mxu0 0.0
    %702 = vmatpush1.msra.mxu0 %v677
    %703 = vmatprep.subr.mxu0 0.0
    %704 = vmatpush1.msra.mxu0 %v676
    %705 = vmatprep.subr.mxu0 0.0
    %706 = vmatpush1.msra.mxu0 %v675
    %707 = vmatprep.subr.mxu0 0.0
    %708 = vmatpush1.msra.mxu0 %v674
    %709 = vmatprep.subr.mxu0 0.0
    %710 = vmatpush1.msra.mxu0 %v673
    %711 = vmatprep.subr.mxu0 0.0
    %712 = vmatpush1.msra.mxu0 %v672
    %713 = vmatprep.subr.mxu0 0.0
    %714 = vmatpush1.msra.mxu0 %v671
    %715 = vmatprep.subr.mxu0 0.0
    %716 = vmatpush1.msra.mxu0 %v670
    %717 = vmatprep.subr.mxu0 0.0
    %718 = vmatpush1.msra.mxu0 %v669
    %719 = vmatprep.subr.mxu0 0.0
    %720 = vmatpush1.msra.mxu0 %v668
    %721 = vmatprep.subr.mxu0 0.0
    %722 = vmatpush1.msra.mxu0 %v667
    %723 = vmatprep.subr.mxu0 0.0
    %724 = vmatpush1.msra.mxu0 %v666
    %725 = vmatprep.subr.mxu0 0.0
    %726 = vmatpush1.msra.mxu0 %v665
    %727 = vmatprep.subr.mxu0 0.0
    %728 = vmatpush2.msra.mxu0 0.0
    %729 = vmatprep.subr.mxu0 0.0
    %730 = vmatpush2.msra.mxu0 0.0
    %731 = vmatprep.subr.mxu0 0.0
    %732 = vmatpush2.msra.mxu0 0.0
    %733 = vmatprep.subr.mxu0 0.0
    %734 = vmatpush2.msra.mxu0 0.0
    %735 = vmatprep.subr.mxu0 0.0
    %736 = vmatpush2.msra.mxu0 0.0
    %737 = vmatprep.subr.mxu0 0.0
    %738 = vmatpush2.msra.mxu0 0.0
    %739 = vmatprep.subr.mxu0 0.0
    %740 = vmatpush2.msra.mxu0 0.0
    %741 = vmatprep.subr.mxu0 0.0
    %742 = vmatpush2.msra.mxu0 0.0
    %743 = vmatprep.subr.mxu0 0.0
    %744 = vmatpush2.msra.mxu0 0.0
    %745 = vmatprep.subr.mxu0 0.0
    %746 = vmatpush2.msra.mxu0 0.0
    %747 = vmatprep.subr.mxu0 0.0
    %748 = vmatpush2.msra.mxu0 0.0
    %749 = vmatprep.subr.mxu0 0.0
    %750 = vmatpush2.msra.mxu0 0.0
    %751 = vmatprep.subr.mxu0 0.0
    %752 = vmatpush2.msra.mxu0 0.0
    %753 = vmatprep.subr.mxu0 0.0
    %754 = vmatpush2.msra.mxu0 0.0
    %755 = vmatprep.subr.mxu0 0.0
    %756 = vmatpush2.msra.mxu0 0.0
    %757 = vmatprep.subr.mxu0 0.0
    %758 = vmatpush2.msra.mxu0 0.0
    %759 = vmatprep.mubr.f32.mxu0 0.0
    %760 = vmatmul.mubr.f32.gmra.mxu0 %v175
    %v761 = vpop.f32.mrf.mxu0
    %v762 = vadd.f32 %v485, %v761
    %v763 = vpop.f32.mrf.mxu0
    %764 = vdwg.mxu0
    %v765 = vmul.f32 %v687, %v762
    %v766 = vadd.f32 %v492, %v765
    %v767 = vtanh.pop %v766
    %v768 = vsub.f32 1.0, %v694
    %v769 = vmul.f32 %v768, %v767
    %v770 = vmul.f32 %v694, %v175
    %v771 = vadd.f32 %v769, %v770
    %772 = vst [vmem:[#allocation3] sm:$0xff] %v771
    %s773 = smul.u32 1, 3
    %s774 = smul.addr %s773, 8
    %s775 = scalar_lea.vmem [#allocation2], %s774
    %v776 = vld [vmem:[%s775] sm:$0xff]
    %v777 = vld [vmem:[%s775 + $0x8] sm:$0xff]
    %v778 = vld [vmem:[%s775 + $0x10] sm:$0xff]
    %v779 = vld [vmem:[#allocation12] sm:$0xff]
    %v780 = vld [vmem:[#allocation12 + $0x18] sm:$0xff]
    %v781 = vld [vmem:[#allocation12 + $0x30] sm:$0xff]
    %v782 = vld [vmem:[#allocation12 + $0x48] sm:$0xff]
    %v783 = vld [vmem:[#allocation12 + $0x60] sm:$0xff]
    %v784 = vld [vmem:[#allocation12 + $0x78] sm:$0xff]
    %v785 = vld [vmem:[#allocation12 + $0x90] sm:$0xff]
    %v786 = vld [vmem:[#allocation12 + $0xa8] sm:$0xff]
    %v787 = vld [vmem:[#allocation12 + $0xc0] sm:$0xff]
    %v788 = vld [vmem:[#allocation12 + $0xd8] sm:$0xff]
    %v789 = vld [vmem:[#allocation12 + $0xf0] sm:$0xff]
    %v790 = vld [vmem:[#allocation12 + $0x108] sm:$0xff]
    %v791 = vld [vmem:[#allocation12 + $0x120] sm:$0xff]
    %v792 = vld [vmem:[#allocation12 + $0x138] sm:$0xff]
    %v793 = vld [vmem:[#allocation12 + $0x150] sm:$0xff]
    %v794 = vld [vmem:[#allocation12 + $0x168] sm:$0xff]
    %795 = vmatprep.subr.mxu0 0.0
    %796 = vmatpush1.msra.mxu0 %v794
    %797 = vmatprep.subr.mxu0 0.0
    %798 = vmatpush1.msra.mxu0 %v793
    %799 = vmatprep.subr.mxu0 0.0
    %800 = vmatpush1.msra.mxu0 %v792
    %801 = vmatprep.subr.mxu0 0.0
    %802 = vmatpush1.msra.mxu0 %v791
    %803 = vmatprep.subr.mxu0 0.0
    %804 = vmatpush1.msra.mxu0 %v790
    %805 = vmatprep.subr.mxu0 0.0
    %806 = vmatpush1.msra.mxu0 %v789
    %807 = vmatprep.subr.mxu0 0.0
    %808 = vmatpush1.msra.mxu0 %v788
    %809 = vmatprep.subr.mxu0 0.0
    %810 = vmatpush1.msra.mxu0 %v787
    %811 = vmatprep.subr.mxu0 0.0
    %812 = vmatpush1.msra.mxu0 %v786
    %813 = vmatprep.subr.mxu0 0.0
    %814 = vmatpush1.msra.mxu0 %v785
    %815 = vmatprep.subr.mxu0 0.0
    %816 = vmatpush1.msra.mxu0 %v784
    %817 = vmatprep.subr.mxu0 0.0
    %818 = vmatpush1.msra.mxu0 %v783
    %819 = vmatprep.subr.mxu0 0.0
    %820 = vmatpush1.msra.mxu0 %v782
    %821 = vmatprep.subr.mxu0 0.0
    %822 = vmatpush1.msra.mxu0 %v781
    %823 = vmatprep.subr.mxu0 0.0
    %824 = vmatpush1.msra.mxu0 %v780
    %825 = vmatprep.subr.mxu0 0.0
    %826 = vmatpush1.msra.mxu0 %v779
    %827 = vmatprep.subr.mxu0 0.0
    %828 = vmatpush2.msra.mxu0 0.0
    %829 = vmatprep.subr.mxu0 0.0
    %830 = vmatpush2.msra.mxu0 0.0
    %831 = vmatprep.subr.mxu0 0.0
    %832 = vmatpush2.msra.mxu0 0.0
    %833 = vmatprep.subr.mxu0 0.0
    %834 = vmatpush2.msra.mxu0 0.0
    %835 = vmatprep.subr.mxu0 0.0
    %836 = vmatpush2.msra.mxu0 0.0
    %837 = vmatprep.subr.mxu0 0.0
    %838 = vmatpush2.msra.mxu0 0.0
    %839 = vmatprep.subr.mxu0 0.0
    %840 = vmatpush2.msra.mxu0 0.0
    %841 = vmatprep.subr.mxu0 0.0
    %842 = vmatpush2.msra.mxu0 0.0
    %843 = vmatprep.subr.mxu0 0.0
    %844 = vmatpush2.msra.mxu0 0.0
    %845 = vmatprep.subr.mxu0 0.0
    %846 = vmatpush2.msra.mxu0 0.0
    %847 = vmatprep.subr.mxu0 0.0
    %848 = vmatpush2.msra.mxu0 0.0
    %849 = vmatprep.subr.mxu0 0.0
    %850 = vmatpush2.msra.mxu0 0.0
    %851 = vmatprep.subr.mxu0 0.0
    %852 = vmatpush2.msra.mxu0 0.0
    %853 = vmatprep.subr.mxu0 0.0
    %854 = vmatpush2.msra.mxu0 0.0
    %855 = vmatprep.subr.mxu0 0.0
    %856 = vmatpush2.msra.mxu0 0.0
    %857 = vmatprep.subr.mxu0 0.0
    %858 = vmatpush2.msra.mxu0 0.0
    %859 = vmatprep.mubr.f32.mxu0 0.0
    %860 = vmatmul.mubr.f32.gmra.mxu0 %v771
    %v861 = vpop.f32.mrf.mxu0
    %v862 = vadd.f32 0.0, %v861
    %v863 = vpop.f32.mrf.mxu0
    %864 = vdwg.mxu0
    %v865 = vld [vmem:[#allocation12 + $0x8] sm:$0xff]
    %v866 = vld [vmem:[#allocation12 + $0x20] sm:$0xff]
    %v867 = vld [vmem:[#allocation12 + $0x38] sm:$0xff]
    %v868 = vld [vmem:[#allocation12 + $0x50] sm:$0xff]
    %v869 = vld [vmem:[#allocation12 + $0x68] sm:$0xff]
    %v870 = vld [vmem:[#allocation12 + $0x80] sm:$0xff]
    %v871 = vld [vmem:[#allocation12 + $0x98] sm:$0xff]
    %v872 = vld [vmem:[#allocation12 + $0xb0] sm:$0xff]
    %v873 = vld [vmem:[#allocation12 + $0xc8] sm:$0xff]
    %v874 = vld [vmem:[#allocation12 + $0xe0] sm:$0xff]
    %v875 = vld [vmem:[#allocation12 + $0xf8] sm:$0xff]
    %v876 = vld [vmem:[#allocation12 + $0x110] sm:$0xff]
    %v877 = vld [vmem:[#allocation12 + $0x128] sm:$0xff]
    %v878 = vld [vmem:[#allocation12 + $0x140] sm:$0xff]
    %v879 = vld [vmem:[#allocation12 + $0x158] sm:$0xff]
    %v880 = vld [vmem:[#allocation12 + $0x170] sm:$0xff]
    %881 = vmatprep.subr.mxu0 0.0
    %882 = vmatpush1.msra.mxu0 %v880
    %883 = vmatprep.subr.mxu0 0.0
    %884 = vmatpush1.msra.mxu0 %v879
    %885 = vmatprep.subr.mxu0 0.0
    %886 = vmatpush1.msra.mxu0 %v878
    %887 = vmatprep.subr.mxu0 0.0
    %888 = vmatpush1.msra.mxu0 %v877
    %889 = vmatprep.subr.mxu0 0.0
    %890 = vmatpush1.msra.mxu0 %v876
    %891 = vmatprep.subr.mxu0 0.0
    %892 = vmatpush1.msra.mxu0 %v875
    %893 = vmatprep.subr.mxu0 0.0
    %894 = vmatpush1.msra.mxu0 %v874
    %895 = vmatprep.subr.mxu0 0.0
    %896 = vmatpush1.msra.mxu0 %v873
    %897 = vmatprep.subr.mxu0 0.0
    %898 = vmatpush1.msra.mxu0 %v872
    %899 = vmatprep.subr.mxu0 0.0
    %900 = vmatpush1.msra.mxu0 %v871
    %901 = vmatprep.subr.mxu0 0.0
    %902 = vmatpush1.msra.mxu0 %v870
    %903 = vmatprep.subr.mxu0 0.0
    %904 = vmatpush1.msra.mxu0 %v869
    %905 = vmatprep.subr.mxu0 0.0
    %906 = vmatpush1.msra.mxu0 %v868
    %907 = vmatprep.subr.mxu0 0.0
    %908 = vmatpush1.msra.mxu0 %v867
    %909 = vmatprep.subr.mxu0 0.0
    %910 = vmatpush1.msra.mxu0 %v866
    %911 = vmatprep.subr.mxu0 0.0
    %912 = vmatpush1.msra.mxu0 %v865
    %913 = vmatprep.subr.mxu0 0.0
    %914 = vmatpush2.msra.mxu0 0.0
    %915 = vmatprep.subr.mxu0 0.0
    %916 = vmatpush2.msra.mxu0 0.0
    %917 = vmatprep.subr.mxu0 0.0
    %918 = vmatpush2.msra.mxu0 0.0
    %919 = vmatprep.subr.mxu0 0.0
    %920 = vmatpush2.msra.mxu0 0.0
    %921 = vmatprep.subr.mxu0 0.0
    %922 = vmatpush2.msra.mxu0 0.0
    %923 = vmatprep.subr.mxu0 0.0
    %924 = vmatpush2.msra.mxu0 0.0
    %925 = vmatprep.subr.mxu0 0.0
    %926 = vmatpush2.msra.mxu0 0.0
    %927 = vmatprep.subr.mxu0 0.0
    %928 = vmatpush2.msra.mxu0 0.0
    %929 = vmatprep.subr.mxu0 0.0
    %930 = vmatpush2.msra.mxu0 0.0
    %931 = vmatprep.subr.mxu0 0.0
    %932 = vmatpush2.msra.mxu0 0.0
    %933 = vmatprep.subr.mxu0 0.0
    %934 = vmatpush2.msra.mxu0 0.0
    %935 = vmatprep.subr.mxu0 0.0
    %936 = vmatpush2.msra.mxu0 0.0
    %937 = vmatprep.subr.mxu0 0.0
    %938 = vmatpush2.msra.mxu0 0.0
    %939 = vmatprep.subr.mxu0 0.0
    %940 = vmatpush2.msra.mxu0 0.0
    %941 = vmatprep.subr.mxu0 0.0
    %942 = vmatpush2.msra.mxu0 0.0
    %943 = vmatprep.subr.mxu0 0.0
    %944 = vmatpush2.msra.mxu0 0.0
    %945 = vmatprep.mubr.f32.mxu0 0.0
    %946 = vmatmul.mubr.f32.gmra.mxu0 %v771
    %v947 = vpop.f32.mrf.mxu0
    %v948 = vadd.f32 0.0, %v947
    %v949 = vpop.f32.mrf.mxu0
    %950 = vdwg.mxu0
    %v951 = vld [vmem:[#allocation12 + $0x10] sm:$0xff]
    %v952 = vld [vmem:[#allocation12 + $0x28] sm:$0xff]
    %v953 = vld [vmem:[#allocation12 + $0x40] sm:$0xff]
    %v954 = vld [vmem:[#allocation12 + $0x58] sm:$0xff]
    %v955 = vld [vmem:[#allocation12 + $0x70] sm:$0xff]
    %v956 = vld [vmem:[#allocation12 + $0x88] sm:$0xff]
    %v957 = vld [vmem:[#allocation12 + $0xa0] sm:$0xff]
    %v958 = vld [vmem:[#allocation12 + $0xb8] sm:$0xff]
    %v959 = vld [vmem:[#allocation12 + $0xd0] sm:$0xff]
    %v960 = vld [vmem:[#allocation12 + $0xe8] sm:$0xff]
    %v961 = vld [vmem:[#allocation12 + $0x100] sm:$0xff]
    %v962 = vld [vmem:[#allocation12 + $0x118] sm:$0xff]
    %v963 = vld [vmem:[#allocation12 + $0x130] sm:$0xff]
    %v964 = vld [vmem:[#allocation12 + $0x148] sm:$0xff]
    %v965 = vld [vmem:[#allocation12 + $0x160] sm:$0xff]
    %v966 = vld [vmem:[#allocation12 + $0x178] sm:$0xff]
    %v967 = vadd.f32 %v776, %v862
    %v968 = vxor.u32 %v967, 2147483648
    %v969 = vmul.f32 %v968, 1.442695
    %v970 = vpow.pop %v969
    %v971 = vadd.f32 %v970, 1.0
    %v972 = vrcp.pop %v971
    %v973 = vmul.f32 1.0, %v972
    %v974 = vadd.f32 %v777, %v948
    %v975 = vxor.u32 %v974, 2147483648
    %v976 = vmul.f32 %v975, 1.442695
    %v977 = vpow.pop %v976
    %v978 = vadd.f32 %v977, 1.0
    %v979 = vrcp.pop %v978
    %v980 = vmul.f32 1.0, %v979
    %981 = vmatprep.subr.mxu0 0.0
    %982 = vmatpush1.msra.mxu0 %v966
    %983 = vmatprep.subr.mxu0 0.0
    %984 = vmatpush1.msra.mxu0 %v965
    %985 = vmatprep.subr.mxu0 0.0
    %986 = vmatpush1.msra.mxu0 %v964
    %987 = vmatprep.subr.mxu0 0.0
    %988 = vmatpush1.msra.mxu0 %v963
    %989 = vmatprep.subr.mxu0 0.0
    %990 = vmatpush1.msra.mxu0 %v962
    %991 = vmatprep.subr.mxu0 0.0
    %992 = vmatpush1.msra.mxu0 %v961
    %993 = vmatprep.subr.mxu0 0.0
    %994 = vmatpush1.msra.mxu0 %v960
    %995 = vmatprep.subr.mxu0 0.0
    %996 = vmatpush1.msra.mxu0 %v959
    %997 = vmatprep.subr.mxu0 0.0
    %998 = vmatpush1.msra.mxu0 %v958
    %999 = vmatprep.subr.mxu0 0.0
    %1000 = vmatpush1.msra.mxu0 %v957
    %1001 = vmatprep.subr.mxu0 0.0
    %1002 = vmatpush1.msra.mxu0 %v956
    %1003 = vmatprep.subr.mxu0 0.0
    %1004 = vmatpush1.msra.mxu0 %v955
    %1005 = vmatprep.subr.mxu0 0.0
    %1006 = vmatpush1.msra.mxu0 %v954
    %1007 = vmatprep.subr.mxu0 0.0
    %1008 = vmatpush1.msra.mxu0 %v953
    %1009 = vmatprep.subr.mxu0 0.0
    %1010 = vmatpush1.msra.mxu0 %v952
    %1011 = vmatprep.subr.mxu0 0.0
    %1012 = vmatpush1.msra.mxu0 %v951
    %1013 = vmatprep.subr.mxu0 0.0
    %1014 = vmatpush2.msra.mxu0 0.0
    %1015 = vmatprep.subr.mxu0 0.0
    %1016 = vmatpush2.msra.mxu0 0.0
    %1017 = vmatprep.subr.mxu0 0.0
    %1018 = vmatpush2.msra.mxu0 0.0
    %1019 = vmatprep.subr.mxu0 0.0
    %1020 = vmatpush2.msra.mxu0 0.0
    %1021 = vmatprep.subr.mxu0 0.0
    %1022 = vmatpush2.msra.mxu0 0.0
    %1023 = vmatprep.subr.mxu0 0.0
    %1024 = vmatpush2.msra.mxu0 0.0
    %1025 = vmatprep.subr.mxu0 0.0
    %1026 = vmatpush2.msra.mxu0 0.0
    %1027 = vmatprep.subr.mxu0 0.0
    %1028 = vmatpush2.msra.mxu0 0.0
    %1029 = vmatprep.subr.mxu0 0.0
    %1030 = vmatpush2.msra.mxu0 0.0
    %1031 = vmatprep.subr.mxu0 0.0
    %1032 = vmatpush2.msra.mxu0 0.0
    %1033 = vmatprep.subr.mxu0 0.0
    %1034 = vmatpush2.msra.mxu0 0.0
    %1035 = vmatprep.subr.mxu0 0.0
    %1036 = vmatpush2.msra.mxu0 0.0
    %1037 = vmatprep.subr.mxu0 0.0
    %1038 = vmatpush2.msra.mxu0 0.0
    %1039 = vmatprep.subr.mxu0 0.0
    %1040 = vmatpush2.msra.mxu0 0.0
    %1041 = vmatprep.subr.mxu0 0.0
    %1042 = vmatpush2.msra.mxu0 0.0
    %1043 = vmatprep.subr.mxu0 0.0
    %1044 = vmatpush2.msra.mxu0 0.0
    %1045 = vmatprep.mubr.f32.mxu0 0.0
    %1046 = vmatmul.mubr.f32.gmra.mxu0 %v771
    %v1047 = vpop.f32.mrf.mxu0
    %v1048 = vadd.f32 %v485, %v1047
    %v1049 = vpop.f32.mrf.mxu0
    %1050 = vdwg.mxu0
    %v1051 = vmul.f32 %v973, %v1048
    %v1052 = vadd.f32 %v778, %v1051
    %v1053 = vtanh.pop %v1052
    %v1054 = vsub.f32 1.0, %v980
    %v1055 = vmul.f32 %v1054, %v1053
    %v1056 = vmul.f32 %v980, %v771
    %v1057 = vadd.f32 %v1055, %v1056
    %s1058 = scalar_lea.vmem [#allocation3], 8
    %1059 = vst [vmem:[%s1058] sm:$0xff] %v1057
    %s1060 = smul.u32 2, 3
    %s1061 = smul.addr %s1060, 8
    %s1062 = scalar_lea.vmem [#allocation2], %s1061
    %v1063 = vld [vmem:[%s1062] sm:$0xff]
    %v1064 = vld [vmem:[%s1062 + $0x8] sm:$0xff]
    %v1065 = vld [vmem:[%s1062 + $0x10] sm:$0xff]
    %v1066 = vld [vmem:[#allocation12] sm:$0xff]
    %v1067 = vld [vmem:[#allocation12 + $0x18] sm:$0xff]
    %v1068 = vld [vmem:[#allocation12 + $0x30] sm:$0xff]
    %v1069 = vld [vmem:[#allocation12 + $0x48] sm:$0xff]
    %v1070 = vld [vmem:[#allocation12 + $0x60] sm:$0xff]
    %v1071 = vld [vmem:[#allocation12 + $0x78] sm:$0xff]
    %v1072 = vld [vmem:[#allocation12 + $0x90] sm:$0xff]
    %v1073 = vld [vmem:[#allocation12 + $0xa8] sm:$0xff]
    %v1074 = vld [vmem:[#allocation12 + $0xc0] sm:$0xff]
    %v1075 = vld [vmem:[#allocation12 + $0xd8] sm:$0xff]
    %v1076 = vld [vmem:[#allocation12 + $0xf0] sm:$0xff]
    %v1077 = vld [vmem:[#allocation12 + $0x108] sm:$0xff]
    %v1078 = vld [vmem:[#allocation12 + $0x120] sm:$0xff]
    %v1079 = vld [vmem:[#allocation12 + $0x138] sm:$0xff]
    %v1080 = vld [vmem:[#allocation12 + $0x150] sm:$0xff]
    %v1081 = vld [vmem:[#allocation12 + $0x168] sm:$0xff]
    %1082 = vmatprep.subr.mxu0 0.0
    %1083 = vmatpush1.msra.mxu0 %v1081
    %1084 = vmatprep.subr.mxu0 0.0
    %1085 = vmatpush1.msra.mxu0 %v1080
    %1086 = vmatprep.subr.mxu0 0.0
    %1087 = vmatpush1.msra.mxu0 %v1079
    %1088 = vmatprep.subr.mxu0 0.0
    %1089 = vmatpush1.msra.mxu0 %v1078
    %1090 = vmatprep.subr.mxu0 0.0
    %1091 = vmatpush1.msra.mxu0 %v1077
    %1092 = vmatprep.subr.mxu0 0.0
    %1093 = vmatpush1.msra.mxu0 %v1076
    %1094 = vmatprep.subr.mxu0 0.0
    %1095 = vmatpush1.msra.mxu0 %v1075
    %1096 = vmatprep.subr.mxu0 0.0
    %1097 = vmatpush1.msra.mxu0 %v1074
    %1098 = vmatprep.subr.mxu0 0.0
    %1099 = vmatpush1.msra.mxu0 %v1073
    %1100 = vmatprep.subr.mxu0 0.0
    %1101 = vmatpush1.msra.mxu0 %v1072
    %1102 = vmatprep.subr.mxu0 0.0
    %1103 = vmatpush1.msra.mxu0 %v1071
    %1104 = vmatprep.subr.mxu0 0.0
    %1105 = vmatpush1.msra.mxu0 %v1070
    %1106 = vmatprep.subr.mxu0 0.0
    %1107 = vmatpush1.msra.mxu0 %v1069
    %1108 = vmatprep.subr.mxu0 0.0
    %1109 = vmatpush1.msra.mxu0 %v1068
    %1110 = vmatprep.subr.mxu0 0.0
    %1111 = vmatpush1.msra.mxu0 %v1067
    %1112 = vmatprep.subr.mxu0 0.0
    %1113 = vmatpush1.msra.mxu0 %v1066
    %1114 = vmatprep.subr.mxu0 0.0
    %1115 = vmatpush2.msra.mxu0 0.0
    %1116 = vmatprep.subr.mxu0 0.0
    %1117 = vmatpush2.msra.mxu0 0.0
    %1118 = vmatprep.subr.mxu0 0.0
    %1119 = vmatpush2.msra.mxu0 0.0
    %1120 = vmatprep.subr.mxu0 0.0
    %1121 = vmatpush2.msra.mxu0 0.0
    %1122 = vmatprep.subr.mxu0 0.0
    %1123 = vmatpush2.msra.mxu0 0.0
    %1124 = vmatprep.subr.mxu0 0.0
    %1125 = vmatpush2.msra.mxu0 0.0
    %1126 = vmatprep.subr.mxu0 0.0
    %1127 = vmatpush2.msra.mxu0 0.0
    %1128 = vmatprep.subr.mxu0 0.0
    %1129 = vmatpush2.msra.mxu0 0.0
    %1130 = vmatprep.subr.mxu0 0.0
    %1131 = vmatpush2.msra.mxu0 0.0
    %1132 = vmatprep.subr.mxu0 0.0
    %1133 = vmatpush2.msra.mxu0 0.0
    %1134 = vmatprep.subr.mxu0 0.0
    %1135 = vmatpush2.msra.mxu0 0.0
    %1136 = vmatprep.subr.mxu0 0.0
    %1137 = vmatpush2.msra.mxu0 0.0
    %1138 = vmatprep.subr.mxu0 0.0
    %1139 = vmatpush2.msra.mxu0 0.0
    %1140 = vmatprep.subr.mxu0 0.0
    %1141 = vmatpush2.msra.mxu0 0.0
    %1142 = vmatprep.subr.mxu0 0.0
    %1143 = vmatpush2.msra.mxu0 0.0
    %1144 = vmatprep.subr.mxu0 0.0
    %1145 = vmatpush2.msra.mxu0 0.0
    %1146 = vmatprep.mubr.f32.mxu0 0.0
    %1147 = vmatmul.mubr.f32.gmra.mxu0 %v1057
    %v1148 = vpop.f32.mrf.mxu0
    %v1149 = vadd.f32 0.0, %v1148
    %v1150 = vpop.f32.mrf.mxu0
    %1151 = vdwg.mxu0
    %v1152 = vld [vmem:[#allocation12 + $0x8] sm:$0xff]
    %v1153 = vld [vmem:[#allocation12 + $0x20] sm:$0xff]
    %v1154 = vld [vmem:[#allocation12 + $0x38] sm:$0xff]
    %v1155 = vld [vmem:[#allocation12 + $0x50] sm:$0xff]
    %v1156 = vld [vmem:[#allocation12 + $0x68] sm:$0xff]
    %v1157 = vld [vmem:[#allocation12 + $0x80] sm:$0xff]
    %v1158 = vld [vmem:[#allocation12 + $0x98] sm:$0xff]
    %v1159 = vld [vmem:[#allocation12 + $0xb0] sm:$0xff]
    %v1160 = vld [vmem:[#allocation12 + $0xc8] sm:$0xff]
    %v1161 = vld [vmem:[#allocation12 + $0xe0] sm:$0xff]
    %v1162 = vld [vmem:[#allocation12 + $0xf8] sm:$0xff]
    %v1163 = vld [vmem:[#allocation12 + $0x110] sm:$0xff]
    %v1164 = vld [vmem:[#allocation12 + $0x128] sm:$0xff]
    %v1165 = vld [vmem:[#allocation12 + $0x140] sm:$0xff]
    %v1166 = vld [vmem:[#allocation12 + $0x158] sm:$0xff]
    %v1167 = vld [vmem:[#allocation12 + $0x170] sm:$0xff]
    %1168 = vmatprep.subr.mxu0 0.0
    %1169 = vmatpush1.msra.mxu0 %v1167
    %1170 = vmatprep.subr.mxu0 0.0
    %1171 = vmatpush1.msra.mxu0 %v1166
    %1172 = vmatprep.subr.mxu0 0.0
    %1173 = vmatpush1.msra.mxu0 %v1165
    %1174 = vmatprep.subr.mxu0 0.0
    %1175 = vmatpush1.msra.mxu0 %v1164
    %1176 = vmatprep.subr.mxu0 0.0
    %1177 = vmatpush1.msra.mxu0 %v1163
    %1178 = vmatprep.subr.mxu0 0.0
    %1179 = vmatpush1.msra.mxu0 %v1162
    %1180 = vmatprep.subr.mxu0 0.0
    %1181 = vmatpush1.msra.mxu0 %v1161
    %1182 = vmatprep.subr.mxu0 0.0
    %1183 = vmatpush1.msra.mxu0 %v1160
    %1184 = vmatprep.subr.mxu0 0.0
    %1185 = vmatpush1.msra.mxu0 %v1159
    %1186 = vmatprep.subr.mxu0 0.0
    %1187 = vmatpush1.msra.mxu0 %v1158
    %1188 = vmatprep.subr.mxu0 0.0
    %1189 = vmatpush1.msra.mxu0 %v1157
    %1190 = vmatprep.subr.mxu0 0.0
    %1191 = vmatpush1.msra.mxu0 %v1156
    %1192 = vmatprep.subr.mxu0 0.0
    %1193 = vmatpush1.msra.mxu0 %v1155
    %1194 = vmatprep.subr.mxu0 0.0
    %1195 = vmatpush1.msra.mxu0 %v1154
    %1196 = vmatprep.subr.mxu0 0.0
    %1197 = vmatpush1.msra.mxu0 %v1153
    %1198 = vmatprep.subr.mxu0 0.0
    %1199 = vmatpush1.msra.mxu0 %v1152
    %1200 = vmatprep.subr.mxu0 0.0
    %1201 = vmatpush2.msra.mxu0 0.0
    %1202 = vmatprep.subr.mxu0 0.0
    %1203 = vmatpush2.msra.mxu0 0.0
    %1204 = vmatprep.subr.mxu0 0.0
    %1205 = vmatpush2.msra.mxu0 0.0
    %1206 = vmatprep.subr.mxu0 0.0
    %1207 = vmatpush2.msra.mxu0 0.0
    %1208 = vmatprep.subr.mxu0 0.0
    %1209 = vmatpush2.msra.mxu0 0.0
    %1210 = vmatprep.subr.mxu0 0.0
    %1211 = vmatpush2.msra.mxu0 0.0
    %1212 = vmatprep.subr.mxu0 0.0
    %1213 = vmatpush2.msra.mxu0 0.0
    %1214 = vmatprep.subr.mxu0 0.0
    %1215 = vmatpush2.msra.mxu0 0.0
    %1216 = vmatprep.subr.mxu0 0.0
    %1217 = vmatpush2.msra.mxu0 0.0
    %1218 = vmatprep.subr.mxu0 0.0
    %1219 = vmatpush2.msra.mxu0 0.0
    %1220 = vmatprep.subr.mxu0 0.0
    %1221 = vmatpush2.msra.mxu0 0.0
    %1222 = vmatprep.subr.mxu0 0.0
    %1223 = vmatpush2.msra.mxu0 0.0
    %1224 = vmatprep.subr.mxu0 0.0
    %1225 = vmatpush2.msra.mxu0 0.0
    %1226 = vmatprep.subr.mxu0 0.0
    %1227 = vmatpush2.msra.mxu0 0.0
    %1228 = vmatprep.subr.mxu0 0.0
    %1229 = vmatpush2.msra.mxu0 0.0
    %1230 = vmatprep.subr.mxu0 0.0
    %1231 = vmatpush2.msra.mxu0 0.0
    %1232 = vmatprep.mubr.f32.mxu0 0.0
    %1233 = vmatmul.mubr.f32.gmra.mxu0 %v1057
    %v1234 = vpop.f32.mrf.mxu0
    %v1235 = vadd.f32 0.0, %v1234
    %v1236 = vpop.f32.mrf.mxu0
    %1237 = vdwg.mxu0
    %v1238 = vld [vmem:[#allocation12 + $0x10] sm:$0xff]
    %v1239 = vld [vmem:[#allocation12 + $0x28] sm:$0xff]
    %v1240 = vld [vmem:[#allocation12 + $0x40] sm:$0xff]
    %v1241 = vld [vmem:[#allocation12 + $0x58] sm:$0xff]
    %v1242 = vld [vmem:[#allocation12 + $0x70] sm:$0xff]
    %v1243 = vld [vmem:[#allocation12 + $0x88] sm:$0xff]
    %v1244 = vld [vmem:[#allocation12 + $0xa0] sm:$0xff]
    %v1245 = vld [vmem:[#allocation12 + $0xb8] sm:$0xff]
    %v1246 = vld [vmem:[#allocation12 + $0xd0] sm:$0xff]
    %v1247 = vld [vmem:[#allocation12 + $0xe8] sm:$0xff]
    %v1248 = vld [vmem:[#allocation12 + $0x100] sm:$0xff]
    %v1249 = vld [vmem:[#allocation12 + $0x118] sm:$0xff]
    %v1250 = vld [vmem:[#allocation12 + $0x130] sm:$0xff]
    %v1251 = vld [vmem:[#allocation12 + $0x148] sm:$0xff]
    %v1252 = vld [vmem:[#allocation12 + $0x160] sm:$0xff]
    %v1253 = vld [vmem:[#allocation12 + $0x178] sm:$0xff]
    %v1254 = vadd.f32 %v1063, %v1149
    %v1255 = vxor.u32 %v1254, 2147483648
    %v1256 = vmul.f32 %v1255, 1.442695
    %v1257 = vpow.pop %v1256
    %v1258 = vadd.f32 %v1257, 1.0
    %v1259 = vrcp.pop %v1258
    %v1260 = vmul.f32 1.0, %v1259
    %v1261 = vadd.f32 %v1064, %v1235
    %v1262 = vxor.u32 %v1261, 2147483648
    %v1263 = vmul.f32 %v1262, 1.442695
    %v1264 = vpow.pop %v1263
    %v1265 = vadd.f32 %v1264, 1.0
    %v1266 = vrcp.pop %v1265
    %v1267 = vmul.f32 1.0, %v1266
    %1268 = vmatprep.subr.mxu0 0.0
    %1269 = vmatpush1.msra.mxu0 %v1253
    %1270 = vmatprep.subr.mxu0 0.0
    %1271 = vmatpush1.msra.mxu0 %v1252
    %1272 = vmatprep.subr.mxu0 0.0
    %1273 = vmatpush1.msra.mxu0 %v1251
    %1274 = vmatprep.subr.mxu0 0.0
    %1275 = vmatpush1.msra.mxu0 %v1250
    %1276 = vmatprep.subr.mxu0 0.0
    %1277 = vmatpush1.msra.mxu0 %v1249
    %1278 = vmatprep.subr.mxu0 0.0
    %1279 = vmatpush1.msra.mxu0 %v1248
    %1280 = vmatprep.subr.mxu0 0.0
    %1281 = vmatpush1.msra.mxu0 %v1247
    %1282 = vmatprep.subr.mxu0 0.0
    %1283 = vmatpush1.msra.mxu0 %v1246
    %1284 = vmatprep.subr.mxu0 0.0
    %1285 = vmatpush1.msra.mxu0 %v1245
    %1286 = vmatprep.subr.mxu0 0.0
    %1287 = vmatpush1.msra.mxu0 %v1244
    %1288 = vmatprep.subr.mxu0 0.0
    %1289 = vmatpush1.msra.mxu0 %v1243
    %1290 = vmatprep.subr.mxu0 0.0
    %1291 = vmatpush1.msra.mxu0 %v1242
    %1292 = vmatprep.subr.mxu0 0.0
    %1293 = vmatpush1.msra.mxu0 %v1241
    %1294 = vmatprep.subr.mxu0 0.0
    %1295 = vmatpush1.msra.mxu0 %v1240
    %1296 = vmatprep.subr.mxu0 0.0
    %1297 = vmatpush1.msra.mxu0 %v1239
    %1298 = vmatprep.subr.mxu0 0.0
    %1299 = vmatpush1.msra.mxu0 %v1238
    %1300 = vmatprep.subr.mxu0 0.0
    %1301 = vmatpush2.msra.mxu0 0.0
    %1302 = vmatprep.subr.mxu0 0.0
    %1303 = vmatpush2.msra.mxu0 0.0
    %1304 = vmatprep.subr.mxu0 0.0
    %1305 = vmatpush2.msra.mxu0 0.0
    %1306 = vmatprep.subr.mxu0 0.0
    %1307 = vmatpush2.msra.mxu0 0.0
    %1308 = vmatprep.subr.mxu0 0.0
    %1309 = vmatpush2.msra.mxu0 0.0
    %1310 = vmatprep.subr.mxu0 0.0
    %1311 = vmatpush2.msra.mxu0 0.0
    %1312 = vmatprep.subr.mxu0 0.0
    %1313 = vmatpush2.msra.mxu0 0.0
    %1314 = vmatprep.subr.mxu0 0.0
    %1315 = vmatpush2.msra.mxu0 0.0
    %1316 = vmatprep.subr.mxu0 0.0
    %1317 = vmatpush2.msra.mxu0 0.0
    %1318 = vmatprep.subr.mxu0 0.0
    %1319 = vmatpush2.msra.mxu0 0.0
    %1320 = vmatprep.subr.mxu0 0.0
    %1321 = vmatpush2.msra.mxu0 0.0
    %1322 = vmatprep.subr.mxu0 0.0
    %1323 = vmatpush2.msra.mxu0 0.0
    %1324 = vmatprep.subr.mxu0 0.0
    %1325 = vmatpush2.msra.mxu0 0.0
    %1326 = vmatprep.subr.mxu0 0.0
    %1327 = vmatpush2.msra.mxu0 0.0
    %1328 = vmatprep.subr.mxu0 0.0
    %1329 = vmatpush2.msra.mxu0 0.0
    %1330 = vmatprep.subr.mxu0 0.0
    %1331 = vmatpush2.msra.mxu0 0.0
    %1332 = vmatprep.mubr.f32.mxu0 0.0
    %1333 = vmatmul.mubr.f32.gmra.mxu0 %v1057
    %v1334 = vpop.f32.mrf.mxu0
    %v1335 = vadd.f32 %v485, %v1334
    %v1336 = vpop.f32.mrf.mxu0
    %1337 = vdwg.mxu0
    %v1338 = vmul.f32 %v1260, %v1335
    %v1339 = vadd.f32 %v1065, %v1338
    %v1340 = vtanh.pop %v1339
    %v1341 = vsub.f32 1.0, %v1267
    %v1342 = vmul.f32 %v1341, %v1340
    %v1343 = vmul.f32 %v1267, %v1057
    %v1344 = vadd.f32 %v1342, %v1343
    %s1345 = scalar_lea.vmem [#allocation3], 16
    %1346 = vst [vmem:[%s1345] sm:$0xff] %v1344
    %s1347 = smul.u32 3, 3
    %s1348 = smul.addr %s1347, 8
    %s1349 = scalar_lea.vmem [#allocation2], %s1348
    %v1350 = vld [vmem:[%s1349] sm:$0xff]
    %v1351 = vld [vmem:[%s1349 + $0x8] sm:$0xff]
    %v1352 = vld [vmem:[%s1349 + $0x10] sm:$0xff]
    %v1353 = vld [vmem:[#allocation12] sm:$0xff]
    %v1354 = vld [vmem:[#allocation12 + $0x18] sm:$0xff]
    %v1355 = vld [vmem:[#allocation12 + $0x30] sm:$0xff]
    %v1356 = vld [vmem:[#allocation12 + $0x48] sm:$0xff]
    %v1357 = vld [vmem:[#allocation12 + $0x60] sm:$0xff]
    %v1358 = vld [vmem:[#allocation12 + $0x78] sm:$0xff]
    %v1359 = vld [vmem:[#allocation12 + $0x90] sm:$0xff]
    %v1360 = vld [vmem:[#allocation12 + $0xa8] sm:$0xff]
    %v1361 = vld [vmem:[#allocation12 + $0xc0] sm:$0xff]
    %v1362 = vld [vmem:[#allocation12 + $0xd8] sm:$0xff]
    %v1363 = vld [vmem:[#allocation12 + $0xf0] sm:$0xff]
    %v1364 = vld [vmem:[#allocation12 + $0x108] sm:$0xff]
    %v1365 = vld [vmem:[#allocation12 + $0x120] sm:$0xff]
    %v1366 = vld [vmem:[#allocation12 + $0x138] sm:$0xff]
    %v1367 = vld [vmem:[#allocation12 + $0x150] sm:$0xff]
    %v1368 = vld [vmem:[#allocation12 + $0x168] sm:$0xff]
    %1369 = vmatprep.subr.mxu0 0.0
    %1370 = vmatpush1.msra.mxu0 %v1368
    %1371 = vmatprep.subr.mxu0 0.0
    %1372 = vmatpush1.msra.mxu0 %v1367
    %1373 = vmatprep.subr.mxu0 0.0
    %1374 = vmatpush1.msra.mxu0 %v1366
    %1375 = vmatprep.subr.mxu0 0.0
    %1376 = vmatpush1.msra.mxu0 %v1365
    %1377 = vmatprep.subr.mxu0 0.0
    %1378 = vmatpush1.msra.mxu0 %v1364
    %1379 = vmatprep.subr.mxu0 0.0
    %1380 = vmatpush1.msra.mxu0 %v1363
    %1381 = vmatprep.subr.mxu0 0.0
    %1382 = vmatpush1.msra.mxu0 %v1362
    %1383 = vmatprep.subr.mxu0 0.0
    %1384 = vmatpush1.msra.mxu0 %v1361
    %1385 = vmatprep.subr.mxu0 0.0
    %1386 = vmatpush1.msra.mxu0 %v1360
    %1387 = vmatprep.subr.mxu0 0.0
    %1388 = vmatpush1.msra.mxu0 %v1359
    %1389 = vmatprep.subr.mxu0 0.0
    %1390 = vmatpush1.msra.mxu0 %v1358
    %1391 = vmatprep.subr.mxu0 0.0
    %1392 = vmatpush1.msra.mxu0 %v1357
    %1393 = vmatprep.subr.mxu0 0.0
    %1394 = vmatpush1.msra.mxu0 %v1356
    %1395 = vmatprep.subr.mxu0 0.0
    %1396 = vmatpush1.msra.mxu0 %v1355
    %1397 = vmatprep.subr.mxu0 0.0
    %1398 = vmatpush1.msra.mxu0 %v1354
    %1399 = vmatprep.subr.mxu0 0.0
    %1400 = vmatpush1.msra.mxu0 %v1353
    %1401 = vmatprep.subr.mxu0 0.0
    %1402 = vmatpush2.msra.mxu0 0.0
    %1403 = vmatprep.subr.mxu0 0.0
    %1404 = vmatpush2.msra.mxu0 0.0
    %1405 = vmatprep.subr.mxu0 0.0
    %1406 = vmatpush2.msra.mxu0 0.0
    %1407 = vmatprep.subr.mxu0 0.0
    %1408 = vmatpush2.msra.mxu0 0.0
    %1409 = vmatprep.subr.mxu0 0.0
    %1410 = vmatpush2.msra.mxu0 0.0
    %1411 = vmatprep.subr.mxu0 0.0
    %1412 = vmatpush2.msra.mxu0 0.0
    %1413 = vmatprep.subr.mxu0 0.0
    %1414 = vmatpush2.msra.mxu0 0.0
    %1415 = vmatprep.subr.mxu0 0.0
    %1416 = vmatpush2.msra.mxu0 0.0
    %1417 = vmatprep.subr.mxu0 0.0
    %1418 = vmatpush2.msra.mxu0 0.0
    %1419 = vmatprep.subr.mxu0 0.0
    %1420 = vmatpush2.msra.mxu0 0.0
    %1421 = vmatprep.subr.mxu0 0.0
    %1422 = vmatpush2.msra.mxu0 0.0
    %1423 = vmatprep.subr.mxu0 0.0
    %1424 = vmatpush2.msra.mxu0 0.0
    %1425 = vmatprep.subr.mxu0 0.0
    %1426 = vmatpush2.msra.mxu0 0.0
    %1427 = vmatprep.subr.mxu0 0.0
    %1428 = vmatpush2.msra.mxu0 0.0
    %1429 = vmatprep.subr.mxu0 0.0
    %1430 = vmatpush2.msra.mxu0 0.0
    %1431 = vmatprep.subr.mxu0 0.0
    %1432 = vmatpush2.msra.mxu0 0.0
    %1433 = vmatprep.mubr.f32.mxu0 0.0
    %1434 = vmatmul.mubr.f32.gmra.mxu0 %v1344
    %v1435 = vpop.f32.mrf.mxu0
    %v1436 = vadd.f32 0.0, %v1435
    %v1437 = vpop.f32.mrf.mxu0
    %1438 = vdwg.mxu0
    %v1439 = vld [vmem:[#allocation12 + $0x8] sm:$0xff]
    %v1440 = vld [vmem:[#allocation12 + $0x20] sm:$0xff]
    %v1441 = vld [vmem:[#allocation12 + $0x38] sm:$0xff]
    %v1442 = vld [vmem:[#allocation12 + $0x50] sm:$0xff]
    %v1443 = vld [vmem:[#allocation12 + $0x68] sm:$0xff]
    %v1444 = vld [vmem:[#allocation12 + $0x80] sm:$0xff]
    %v1445 = vld [vmem:[#allocation12 + $0x98] sm:$0xff]
    %v1446 = vld [vmem:[#allocation12 + $0xb0] sm:$0xff]
    %v1447 = vld [vmem:[#allocation12 + $0xc8] sm:$0xff]
    %v1448 = vld [vmem:[#allocation12 + $0xe0] sm:$0xff]
    %v1449 = vld [vmem:[#allocation12 + $0xf8] sm:$0xff]
    %v1450 = vld [vmem:[#allocation12 + $0x110] sm:$0xff]
    %v1451 = vld [vmem:[#allocation12 + $0x128] sm:$0xff]
    %v1452 = vld [vmem:[#allocation12 + $0x140] sm:$0xff]
    %v1453 = vld [vmem:[#allocation12 + $0x158] sm:$0xff]
    %v1454 = vld [vmem:[#allocation12 + $0x170] sm:$0xff]
    %1455 = vmatprep.subr.mxu0 0.0
    %1456 = vmatpush1.msra.mxu0 %v1454
    %1457 = vmatprep.subr.mxu0 0.0
    %1458 = vmatpush1.msra.mxu0 %v1453
    %1459 = vmatprep.subr.mxu0 0.0
    %1460 = vmatpush1.msra.mxu0 %v1452
    %1461 = vmatprep.subr.mxu0 0.0
    %1462 = vmatpush1.msra.mxu0 %v1451
    %1463 = vmatprep.subr.mxu0 0.0
    %1464 = vmatpush1.msra.mxu0 %v1450
    %1465 = vmatprep.subr.mxu0 0.0
    %1466 = vmatpush1.msra.mxu0 %v1449
    %1467 = vmatprep.subr.mxu0 0.0
    %1468 = vmatpush1.msra.mxu0 %v1448
    %1469 = vmatprep.subr.mxu0 0.0
    %1470 = vmatpush1.msra.mxu0 %v1447
    %1471 = vmatprep.subr.mxu0 0.0
    %1472 = vmatpush1.msra.mxu0 %v1446
    %1473 = vmatprep.subr.mxu0 0.0
    %1474 = vmatpush1.msra.mxu0 %v1445
    %1475 = vmatprep.subr.mxu0 0.0
    %1476 = vmatpush1.msra.mxu0 %v1444
    %1477 = vmatprep.subr.mxu0 0.0
    %1478 = vmatpush1.msra.mxu0 %v1443
    %1479 = vmatprep.subr.mxu0 0.0
    %1480 = vmatpush1.msra.mxu0 %v1442
    %1481 = vmatprep.subr.mxu0 0.0
    %1482 = vmatpush1.msra.mxu0 %v1441
    %1483 = vmatprep.subr.mxu0 0.0
    %1484 = vmatpush1.msra.mxu0 %v1440
    %1485 = vmatprep.subr.mxu0 0.0
    %1486 = vmatpush1.msra.mxu0 %v1439
    %1487 = vmatprep.subr.mxu0 0.0
    %1488 = vmatpush2.msra.mxu0 0.0
    %1489 = vmatprep.subr.mxu0 0.0
    %1490 = vmatpush2.msra.mxu0 0.0
    %1491 = vmatprep.subr.mxu0 0.0
    %1492 = vmatpush2.msra.mxu0 0.0
    %1493 = vmatprep.subr.mxu0 0.0
    %1494 = vmatpush2.msra.mxu0 0.0
    %1495 = vmatprep.subr.mxu0 0.0
    %1496 = vmatpush2.msra.mxu0 0.0
    %1497 = vmatprep.subr.mxu0 0.0
    %1498 = vmatpush2.msra.mxu0 0.0
    %1499 = vmatprep.subr.mxu0 0.0
    %1500 = vmatpush2.msra.mxu0 0.0
    %1501 = vmatprep.subr.mxu0 0.0
    %1502 = vmatpush2.msra.mxu0 0.0
    %1503 = vmatprep.subr.mxu0 0.0
    %1504 = vmatpush2.msra.mxu0 0.0
    %1505 = vmatprep.subr.mxu0 0.0
    %1506 = vmatpush2.msra.mxu0 0.0
    %1507 = vmatprep.subr.mxu0 0.0
    %1508 = vmatpush2.msra.mxu0 0.0
    %1509 = vmatprep.subr.mxu0 0.0
    %1510 = vmatpush2.msra.mxu0 0.0
    %1511 = vmatprep.subr.mxu0 0.0
    %1512 = vmatpush2.msra.mxu0 0.0
    %1513 = vmatprep.subr.mxu0 0.0
    %1514 = vmatpush2.msra.mxu0 0.0
    %1515 = vmatprep.subr.mxu0 0.0
    %1516 = vmatpush2.msra.mxu0 0.0
    %1517 = vmatprep.subr.mxu0 0.0
    %1518 = vmatpush2.msra.mxu0 0.0
    %1519 = vmatprep.mubr.f32.mxu0 0.0
    %1520 = vmatmul.mubr.f32.gmra.mxu0 %v1344
    %v1521 = vpop.f32.mrf.mxu0
    %v1522 = vadd.f32 0.0, %v1521
    %v1523 = vpop.f32.mrf.mxu0
    %1524 = vdwg.mxu0
    %v1525 = vld [vmem:[#allocation12 + $0x10] sm:$0xff]
    %v1526 = vld [vmem:[#allocation12 + $0x28] sm:$0xff]
    %v1527 = vld [vmem:[#allocation12 + $0x40] sm:$0xff]
    %v1528 = vld [vmem:[#allocation12 + $0x58] sm:$0xff]
    %v1529 = vld [vmem:[#allocation12 + $0x70] sm:$0xff]
    %v1530 = vld [vmem:[#allocation12 + $0x88] sm:$0xff]
    %v1531 = vld [vmem:[#allocation12 + $0xa0] sm:$0xff]
    %v1532 = vld [vmem:[#allocation12 + $0xb8] sm:$0xff]
    %v1533 = vld [vmem:[#allocation12 + $0xd0] sm:$0xff]
    %v1534 = vld [vmem:[#allocation12 + $0xe8] sm:$0xff]
    %v1535 = vld [vmem:[#allocation12 + $0x100] sm:$0xff]
    %v1536 = vld [vmem:[#allocation12 + $0x118] sm:$0xff]
    %v1537 = vld [vmem:[#allocation12 + $0x130] sm:$0xff]
    %v1538 = vld [vmem:[#allocation12 + $0x148] sm:$0xff]
    %v1539 = vld [vmem:[#allocation12 + $0x160] sm:$0xff]
    %v1540 = vld [vmem:[#allocation12 + $0x178] sm:$0xff]
    %v1541 = vadd.f32 %v1350, %v1436
    %v1542 = vxor.u32 %v1541, 2147483648
    %v1543 = vmul.f32 %v1542, 1.442695
    %v1544 = vpow.pop %v1543
    %v1545 = vadd.f32 %v1544, 1.0
    %v1546 = vrcp.pop %v1545
    %v1547 = vmul.f32 1.0, %v1546
    %v1548 = vadd.f32 %v1351, %v1522
    %v1549 = vxor.u32 %v1548, 2147483648
    %v1550 = vmul.f32 %v1549, 1.442695
    %v1551 = vpow.pop %v1550
    %v1552 = vadd.f32 %v1551, 1.0
    %v1553 = vrcp.pop %v1552
    %v1554 = vmul.f32 1.0, %v1553
    %1555 = vmatprep.subr.mxu0 0.0
    %1556 = vmatpush1.msra.mxu0 %v1540
    %1557 = vmatprep.subr.mxu0 0.0
    %1558 = vmatpush1.msra.mxu0 %v1539
    %1559 = vmatprep.subr.mxu0 0.0
    %1560 = vmatpush1.msra.mxu0 %v1538
    %1561 = vmatprep.subr.mxu0 0.0
    %1562 = vmatpush1.msra.mxu0 %v1537
    %1563 = vmatprep.subr.mxu0 0.0
    %1564 = vmatpush1.msra.mxu0 %v1536
    %1565 = vmatprep.subr.mxu0 0.0
    %1566 = vmatpush1.msra.mxu0 %v1535
    %1567 = vmatprep.subr.mxu0 0.0
    %1568 = vmatpush1.msra.mxu0 %v1534
    %1569 = vmatprep.subr.mxu0 0.0
    %1570 = vmatpush1.msra.mxu0 %v1533
    %1571 = vmatprep.subr.mxu0 0.0
    %1572 = vmatpush1.msra.mxu0 %v1532
    %1573 = vmatprep.subr.mxu0 0.0
    %1574 = vmatpush1.msra.mxu0 %v1531
    %1575 = vmatprep.subr.mxu0 0.0
    %1576 = vmatpush1.msra.mxu0 %v1530
    %1577 = vmatprep.subr.mxu0 0.0
    %1578 = vmatpush1.msra.mxu0 %v1529
    %1579 = vmatprep.subr.mxu0 0.0
    %1580 = vmatpush1.msra.mxu0 %v1528
    %1581 = vmatprep.subr.mxu0 0.0
    %1582 = vmatpush1.msra.mxu0 %v1527
    %1583 = vmatprep.subr.mxu0 0.0
    %1584 = vmatpush1.msra.mxu0 %v1526
    %1585 = vmatprep.subr.mxu0 0.0
    %1586 = vmatpush1.msra.mxu0 %v1525
    %1587 = vmatprep.subr.mxu0 0.0
    %1588 = vmatpush2.msra.mxu0 0.0
    %1589 = vmatprep.subr.mxu0 0.0
    %1590 = vmatpush2.msra.mxu0 0.0
    %1591 = vmatprep.subr.mxu0 0.0
    %1592 = vmatpush2.msra.mxu0 0.0
    %1593 = vmatprep.subr.mxu0 0.0
    %1594 = vmatpush2.msra.mxu0 0.0
    %1595 = vmatprep.subr.mxu0 0.0
    %1596 = vmatpush2.msra.mxu0 0.0
    %1597 = vmatprep.subr.mxu0 0.0
    %1598 = vmatpush2.msra.mxu0 0.0
    %1599 = vmatprep.subr.mxu0 0.0
    %1600 = vmatpush2.msra.mxu0 0.0
    %1601 = vmatprep.subr.mxu0 0.0
    %1602 = vmatpush2.msra.mxu0 0.0
    %1603 = vmatprep.subr.mxu0 0.0
    %1604 = vmatpush2.msra.mxu0 0.0
    %1605 = vmatprep.subr.mxu0 0.0
    %1606 = vmatpush2.msra.mxu0 0.0
    %1607 = vmatprep.subr.mxu0 0.0
    %1608 = vmatpush2.msra.mxu0 0.0
    %1609 = vmatprep.subr.mxu0 0.0
    %1610 = vmatpush2.msra.mxu0 0.0
    %1611 = vmatprep.subr.mxu0 0.0
    %1612 = vmatpush2.msra.mxu0 0.0
    %1613 = vmatprep.subr.mxu0 0.0
    %1614 = vmatpush2.msra.mxu0 0.0
    %1615 = vmatprep.subr.mxu0 0.0
    %1616 = vmatpush2.msra.mxu0 0.0
    %1617 = vmatprep.subr.mxu0 0.0
    %1618 = vmatpush2.msra.mxu0 0.0
    %1619 = vmatprep.mubr.f32.mxu0 0.0
    %1620 = vmatmul.mubr.f32.gmra.mxu0 %v1344
    %v1621 = vpop.f32.mrf.mxu0
    %v1622 = vadd.f32 %v485, %v1621
    %v1623 = vpop.f32.mrf.mxu0
    %1624 = vdwg.mxu0
    %v1625 = vmul.f32 %v1547, %v1622
    %v1626 = vadd.f32 %v1352, %v1625
    %v1627 = vtanh.pop %v1626
    %v1628 = vsub.f32 1.0, %v1554
    %v1629 = vmul.f32 %v1628, %v1627
    %v1630 = vmul.f32 %v1554, %v1344
    %v1631 = vadd.f32 %v1629, %v1630
    %s1632 = scalar_lea.vmem [#allocation3], 24
    %1633 = vst [vmem:[%s1632] sm:$0xff] %v1631
    %s1634 = smul.u32 4, 3
    %s1635 = smul.addr %s1634, 8
    %s1636 = scalar_lea.vmem [#allocation2], %s1635
    %v1637 = vld [vmem:[%s1636] sm:$0xff]
    %v1638 = vld [vmem:[%s1636 + $0x8] sm:$0xff]
    %v1639 = vld [vmem:[%s1636 + $0x10] sm:$0xff]
    %v1640 = vld [vmem:[#allocation12] sm:$0xff]
    %v1641 = vld [vmem:[#allocation12 + $0x18] sm:$0xff]
    %v1642 = vld [vmem:[#allocation12 + $0x30] sm:$0xff]
    %v1643 = vld [vmem:[#allocation12 + $0x48] sm:$0xff]
    %v1644 = vld [vmem:[#allocation12 + $0x60] sm:$0xff]
    %v1645 = vld [vmem:[#allocation12 + $0x78] sm:$0xff]
    %v1646 = vld [vmem:[#allocation12 + $0x90] sm:$0xff]
    %v1647 = vld [vmem:[#allocation12 + $0xa8] sm:$0xff]
    %v1648 = vld [vmem:[#allocation12 + $0xc0] sm:$0xff]
    %v1649 = vld [vmem:[#allocation12 + $0xd8] sm:$0xff]
    %v1650 = vld [vmem:[#allocation12 + $0xf0] sm:$0xff]
    %v1651 = vld [vmem:[#allocation12 + $0x108] sm:$0xff]
    %v1652 = vld [vmem:[#allocation12 + $0x120] sm:$0xff]
    %v1653 = vld [vmem:[#allocation12 + $0x138] sm:$0xff]
    %v1654 = vld [vmem:[#allocation12 + $0x150] sm:$0xff]
    %v1655 = vld [vmem:[#allocation12 + $0x168] sm:$0xff]
    %1656 = vmatprep.subr.mxu0 0.0
    %1657 = vmatpush1.msra.mxu0 %v1655
    %1658 = vmatprep.subr.mxu0 0.0
    %1659 = vmatpush1.msra.mxu0 %v1654
    %1660 = vmatprep.subr.mxu0 0.0
    %1661 = vmatpush1.msra.mxu0 %v1653
    %1662 = vmatprep.subr.mxu0 0.0
    %1663 = vmatpush1.msra.mxu0 %v1652
    %1664 = vmatprep.subr.mxu0 0.0
    %1665 = vmatpush1.msra.mxu0 %v1651
    %1666 = vmatprep.subr.mxu0 0.0
    %1667 = vmatpush1.msra.mxu0 %v1650
    %1668 = vmatprep.subr.mxu0 0.0
    %1669 = vmatpush1.msra.mxu0 %v1649
    %1670 = vmatprep.subr.mxu0 0.0
    %1671 = vmatpush1.msra.mxu0 %v1648
    %1672 = vmatprep.subr.mxu0 0.0
    %1673 = vmatpush1.msra.mxu0 %v1647
    %1674 = vmatprep.subr.mxu0 0.0
    %1675 = vmatpush1.msra.mxu0 %v1646
    %1676 = vmatprep.subr.mxu0 0.0
    %1677 = vmatpush1.msra.mxu0 %v1645
    %1678 = vmatprep.subr.mxu0 0.0
    %1679 = vmatpush1.msra.mxu0 %v1644
    %1680 = vmatprep.subr.mxu0 0.0
    %1681 = vmatpush1.msra.mxu0 %v1643
    %1682 = vmatprep.subr.mxu0 0.0
    %1683 = vmatpush1.msra.mxu0 %v1642
    %1684 = vmatprep.subr.mxu0 0.0
    %1685 = vmatpush1.msra.mxu0 %v1641
    %1686 = vmatprep.subr.mxu0 0.0
    %1687 = vmatpush1.msra.mxu0 %v1640
    %1688 = vmatprep.subr.mxu0 0.0
    %1689 = vmatpush2.msra.mxu0 0.0
    %1690 = vmatprep.subr.mxu0 0.0
    %1691 = vmatpush2.msra.mxu0 0.0
    %1692 = vmatprep.subr.mxu0 0.0
    %1693 = vmatpush2.msra.mxu0 0.0
    %1694 = vmatprep.subr.mxu0 0.0
    %1695 = vmatpush2.msra.mxu0 0.0
    %1696 = vmatprep.subr.mxu0 0.0
    %1697 = vmatpush2.msra.mxu0 0.0
    %1698 = vmatprep.subr.mxu0 0.0
    %1699 = vmatpush2.msra.mxu0 0.0
    %1700 = vmatprep.subr.mxu0 0.0
    %1701 = vmatpush2.msra.mxu0 0.0
    %1702 = vmatprep.subr.mxu0 0.0
    %1703 = vmatpush2.msra.mxu0 0.0
    %1704 = vmatprep.subr.mxu0 0.0
    %1705 = vmatpush2.msra.mxu0 0.0
    %1706 = vmatprep.subr.mxu0 0.0
    %1707 = vmatpush2.msra.mxu0 0.0
    %1708 = vmatprep.subr.mxu0 0.0
    %1709 = vmatpush2.msra.mxu0 0.0
    %1710 = vmatprep.subr.mxu0 0.0
    %1711 = vmatpush2.msra.mxu0 0.0
    %1712 = vmatprep.subr.mxu0 0.0
    %1713 = vmatpush2.msra.mxu0 0.0
    %1714 = vmatprep.subr.mxu0 0.0
    %1715 = vmatpush2.msra.mxu0 0.0
    %1716 = vmatprep.subr.mxu0 0.0
    %1717 = vmatpush2.msra.mxu0 0.0
    %1718 = vmatprep.subr.mxu0 0.0
    %1719 = vmatpush2.msra.mxu0 0.0
    %1720 = vmatprep.mubr.f32.mxu0 0.0
    %1721 = vmatmul.mubr.f32.gmra.mxu0 %v1631
    %v1722 = vpop.f32.mrf.mxu0
    %v1723 = vadd.f32 0.0, %v1722
    %v1724 = vpop.f32.mrf.mxu0
    %1725 = vdwg.mxu0
    %v1726 = vld [vmem:[#allocation12 + $0x8] sm:$0xff]
    %v1727 = vld [vmem:[#allocation12 + $0x20] sm:$0xff]
    %v1728 = vld [vmem:[#allocation12 + $0x38] sm:$0xff]
    %v1729 = vld [vmem:[#allocation12 + $0x50] sm:$0xff]
    %v1730 = vld [vmem:[#allocation12 + $0x68] sm:$0xff]
    %v1731 = vld [vmem:[#allocation12 + $0x80] sm:$0xff]
    %v1732 = vld [vmem:[#allocation12 + $0x98] sm:$0xff]
    %v1733 = vld [vmem:[#allocation12 + $0xb0] sm:$0xff]
    %v1734 = vld [vmem:[#allocation12 + $0xc8] sm:$0xff]
    %v1735 = vld [vmem:[#allocation12 + $0xe0] sm:$0xff]
    %v1736 = vld [vmem:[#allocation12 + $0xf8] sm:$0xff]
    %v1737 = vld [vmem:[#allocation12 + $0x110] sm:$0xff]
    %v1738 = vld [vmem:[#allocation12 + $0x128] sm:$0xff]
    %v1739 = vld [vmem:[#allocation12 + $0x140] sm:$0xff]
    %v1740 = vld [vmem:[#allocation12 + $0x158] sm:$0xff]
    %v1741 = vld [vmem:[#allocation12 + $0x170] sm:$0xff]
    %1742 = vmatprep.subr.mxu0 0.0
    %1743 = vmatpush1.msra.mxu0 %v1741
    %1744 = vmatprep.subr.mxu0 0.0
    %1745 = vmatpush1.msra.mxu0 %v1740
    %1746 = vmatprep.subr.mxu0 0.0
    %1747 = vmatpush1.msra.mxu0 %v1739
    %1748 = vmatprep.subr.mxu0 0.0
    %1749 = vmatpush1.msra.mxu0 %v1738
    %1750 = vmatprep.subr.mxu0 0.0
    %1751 = vmatpush1.msra.mxu0 %v1737
    %1752 = vmatprep.subr.mxu0 0.0
    %1753 = vmatpush1.msra.mxu0 %v1736
    %1754 = vmatprep.subr.mxu0 0.0
    %1755 = vmatpush1.msra.mxu0 %v1735
    %1756 = vmatprep.subr.mxu0 0.0
    %1757 = vmatpush1.msra.mxu0 %v1734
    %1758 = vmatprep.subr.mxu0 0.0
    %1759 = vmatpush1.msra.mxu0 %v1733
    %1760 = vmatprep.subr.mxu0 0.0
    %1761 = vmatpush1.msra.mxu0 %v1732
    %1762 = vmatprep.subr.mxu0 0.0
    %1763 = vmatpush1.msra.mxu0 %v1731
    %1764 = vmatprep.subr.mxu0 0.0
    %1765 = vmatpush1.msra.mxu0 %v1730
    %1766 = vmatprep.subr.mxu0 0.0
    %1767 = vmatpush1.msra.mxu0 %v1729
    %1768 = vmatprep.subr.mxu0 0.0
    %1769 = vmatpush1.msra.mxu0 %v1728
    %1770 = vmatprep.subr.mxu0 0.0
    %1771 = vmatpush1.msra.mxu0 %v1727
    %1772 = vmatprep.subr.mxu0 0.0
    %1773 = vmatpush1.msra.mxu0 %v1726
    %1774 = vmatprep.subr.mxu0 0.0
    %1775 = vmatpush2.msra.mxu0 0.0
    %1776 = vmatprep.subr.mxu0 0.0
    %1777 = vmatpush2.msra.mxu0 0.0
    %1778 = vmatprep.subr.mxu0 0.0
    %1779 = vmatpush2.msra.mxu0 0.0
    %1780 = vmatprep.subr.mxu0 0.0
    %1781 = vmatpush2.msra.mxu0 0.0
    %1782 = vmatprep.subr.mxu0 0.0
    %1783 = vmatpush2.msra.mxu0 0.0
    %1784 = vmatprep.subr.mxu0 0.0
    %1785 = vmatpush2.msra.mxu0 0.0
    %1786 = vmatprep.subr.mxu0 0.0
    %1787 = vmatpush2.msra.mxu0 0.0
    %1788 = vmatprep.subr.mxu0 0.0
    %1789 = vmatpush2.msra.mxu0 0.0
    %1790 = vmatprep.subr.mxu0 0.0
    %1791 = vmatpush2.msra.mxu0 0.0
    %1792 = vmatprep.subr.mxu0 0.0
    %1793 = vmatpush2.msra.mxu0 0.0
    %1794 = vmatprep.subr.mxu0 0.0
    %1795 = vmatpush2.msra.mxu0 0.0
    %1796 = vmatprep.subr.mxu0 0.0
    %1797 = vmatpush2.msra.mxu0 0.0
    %1798 = vmatprep.subr.mxu0 0.0
    %1799 = vmatpush2.msra.mxu0 0.0
    %1800 = vmatprep.subr.mxu0 0.0
    %1801 = vmatpush2.msra.mxu0 0.0
    %1802 = vmatprep.subr.mxu0 0.0
    %1803 = vmatpush2.msra.mxu0 0.0
    %1804 = vmatprep.subr.mxu0 0.0
    %1805 = vmatpush2.msra.mxu0 0.0
    %1806 = vmatprep.mubr.f32.mxu0 0.0
    %1807 = vmatmul.mubr.f32.gmra.mxu0 %v1631
    %v1808 = vpop.f32.mrf.mxu0
    %v1809 = vadd.f32 0.0, %v1808
    %v1810 = vpop.f32.mrf.mxu0
    %1811 = vdwg.mxu0
    %v1812 = vld [vmem:[#allocation12 + $0x10] sm:$0xff]
    %v1813 = vld [vmem:[#allocation12 + $0x28] sm:$0xff]
    %v1814 = vld [vmem:[#allocation12 + $0x40] sm:$0xff]
    %v1815 = vld [vmem:[#allocation12 + $0x58] sm:$0xff]
    %v1816 = vld [vmem:[#allocation12 + $0x70] sm:$0xff]
    %v1817 = vld [vmem:[#allocation12 + $0x88] sm:$0xff]
    %v1818 = vld [vmem:[#allocation12 + $0xa0] sm:$0xff]
    %v1819 = vld [vmem:[#allocation12 + $0xb8] sm:$0xff]
    %v1820 = vld [vmem:[#allocation12 + $0xd0] sm:$0xff]
    %v1821 = vld [vmem:[#allocation12 + $0xe8] sm:$0xff]
    %v1822 = vld [vmem:[#allocation12 + $0x100] sm:$0xff]
    %v1823 = vld [vmem:[#allocation12 + $0x118] sm:$0xff]
    %v1824 = vld [vmem:[#allocation12 + $0x130] sm:$0xff]
    %v1825 = vld [vmem:[#allocation12 + $0x148] sm:$0xff]
    %v1826 = vld [vmem:[#allocation12 + $0x160] sm:$0xff]
    %v1827 = vld [vmem:[#allocation12 + $0x178] sm:$0xff]
    %v1828 = vadd.f32 %v1637, %v1723
    %v1829 = vxor.u32 %v1828, 2147483648
    %v1830 = vmul.f32 %v1829, 1.442695
    %v1831 = vpow.pop %v1830
    %v1832 = vadd.f32 %v1831, 1.0
    %v1833 = vrcp.pop %v1832
    %v1834 = vmul.f32 1.0, %v1833
    %v1835 = vadd.f32 %v1638, %v1809
    %v1836 = vxor.u32 %v1835, 2147483648
    %v1837 = vmul.f32 %v1836, 1.442695
    %v1838 = vpow.pop %v1837
    %v1839 = vadd.f32 %v1838, 1.0
    %v1840 = vrcp.pop %v1839
    %v1841 = vmul.f32 1.0, %v1840
    %1842 = vmatprep.subr.mxu0 0.0
    %1843 = vmatpush1.msra.mxu0 %v1827
    %1844 = vmatprep.subr.mxu0 0.0
    %1845 = vmatpush1.msra.mxu0 %v1826
    %1846 = vmatprep.subr.mxu0 0.0
    %1847 = vmatpush1.msra.mxu0 %v1825
    %1848 = vmatprep.subr.mxu0 0.0
    %1849 = vmatpush1.msra.mxu0 %v1824
    %1850 = vmatprep.subr.mxu0 0.0
    %1851 = vmatpush1.msra.mxu0 %v1823
    %1852 = vmatprep.subr.mxu0 0.0
    %1853 = vmatpush1.msra.mxu0 %v1822
    %1854 = vmatprep.subr.mxu0 0.0
    %1855 = vmatpush1.msra.mxu0 %v1821
    %1856 = vmatprep.subr.mxu0 0.0
    %1857 = vmatpush1.msra.mxu0 %v1820
    %1858 = vmatprep.subr.mxu0 0.0
    %1859 = vmatpush1.msra.mxu0 %v1819
    %1860 = vmatprep.subr.mxu0 0.0
    %1861 = vmatpush1.msra.mxu0 %v1818
    %1862 = vmatprep.subr.mxu0 0.0
    %1863 = vmatpush1.msra.mxu0 %v1817
    %1864 = vmatprep.subr.mxu0 0.0
    %1865 = vmatpush1.msra.mxu0 %v1816
    %1866 = vmatprep.subr.mxu0 0.0
    %1867 = vmatpush1.msra.mxu0 %v1815
    %1868 = vmatprep.subr.mxu0 0.0
    %1869 = vmatpush1.msra.mxu0 %v1814
    %1870 = vmatprep.subr.mxu0 0.0
    %1871 = vmatpush1.msra.mxu0 %v1813
    %1872 = vmatprep.subr.mxu0 0.0
    %1873 = vmatpush1.msra.mxu0 %v1812
    %1874 = vmatprep.subr.mxu0 0.0
    %1875 = vmatpush2.msra.mxu0 0.0
    %1876 = vmatprep.subr.mxu0 0.0
    %1877 = vmatpush2.msra.mxu0 0.0
    %1878 = vmatprep.subr.mxu0 0.0
    %1879 = vmatpush2.msra.mxu0 0.0
    %1880 = vmatprep.subr.mxu0 0.0
    %1881 = vmatpush2.msra.mxu0 0.0
    %1882 = vmatprep.subr.mxu0 0.0
    %1883 = vmatpush2.msra.mxu0 0.0
    %1884 = vmatprep.subr.mxu0 0.0
    %1885 = vmatpush2.msra.mxu0 0.0
    %1886 = vmatprep.subr.mxu0 0.0
    %1887 = vmatpush2.msra.mxu0 0.0
    %1888 = vmatprep.subr.mxu0 0.0
    %1889 = vmatpush2.msra.mxu0 0.0
    %1890 = vmatprep.subr.mxu0 0.0
    %1891 = vmatpush2.msra.mxu0 0.0
    %1892 = vmatprep.subr.mxu0 0.0
    %1893 = vmatpush2.msra.mxu0 0.0
    %1894 = vmatprep.subr.mxu0 0.0
    %1895 = vmatpush2.msra.mxu0 0.0
    %1896 = vmatprep.subr.mxu0 0.0
    %1897 = vmatpush2.msra.mxu0 0.0
    %1898 = vmatprep.subr.mxu0 0.0
    %1899 = vmatpush2.msra.mxu0 0.0
    %1900 = vmatprep.subr.mxu0 0.0
    %1901 = vmatpush2.msra.mxu0 0.0
    %1902 = vmatprep.subr.mxu0 0.0
    %1903 = vmatpush2.msra.mxu0 0.0
    %1904 = vmatprep.subr.mxu0 0.0
    %1905 = vmatpush2.msra.mxu0 0.0
    %1906 = vmatprep.mubr.f32.mxu0 0.0
    %1907 = vmatmul.mubr.f32.gmra.mxu0 %v1631
    %v1908 = vpop.f32.mrf.mxu0
    %v1909 = vadd.f32 %v485, %v1908
    %v1910 = vpop.f32.mrf.mxu0
    %1911 = vdwg.mxu0
    %v1912 = vmul.f32 %v1834, %v1909
    %v1913 = vadd.f32 %v1639, %v1912
    %v1914 = vtanh.pop %v1913
    %v1915 = vsub.f32 1.0, %v1841
    %v1916 = vmul.f32 %v1915, %v1914
    %v1917 = vmul.f32 %v1841, %v1631
    %v1918 = vadd.f32 %v1916, %v1917
    %s1919 = scalar_lea.vmem [#allocation3], 32
    %1920 = vst [vmem:[%s1919] sm:$0xff] %v1918
    %s1921 = smul.u32 5, 3
    %s1922 = smul.addr %s1921, 8
    %s1923 = scalar_lea.vmem [#allocation2], %s1922
    %v1924 = vld [vmem:[%s1923] sm:$0xff]
    %v1925 = vld [vmem:[%s1923 + $0x8] sm:$0xff]
    %v1926 = vld [vmem:[%s1923 + $0x10] sm:$0xff]
    %v1927 = vld [vmem:[#allocation12] sm:$0xff]
    %v1928 = vld [vmem:[#allocation12 + $0x18] sm:$0xff]
    %v1929 = vld [vmem:[#allocation12 + $0x30] sm:$0xff]
    %v1930 = vld [vmem:[#allocation12 + $0x48] sm:$0xff]
    %v1931 = vld [vmem:[#allocation12 + $0x60] sm:$0xff]
    %v1932 = vld [vmem:[#allocation12 + $0x78] sm:$0xff]
    %v1933 = vld [vmem:[#allocation12 + $0x90] sm:$0xff]
    %v1934 = vld [vmem:[#allocation12 + $0xa8] sm:$0xff]
    %v1935 = vld [vmem:[#allocation12 + $0xc0] sm:$0xff]
    %v1936 = vld [vmem:[#allocation12 + $0xd8] sm:$0xff]
    %v1937 = vld [vmem:[#allocation12 + $0xf0] sm:$0xff]
    %v1938 = vld [vmem:[#allocation12 + $0x108] sm:$0xff]
    %v1939 = vld [vmem:[#allocation12 + $0x120] sm:$0xff]
    %v1940 = vld [vmem:[#allocation12 + $0x138] sm:$0xff]
    %v1941 = vld [vmem:[#allocation12 + $0x150] sm:$0xff]
    %v1942 = vld [vmem:[#allocation12 + $0x168] sm:$0xff]
    %1943 = vmatprep.subr.mxu0 0.0
    %1944 = vmatpush1.msra.mxu0 %v1942
    %1945 = vmatprep.subr.mxu0 0.0
    %1946 = vmatpush1.msra.mxu0 %v1941
    %1947 = vmatprep.subr.mxu0 0.0
    %1948 = vmatpush1.msra.mxu0 %v1940
    %1949 = vmatprep.subr.mxu0 0.0
    %1950 = vmatpush1.msra.mxu0 %v1939
    %1951 = vmatprep.subr.mxu0 0.0
    %1952 = vmatpush1.msra.mxu0 %v1938
    %1953 = vmatprep.subr.mxu0 0.0
    %1954 = vmatpush1.msra.mxu0 %v1937
    %1955 = vmatprep.subr.mxu0 0.0
    %1956 = vmatpush1.msra.mxu0 %v1936
    %1957 = vmatprep.subr.mxu0 0.0
    %1958 = vmatpush1.msra.mxu0 %v1935
    %1959 = vmatprep.subr.mxu0 0.0
    %1960 = vmatpush1.msra.mxu0 %v1934
    %1961 = vmatprep.subr.mxu0 0.0
    %1962 = vmatpush1.msra.mxu0 %v1933
    %1963 = vmatprep.subr.mxu0 0.0
    %1964 = vmatpush1.msra.mxu0 %v1932
    %1965 = vmatprep.subr.mxu0 0.0
    %1966 = vmatpush1.msra.mxu0 %v1931
    %1967 = vmatprep.subr.mxu0 0.0
    %1968 = vmatpush1.msra.mxu0 %v1930
    %1969 = vmatprep.subr.mxu0 0.0
    %1970 = vmatpush1.msra.mxu0 %v1929
    %1971 = vmatprep.subr.mxu0 0.0
    %1972 = vmatpush1.msra.mxu0 %v1928
    %1973 = vmatprep.subr.mxu0 0.0
    %1974 = vmatpush1.msra.mxu0 %v1927
    %1975 = vmatprep.subr.mxu0 0.0
    %1976 = vmatpush2.msra.mxu0 0.0
    %1977 = vmatprep.subr.mxu0 0.0
    %1978 = vmatpush2.msra.mxu0 0.0
    %1979 = vmatprep.subr.mxu0 0.0
    %1980 = vmatpush2.msra.mxu0 0.0
    %1981 = vmatprep.subr.mxu0 0.0
    %1982 = vmatpush2.msra.mxu0 0.0
    %1983 = vmatprep.subr.mxu0 0.0
    %1984 = vmatpush2.msra.mxu0 0.0
    %1985 = vmatprep.subr.mxu0 0.0
    %1986 = vmatpush2.msra.mxu0 0.0
    %1987 = vmatprep.subr.mxu0 0.0
    %1988 = vmatpush2.msra.mxu0 0.0
    %1989 = vmatprep.subr.mxu0 0.0
    %1990 = vmatpush2.msra.mxu0 0.0
    %1991 = vmatprep.subr.mxu0 0.0
    %1992 = vmatpush2.msra.mxu0 0.0
    %1993 = vmatprep.subr.mxu0 0.0
    %1994 = vmatpush2.msra.mxu0 0.0
    %1995 = vmatprep.subr.mxu0 0.0
    %1996 = vmatpush2.msra.mxu0 0.0
    %1997 = vmatprep.subr.mxu0 0.0
    %1998 = vmatpush2.msra.mxu0 0.0
    %1999 = vmatprep.subr.mxu0 0.0
    %2000 = vmatpush2.msra.mxu0 0.0
    %2001 = vmatprep.subr.mxu0 0.0
    %2002 = vmatpush2.msra.mxu0 0.0
    %2003 = vmatprep.subr.mxu0 0.0
    %2004 = vmatpush2.msra.mxu0 0.0
    %2005 = vmatprep.subr.mxu0 0.0
    %2006 = vmatpush2.msra.mxu0 0.0
    %2007 = vmatprep.mubr.f32.mxu0 0.0
    %2008 = vmatmul.mubr.f32.gmra.mxu0 %v1918
    %v2009 = vpop.f32.mrf.mxu0
    %v2010 = vadd.f32 0.0, %v2009
    %v2011 = vpop.f32.mrf.mxu0
    %2012 = vdwg.mxu0
    %v2013 = vld [vmem:[#allocation12 + $0x8] sm:$0xff]
    %v2014 = vld [vmem:[#allocation12 + $0x20] sm:$0xff]
    %v2015 = vld [vmem:[#allocation12 + $0x38] sm:$0xff]
    %v2016 = vld [vmem:[#allocation12 + $0x50] sm:$0xff]
    %v2017 = vld [vmem:[#allocation12 + $0x68] sm:$0xff]
    %v2018 = vld [vmem:[#allocation12 + $0x80] sm:$0xff]
    %v2019 = vld [vmem:[#allocation12 + $0x98] sm:$0xff]
    %v2020 = vld [vmem:[#allocation12 + $0xb0] sm:$0xff]
    %v2021 = vld [vmem:[#allocation12 + $0xc8] sm:$0xff]
    %v2022 = vld [vmem:[#allocation12 + $0xe0] sm:$0xff]
    %v2023 = vld [vmem:[#allocation12 + $0xf8] sm:$0xff]
    %v2024 = vld [vmem:[#allocation12 + $0x110] sm:$0xff]
    %v2025 = vld [vmem:[#allocation12 + $0x128] sm:$0xff]
    %v2026 = vld [vmem:[#allocation12 + $0x140] sm:$0xff]
    %v2027 = vld [vmem:[#allocation12 + $0x158] sm:$0xff]
    %v2028 = vld [vmem:[#allocation12 + $0x170] sm:$0xff]
    %2029 = vmatprep.subr.mxu0 0.0
    %2030 = vmatpush1.msra.mxu0 %v2028
    %2031 = vmatprep.subr.mxu0 0.0
    %2032 = vmatpush1.msra.mxu0 %v2027
    %2033 = vmatprep.subr.mxu0 0.0
    %2034 = vmatpush1.msra.mxu0 %v2026
    %2035 = vmatprep.subr.mxu0 0.0
    %2036 = vmatpush1.msra.mxu0 %v2025
    %2037 = vmatprep.subr.mxu0 0.0
    %2038 = vmatpush1.msra.mxu0 %v2024
    %2039 = vmatprep.subr.mxu0 0.0
    %2040 = vmatpush1.msra.mxu0 %v2023
    %2041 = vmatprep.subr.mxu0 0.0
    %2042 = vmatpush1.msra.mxu0 %v2022
    %2043 = vmatprep.subr.mxu0 0.0
    %2044 = vmatpush1.msra.mxu0 %v2021
    %2045 = vmatprep.subr.mxu0 0.0
    %2046 = vmatpush1.msra.mxu0 %v2020
    %2047 = vmatprep.subr.mxu0 0.0
    %2048 = vmatpush1.msra.mxu0 %v2019
    %2049 = vmatprep.subr.mxu0 0.0
    %2050 = vmatpush1.msra.mxu0 %v2018
    %2051 = vmatprep.subr.mxu0 0.0
    %2052 = vmatpush1.msra.mxu0 %v2017
    %2053 = vmatprep.subr.mxu0 0.0
    %2054 = vmatpush1.msra.mxu0 %v2016
    %2055 = vmatprep.subr.mxu0 0.0
    %2056 = vmatpush1.msra.mxu0 %v2015
    %2057 = vmatprep.subr.mxu0 0.0
    %2058 = vmatpush1.msra.mxu0 %v2014
    %2059 = vmatprep.subr.mxu0 0.0
    %2060 = vmatpush1.msra.mxu0 %v2013
    %2061 = vmatprep.subr.mxu0 0.0
    %2062 = vmatpush2.msra.mxu0 0.0
    %2063 = vmatprep.subr.mxu0 0.0
    %2064 = vmatpush2.msra.mxu0 0.0
    %2065 = vmatprep.subr.mxu0 0.0
    %2066 = vmatpush2.msra.mxu0 0.0
    %2067 = vmatprep.subr.mxu0 0.0
    %2068 = vmatpush2.msra.mxu0 0.0
    %2069 = vmatprep.subr.mxu0 0.0
    %2070 = vmatpush2.msra.mxu0 0.0
    %2071 = vmatprep.subr.mxu0 0.0
    %2072 = vmatpush2.msra.mxu0 0.0
    %2073 = vmatprep.subr.mxu0 0.0
    %2074 = vmatpush2.msra.mxu0 0.0
    %2075 = vmatprep.subr.mxu0 0.0
    %2076 = vmatpush2.msra.mxu0 0.0
    %2077 = vmatprep.subr.mxu0 0.0
    %2078 = vmatpush2.msra.mxu0 0.0
    %2079 = vmatprep.subr.mxu0 0.0
    %2080 = vmatpush2.msra.mxu0 0.0
    %2081 = vmatprep.subr.mxu0 0.0
    %2082 = vmatpush2.msra.mxu0 0.0
    %2083 = vmatprep.subr.mxu0 0.0
    %2084 = vmatpush2.msra.mxu0 0.0
    %2085 = vmatprep.subr.mxu0 0.0
    %2086 = vmatpush2.msra.mxu0 0.0
    %2087 = vmatprep.subr.mxu0 0.0
    %2088 = vmatpush2.msra.mxu0 0.0
    %2089 = vmatprep.subr.mxu0 0.0
    %2090 = vmatpush2.msra.mxu0 0.0
    %2091 = vmatprep.subr.mxu0 0.0
    %2092 = vmatpush2.msra.mxu0 0.0
    %2093 = vmatprep.mubr.f32.mxu0 0.0
    %2094 = vmatmul.mubr.f32.gmra.mxu0 %v1918
    %v2095 = vpop.f32.mrf.mxu0
    %v2096 = vadd.f32 0.0, %v2095
    %v2097 = vpop.f32.mrf.mxu0
    %2098 = vdwg.mxu0
    %v2099 = vld [vmem:[#allocation12 + $0x10] sm:$0xff]
    %v2100 = vld [vmem:[#allocation12 + $0x28] sm:$0xff]
    %v2101 = vld [vmem:[#allocation12 + $0x40] sm:$0xff]
    %v2102 = vld [vmem:[#allocation12 + $0x58] sm:$0xff]
    %v2103 = vld [vmem:[#allocation12 + $0x70] sm:$0xff]
    %v2104 = vld [vmem:[#allocation12 + $0x88] sm:$0xff]
    %v2105 = vld [vmem:[#allocation12 + $0xa0] sm:$0xff]
    %v2106 = vld [vmem:[#allocation12 + $0xb8] sm:$0xff]
    %v2107 = vld [vmem:[#allocation12 + $0xd0] sm:$0xff]
    %v2108 = vld [vmem:[#allocation12 + $0xe8] sm:$0xff]
    %v2109 = vld [vmem:[#allocation12 + $0x100] sm:$0xff]
    %v2110 = vld [vmem:[#allocation12 + $0x118] sm:$0xff]
    %v2111 = vld [vmem:[#allocation12 + $0x130] sm:$0xff]
    %v2112 = vld [vmem:[#allocation12 + $0x148] sm:$0xff]
    %v2113 = vld [vmem:[#allocation12 + $0x160] sm:$0xff]
    %v2114 = vld [vmem:[#allocation12 + $0x178] sm:$0xff]
    %v2115 = vadd.f32 %v1924, %v2010
    %v2116 = vxor.u32 %v2115, 2147483648
    %v2117 = vmul.f32 %v2116, 1.442695
    %v2118 = vpow.pop %v2117
    %v2119 = vadd.f32 %v2118, 1.0
    %v2120 = vrcp.pop %v2119
    %v2121 = vmul.f32 1.0, %v2120
    %v2122 = vadd.f32 %v1925, %v2096
    %v2123 = vxor.u32 %v2122, 2147483648
    %v2124 = vmul.f32 %v2123, 1.442695
    %v2125 = vpow.pop %v2124
    %v2126 = vadd.f32 %v2125, 1.0
    %v2127 = vrcp.pop %v2126
    %v2128 = vmul.f32 1.0, %v2127
    %2129 = vmatprep.subr.mxu0 0.0
    %2130 = vmatpush1.msra.mxu0 %v2114
    %2131 = vmatprep.subr.mxu0 0.0
    %2132 = vmatpush1.msra.mxu0 %v2113
    %2133 = vmatprep.subr.mxu0 0.0
    %2134 = vmatpush1.msra.mxu0 %v2112
    %2135 = vmatprep.subr.mxu0 0.0
    %2136 = vmatpush1.msra.mxu0 %v2111
    %2137 = vmatprep.subr.mxu0 0.0
    %2138 = vmatpush1.msra.mxu0 %v2110
    %2139 = vmatprep.subr.mxu0 0.0
    %2140 = vmatpush1.msra.mxu0 %v2109
    %2141 = vmatprep.subr.mxu0 0.0
    %2142 = vmatpush1.msra.mxu0 %v2108
    %2143 = vmatprep.subr.mxu0 0.0
    %2144 = vmatpush1.msra.mxu0 %v2107
    %2145 = vmatprep.subr.mxu0 0.0
    %2146 = vmatpush1.msra.mxu0 %v2106
    %2147 = vmatprep.subr.mxu0 0.0
    %2148 = vmatpush1.msra.mxu0 %v2105
    %2149 = vmatprep.subr.mxu0 0.0
    %2150 = vmatpush1.msra.mxu0 %v2104
    %2151 = vmatprep.subr.mxu0 0.0
    %2152 = vmatpush1.msra.mxu0 %v2103
    %2153 = vmatprep.subr.mxu0 0.0
    %2154 = vmatpush1.msra.mxu0 %v2102
    %2155 = vmatprep.subr.mxu0 0.0
    %2156 = vmatpush1.msra.mxu0 %v2101
    %2157 = vmatprep.subr.mxu0 0.0
    %2158 = vmatpush1.msra.mxu0 %v2100
    %2159 = vmatprep.subr.mxu0 0.0
    %2160 = vmatpush1.msra.mxu0 %v2099
    %2161 = vmatprep.subr.mxu0 0.0
    %2162 = vmatpush2.msra.mxu0 0.0
    %2163 = vmatprep.subr.mxu0 0.0
    %2164 = vmatpush2.msra.mxu0 0.0
    %2165 = vmatprep.subr.mxu0 0.0
    %2166 = vmatpush2.msra.mxu0 0.0
    %2167 = vmatprep.subr.mxu0 0.0
    %2168 = vmatpush2.msra.mxu0 0.0
    %2169 = vmatprep.subr.mxu0 0.0
    %2170 = vmatpush2.msra.mxu0 0.0
    %2171 = vmatprep.subr.mxu0 0.0
    %2172 = vmatpush2.msra.mxu0 0.0
    %2173 = vmatprep.subr.mxu0 0.0
    %2174 = vmatpush2.msra.mxu0 0.0
    %2175 = vmatprep.subr.mxu0 0.0
    %2176 = vmatpush2.msra.mxu0 0.0
    %2177 = vmatprep.subr.mxu0 0.0
    %2178 = vmatpush2.msra.mxu0 0.0
    %2179 = vmatprep.subr.mxu0 0.0
    %2180 = vmatpush2.msra.mxu0 0.0
    %2181 = vmatprep.subr.mxu0 0.0
    %2182 = vmatpush2.msra.mxu0 0.0
    %2183 = vmatprep.subr.mxu0 0.0
    %2184 = vmatpush2.msra.mxu0 0.0
    %2185 = vmatprep.subr.mxu0 0.0
    %2186 = vmatpush2.msra.mxu0 0.0
    %2187 = vmatprep.subr.mxu0 0.0
    %2188 = vmatpush2.msra.mxu0 0.0
    %2189 = vmatprep.subr.mxu0 0.0
    %2190 = vmatpush2.msra.mxu0 0.0
    %2191 = vmatprep.subr.mxu0 0.0
    %2192 = vmatpush2.msra.mxu0 0.0
    %2193 = vmatprep.mubr.f32.mxu0 0.0
    %2194 = vmatmul.mubr.f32.gmra.mxu0 %v1918
    %v2195 = vpop.f32.mrf.mxu0
    %v2196 = vadd.f32 %v485, %v2195
    %v2197 = vpop.f32.mrf.mxu0
    %2198 = vdwg.mxu0
    %v2199 = vmul.f32 %v2121, %v2196
    %v2200 = vadd.f32 %v1926, %v2199
    %v2201 = vtanh.pop %v2200
    %v2202 = vsub.f32 1.0, %v2128
    %v2203 = vmul.f32 %v2202, %v2201
    %v2204 = vmul.f32 %v2128, %v1918
    %v2205 = vadd.f32 %v2203, %v2204
    %s2206 = scalar_lea.vmem [#allocation3], 40
    %2207 = vst [vmem:[%s2206] sm:$0xff] %v2205
    %s2208 = smul.u32 6, 3
    %s2209 = smul.addr %s2208, 8
    %s2210 = scalar_lea.vmem [#allocation2], %s2209
    %v2211 = vld [vmem:[%s2210] sm:$0xff]
    %v2212 = vld [vmem:[%s2210 + $0x8] sm:$0xff]
    %v2213 = vld [vmem:[%s2210 + $0x10] sm:$0xff]
    %v2214 = vld [vmem:[#allocation12] sm:$0xff]
    %v2215 = vld [vmem:[#allocation12 + $0x18] sm:$0xff]
    %v2216 = vld [vmem:[#allocation12 + $0x30] sm:$0xff]
    %v2217 = vld [vmem:[#allocation12 + $0x48] sm:$0xff]
    %v2218 = vld [vmem:[#allocation12 + $0x60] sm:$0xff]
    %v2219 = vld [vmem:[#allocation12 + $0x78] sm:$0xff]
    %v2220 = vld [vmem:[#allocation12 + $0x90] sm:$0xff]
    %v2221 = vld [vmem:[#allocation12 + $0xa8] sm:$0xff]
    %v2222 = vld [vmem:[#allocation12 + $0xc0] sm:$0xff]
    %v2223 = vld [vmem:[#allocation12 + $0xd8] sm:$0xff]
    %v2224 = vld [vmem:[#allocation12 + $0xf0] sm:$0xff]
    %v2225 = vld [vmem:[#allocation12 + $0x108] sm:$0xff]
    %v2226 = vld [vmem:[#allocation12 + $0x120] sm:$0xff]
    %v2227 = vld [vmem:[#allocation12 + $0x138] sm:$0xff]
    %v2228 = vld [vmem:[#allocation12 + $0x150] sm:$0xff]
    %v2229 = vld [vmem:[#allocation12 + $0x168] sm:$0xff]
    %2230 = vmatprep.subr.mxu0 0.0
    %2231 = vmatpush1.msra.mxu0 %v2229
    %2232 = vmatprep.subr.mxu0 0.0
    %2233 = vmatpush1.msra.mxu0 %v2228
    %2234 = vmatprep.subr.mxu0 0.0
    %2235 = vmatpush1.msra.mxu0 %v2227
    %2236 = vmatprep.subr.mxu0 0.0
    %2237 = vmatpush1.msra.mxu0 %v2226
    %2238 = vmatprep.subr.mxu0 0.0
    %2239 = vmatpush1.msra.mxu0 %v2225
    %2240 = vmatprep.subr.mxu0 0.0
    %2241 = vmatpush1.msra.mxu0 %v2224
    %2242 = vmatprep.subr.mxu0 0.0
    %2243 = vmatpush1.msra.mxu0 %v2223
    %2244 = vmatprep.subr.mxu0 0.0
    %2245 = vmatpush1.msra.mxu0 %v2222
    %2246 = vmatprep.subr.mxu0 0.0
    %2247 = vmatpush1.msra.mxu0 %v2221
    %2248 = vmatprep.subr.mxu0 0.0
    %2249 = vmatpush1.msra.mxu0 %v2220
    %2250 = vmatprep.subr.mxu0 0.0
    %2251 = vmatpush1.msra.mxu0 %v2219
    %2252 = vmatprep.subr.mxu0 0.0
    %2253 = vmatpush1.msra.mxu0 %v2218
    %2254 = vmatprep.subr.mxu0 0.0
    %2255 = vmatpush1.msra.mxu0 %v2217
    %2256 = vmatprep.subr.mxu0 0.0
    %2257 = vmatpush1.msra.mxu0 %v2216
    %2258 = vmatprep.subr.mxu0 0.0
    %2259 = vmatpush1.msra.mxu0 %v2215
    %2260 = vmatprep.subr.mxu0 0.0
    %2261 = vmatpush1.msra.mxu0 %v2214
    %2262 = vmatprep.subr.mxu0 0.0
    %2263 = vmatpush2.msra.mxu0 0.0
    %2264 = vmatprep.subr.mxu0 0.0
    %2265 = vmatpush2.msra.mxu0 0.0
    %2266 = vmatprep.subr.mxu0 0.0
    %2267 = vmatpush2.msra.mxu0 0.0
    %2268 = vmatprep.subr.mxu0 0.0
    %2269 = vmatpush2.msra.mxu0 0.0
    %2270 = vmatprep.subr.mxu0 0.0
    %2271 = vmatpush2.msra.mxu0 0.0
    %2272 = vmatprep.subr.mxu0 0.0
    %2273 = vmatpush2.msra.mxu0 0.0
    %2274 = vmatprep.subr.mxu0 0.0
    %2275 = vmatpush2.msra.mxu0 0.0
    %2276 = vmatprep.subr.mxu0 0.0
    %2277 = vmatpush2.msra.mxu0 0.0
    %2278 = vmatprep.subr.mxu0 0.0
    %2279 = vmatpush2.msra.mxu0 0.0
    %2280 = vmatprep.subr.mxu0 0.0
    %2281 = vmatpush2.msra.mxu0 0.0
    %2282 = vmatprep.subr.mxu0 0.0
    %2283 = vmatpush2.msra.mxu0 0.0
    %2284 = vmatprep.subr.mxu0 0.0
    %2285 = vmatpush2.msra.mxu0 0.0
    %2286 = vmatprep.subr.mxu0 0.0
    %2287 = vmatpush2.msra.mxu0 0.0
    %2288 = vmatprep.subr.mxu0 0.0
    %2289 = vmatpush2.msra.mxu0 0.0
    %2290 = vmatprep.subr.mxu0 0.0
    %2291 = vmatpush2.msra.mxu0 0.0
    %2292 = vmatprep.subr.mxu0 0.0
    %2293 = vmatpush2.msra.mxu0 0.0
    %2294 = vmatprep.mubr.f32.mxu0 0.0
    %2295 = vmatmul.mubr.f32.gmra.mxu0 %v2205
    %v2296 = vpop.f32.mrf.mxu0
    %v2297 = vadd.f32 0.0, %v2296
    %v2298 = vpop.f32.mrf.mxu0
    %2299 = vdwg.mxu0
    %v2300 = vld [vmem:[#allocation12 + $0x8] sm:$0xff]
    %v2301 = vld [vmem:[#allocation12 + $0x20] sm:$0xff]
    %v2302 = vld [vmem:[#allocation12 + $0x38] sm:$0xff]
    %v2303 = vld [vmem:[#allocation12 + $0x50] sm:$0xff]
    %v2304 = vld [vmem:[#allocation12 + $0x68] sm:$0xff]
    %v2305 = vld [vmem:[#allocation12 + $0x80] sm:$0xff]
    %v2306 = vld [vmem:[#allocation12 + $0x98] sm:$0xff]
    %v2307 = vld [vmem:[#allocation12 + $0xb0] sm:$0xff]
    %v2308 = vld [vmem:[#allocation12 + $0xc8] sm:$0xff]
    %v2309 = vld [vmem:[#allocation12 + $0xe0] sm:$0xff]
    %v2310 = vld [vmem:[#allocation12 + $0xf8] sm:$0xff]
    %v2311 = vld [vmem:[#allocation12 + $0x110] sm:$0xff]
    %v2312 = vld [vmem:[#allocation12 + $0x128] sm:$0xff]
    %v2313 = vld [vmem:[#allocation12 + $0x140] sm:$0xff]
    %v2314 = vld [vmem:[#allocation12 + $0x158] sm:$0xff]
    %v2315 = vld [vmem:[#allocation12 + $0x170] sm:$0xff]
    %2316 = vmatprep.subr.mxu0 0.0
    %2317 = vmatpush1.msra.mxu0 %v2315
    %2318 = vmatprep.subr.mxu0 0.0
    %2319 = vmatpush1.msra.mxu0 %v2314
    %2320 = vmatprep.subr.mxu0 0.0
    %2321 = vmatpush1.msra.mxu0 %v2313
    %2322 = vmatprep.subr.mxu0 0.0
    %2323 = vmatpush1.msra.mxu0 %v2312
    %2324 = vmatprep.subr.mxu0 0.0
    %2325 = vmatpush1.msra.mxu0 %v2311
    %2326 = vmatprep.subr.mxu0 0.0
    %2327 = vmatpush1.msra.mxu0 %v2310
    %2328 = vmatprep.subr.mxu0 0.0
    %2329 = vmatpush1.msra.mxu0 %v2309
    %2330 = vmatprep.subr.mxu0 0.0
    %2331 = vmatpush1.msra.mxu0 %v2308
    %2332 = vmatprep.subr.mxu0 0.0
    %2333 = vmatpush1.msra.mxu0 %v2307
    %2334 = vmatprep.subr.mxu0 0.0
    %2335 = vmatpush1.msra.mxu0 %v2306
    %2336 = vmatprep.subr.mxu0 0.0
    %2337 = vmatpush1.msra.mxu0 %v2305
    %2338 = vmatprep.subr.mxu0 0.0
    %2339 = vmatpush1.msra.mxu0 %v2304
    %2340 = vmatprep.subr.mxu0 0.0
    %2341 = vmatpush1.msra.mxu0 %v2303
    %2342 = vmatprep.subr.mxu0 0.0
    %2343 = vmatpush1.msra.mxu0 %v2302
    %2344 = vmatprep.subr.mxu0 0.0
    %2345 = vmatpush1.msra.mxu0 %v2301
    %2346 = vmatprep.subr.mxu0 0.0
    %2347 = vmatpush1.msra.mxu0 %v2300
    %2348 = vmatprep.subr.mxu0 0.0
    %2349 = vmatpush2.msra.mxu0 0.0
    %2350 = vmatprep.subr.mxu0 0.0
    %2351 = vmatpush2.msra.mxu0 0.0
    %2352 = vmatprep.subr.mxu0 0.0
    %2353 = vmatpush2.msra.mxu0 0.0
    %2354 = vmatprep.subr.mxu0 0.0
    %2355 = vmatpush2.msra.mxu0 0.0
    %2356 = vmatprep.subr.mxu0 0.0
    %2357 = vmatpush2.msra.mxu0 0.0
    %2358 = vmatprep.subr.mxu0 0.0
    %2359 = vmatpush2.msra.mxu0 0.0
    %2360 = vmatprep.subr.mxu0 0.0
    %2361 = vmatpush2.msra.mxu0 0.0
    %2362 = vmatprep.subr.mxu0 0.0
    %2363 = vmatpush2.msra.mxu0 0.0
    %2364 = vmatprep.subr.mxu0 0.0
    %2365 = vmatpush2.msra.mxu0 0.0
    %2366 = vmatprep.subr.mxu0 0.0
    %2367 = vmatpush2.msra.mxu0 0.0
    %2368 = vmatprep.subr.mxu0 0.0
    %2369 = vmatpush2.msra.mxu0 0.0
    %2370 = vmatprep.subr.mxu0 0.0
    %2371 = vmatpush2.msra.mxu0 0.0
    %2372 = vmatprep.subr.mxu0 0.0
    %2373 = vmatpush2.msra.mxu0 0.0
    %2374 = vmatprep.subr.mxu0 0.0
    %2375 = vmatpush2.msra.mxu0 0.0
    %2376 = vmatprep.subr.mxu0 0.0
    %2377 = vmatpush2.msra.mxu0 0.0
    %2378 = vmatprep.subr.mxu0 0.0
    %2379 = vmatpush2.msra.mxu0 0.0
    %2380 = vmatprep.mubr.f32.mxu0 0.0
    %2381 = vmatmul.mubr.f32.gmra.mxu0 %v2205
    %v2382 = vpop.f32.mrf.mxu0
    %v2383 = vadd.f32 0.0, %v2382
    %v2384 = vpop.f32.mrf.mxu0
    %2385 = vdwg.mxu0
    %v2386 = vld [vmem:[#allocation12 + $0x10] sm:$0xff]
    %v2387 = vld [vmem:[#allocation12 + $0x28] sm:$0xff]
    %v2388 = vld [vmem:[#allocation12 + $0x40] sm:$0xff]
    %v2389 = vld [vmem:[#allocation12 + $0x58] sm:$0xff]
    %v2390 = vld [vmem:[#allocation12 + $0x70] sm:$0xff]
    %v2391 = vld [vmem:[#allocation12 + $0x88] sm:$0xff]
    %v2392 = vld [vmem:[#allocation12 + $0xa0] sm:$0xff]
    %v2393 = vld [vmem:[#allocation12 + $0xb8] sm:$0xff]
    %v2394 = vld [vmem:[#allocation12 + $0xd0] sm:$0xff]
    %v2395 = vld [vmem:[#allocation12 + $0xe8] sm:$0xff]
    %v2396 = vld [vmem:[#allocation12 + $0x100] sm:$0xff]
    %v2397 = vld [vmem:[#allocation12 + $0x118] sm:$0xff]
    %v2398 = vld [vmem:[#allocation12 + $0x130] sm:$0xff]
    %v2399 = vld [vmem:[#allocation12 + $0x148] sm:$0xff]
    %v2400 = vld [vmem:[#allocation12 + $0x160] sm:$0xff]
    %v2401 = vld [vmem:[#allocation12 + $0x178] sm:$0xff]
    %v2402 = vadd.f32 %v2211, %v2297
    %v2403 = vxor.u32 %v2402, 2147483648
    %v2404 = vmul.f32 %v2403, 1.442695
    %v2405 = vpow.pop %v2404
    %v2406 = vadd.f32 %v2405, 1.0
    %v2407 = vrcp.pop %v2406
    %v2408 = vmul.f32 1.0, %v2407
    %v2409 = vadd.f32 %v2212, %v2383
    %v2410 = vxor.u32 %v2409, 2147483648
    %v2411 = vmul.f32 %v2410, 1.442695
    %v2412 = vpow.pop %v2411
    %v2413 = vadd.f32 %v2412, 1.0
    %v2414 = vrcp.pop %v2413
    %v2415 = vmul.f32 1.0, %v2414
    %2416 = vmatprep.subr.mxu0 0.0
    %2417 = vmatpush1.msra.mxu0 %v2401
    %2418 = vmatprep.subr.mxu0 0.0
    %2419 = vmatpush1.msra.mxu0 %v2400
    %2420 = vmatprep.subr.mxu0 0.0
    %2421 = vmatpush1.msra.mxu0 %v2399
    %2422 = vmatprep.subr.mxu0 0.0
    %2423 = vmatpush1.msra.mxu0 %v2398
    %2424 = vmatprep.subr.mxu0 0.0
    %2425 = vmatpush1.msra.mxu0 %v2397
    %2426 = vmatprep.subr.mxu0 0.0
    %2427 = vmatpush1.msra.mxu0 %v2396
    %2428 = vmatprep.subr.mxu0 0.0
    %2429 = vmatpush1.msra.mxu0 %v2395
    %2430 = vmatprep.subr.mxu0 0.0
    %2431 = vmatpush1.msra.mxu0 %v2394
    %2432 = vmatprep.subr.mxu0 0.0
    %2433 = vmatpush1.msra.mxu0 %v2393
    %2434 = vmatprep.subr.mxu0 0.0
    %2435 = vmatpush1.msra.mxu0 %v2392
    %2436 = vmatprep.subr.mxu0 0.0
    %2437 = vmatpush1.msra.mxu0 %v2391
    %2438 = vmatprep.subr.mxu0 0.0
    %2439 = vmatpush1.msra.mxu0 %v2390
    %2440 = vmatprep.subr.mxu0 0.0
    %2441 = vmatpush1.msra.mxu0 %v2389
    %2442 = vmatprep.subr.mxu0 0.0
    %2443 = vmatpush1.msra.mxu0 %v2388
    %2444 = vmatprep.subr.mxu0 0.0
    %2445 = vmatpush1.msra.mxu0 %v2387
    %2446 = vmatprep.subr.mxu0 0.0
    %2447 = vmatpush1.msra.mxu0 %v2386
    %2448 = vmatprep.subr.mxu0 0.0
    %2449 = vmatpush2.msra.mxu0 0.0
    %2450 = vmatprep.subr.mxu0 0.0
    %2451 = vmatpush2.msra.mxu0 0.0
    %2452 = vmatprep.subr.mxu0 0.0
    %2453 = vmatpush2.msra.mxu0 0.0
    %2454 = vmatprep.subr.mxu0 0.0
    %2455 = vmatpush2.msra.mxu0 0.0
    %2456 = vmatprep.subr.mxu0 0.0
    %2457 = vmatpush2.msra.mxu0 0.0
    %2458 = vmatprep.subr.mxu0 0.0
    %2459 = vmatpush2.msra.mxu0 0.0
    %2460 = vmatprep.subr.mxu0 0.0
    %2461 = vmatpush2.msra.mxu0 0.0
    %2462 = vmatprep.subr.mxu0 0.0
    %2463 = vmatpush2.msra.mxu0 0.0
    %2464 = vmatprep.subr.mxu0 0.0
    %2465 = vmatpush2.msra.mxu0 0.0
    %2466 = vmatprep.subr.mxu0 0.0
    %2467 = vmatpush2.msra.mxu0 0.0
    %2468 = vmatprep.subr.mxu0 0.0
    %2469 = vmatpush2.msra.mxu0 0.0
    %2470 = vmatprep.subr.mxu0 0.0
    %2471 = vmatpush2.msra.mxu0 0.0
    %2472 = vmatprep.subr.mxu0 0.0
    %2473 = vmatpush2.msra.mxu0 0.0
    %2474 = vmatprep.subr.mxu0 0.0
    %2475 = vmatpush2.msra.mxu0 0.0
    %2476 = vmatprep.subr.mxu0 0.0
    %2477 = vmatpush2.msra.mxu0 0.0
    %2478 = vmatprep.subr.mxu0 0.0
    %2479 = vmatpush2.msra.mxu0 0.0
    %2480 = vmatprep.mubr.f32.mxu0 0.0
    %2481 = vmatmul.mubr.f32.gmra.mxu0 %v2205
    %v2482 = vpop.f32.mrf.mxu0
    %v2483 = vadd.f32 %v485, %v2482
    %v2484 = vpop.f32.mrf.mxu0
    %2485 = vdwg.mxu0
    %v2486 = vmul.f32 %v2408, %v2483
    %v2487 = vadd.f32 %v2213, %v2486
    %v2488 = vtanh.pop %v2487
    %v2489 = vsub.f32 1.0, %v2415
    %v2490 = vmul.f32 %v2489, %v2488
    %v2491 = vmul.f32 %v2415, %v2205
    %v2492 = vadd.f32 %v2490, %v2491
    %s2493 = scalar_lea.vmem [#allocation3], 48
    %2494 = vst [vmem:[%s2493] sm:$0xff] %v2492
    %s2495 = smul.u32 7, 3
    %s2496 = smul.addr %s2495, 8
    %s2497 = scalar_lea.vmem [#allocation2], %s2496
    %v2498 = vld [vmem:[%s2497] sm:$0xff]
    %v2499 = vld [vmem:[%s2497 + $0x8] sm:$0xff]
    %v2500 = vld [vmem:[%s2497 + $0x10] sm:$0xff]
    %v2501 = vld [vmem:[#allocation12] sm:$0xff]
    %v2502 = vld [vmem:[#allocation12 + $0x18] sm:$0xff]
    %v2503 = vld [vmem:[#allocation12 + $0x30] sm:$0xff]
    %v2504 = vld [vmem:[#allocation12 + $0x48] sm:$0xff]
    %v2505 = vld [vmem:[#allocation12 + $0x60] sm:$0xff]
    %v2506 = vld [vmem:[#allocation12 + $0x78] sm:$0xff]
    %v2507 = vld [vmem:[#allocation12 + $0x90] sm:$0xff]
    %v2508 = vld [vmem:[#allocation12 + $0xa8] sm:$0xff]
    %v2509 = vld [vmem:[#allocation12 + $0xc0] sm:$0xff]
    %v2510 = vld [vmem:[#allocation12 + $0xd8] sm:$0xff]
    %v2511 = vld [vmem:[#allocation12 + $0xf0] sm:$0xff]
    %v2512 = vld [vmem:[#allocation12 + $0x108] sm:$0xff]
    %v2513 = vld [vmem:[#allocation12 + $0x120] sm:$0xff]
    %v2514 = vld [vmem:[#allocation12 + $0x138] sm:$0xff]
    %v2515 = vld [vmem:[#allocation12 + $0x150] sm:$0xff]
    %v2516 = vld [vmem:[#allocation12 + $0x168] sm:$0xff]
    %2517 = vmatprep.subr.mxu0 0.0
    %2518 = vmatpush1.msra.mxu0 %v2516
    %2519 = vmatprep.subr.mxu0 0.0
    %2520 = vmatpush1.msra.mxu0 %v2515
    %2521 = vmatprep.subr.mxu0 0.0
    %2522 = vmatpush1.msra.mxu0 %v2514
    %2523 = vmatprep.subr.mxu0 0.0
    %2524 = vmatpush1.msra.mxu0 %v2513
    %2525 = vmatprep.subr.mxu0 0.0
    %2526 = vmatpush1.msra.mxu0 %v2512
    %2527 = vmatprep.subr.mxu0 0.0
    %2528 = vmatpush1.msra.mxu0 %v2511
    %2529 = vmatprep.subr.mxu0 0.0
    %2530 = vmatpush1.msra.mxu0 %v2510
    %2531 = vmatprep.subr.mxu0 0.0
    %2532 = vmatpush1.msra.mxu0 %v2509
    %2533 = vmatprep.subr.mxu0 0.0
    %2534 = vmatpush1.msra.mxu0 %v2508
    %2535 = vmatprep.subr.mxu0 0.0
    %2536 = vmatpush1.msra.mxu0 %v2507
    %2537 = vmatprep.subr.mxu0 0.0
    %2538 = vmatpush1.msra.mxu0 %v2506
    %2539 = vmatprep.subr.mxu0 0.0
    %2540 = vmatpush1.msra.mxu0 %v2505
    %2541 = vmatprep.subr.mxu0 0.0
    %2542 = vmatpush1.msra.mxu0 %v2504
    %2543 = vmatprep.subr.mxu0 0.0
    %2544 = vmatpush1.msra.mxu0 %v2503
    %2545 = vmatprep.subr.mxu0 0.0
    %2546 = vmatpush1.msra.mxu0 %v2502
    %2547 = vmatprep.subr.mxu0 0.0
    %2548 = vmatpush1.msra.mxu0 %v2501
    %2549 = vmatprep.subr.mxu0 0.0
    %2550 = vmatpush2.msra.mxu0 0.0
    %2551 = vmatprep.subr.mxu0 0.0
    %2552 = vmatpush2.msra.mxu0 0.0
    %2553 = vmatprep.subr.mxu0 0.0
    %2554 = vmatpush2.msra.mxu0 0.0
    %2555 = vmatprep.subr.mxu0 0.0
    %2556 = vmatpush2.msra.mxu0 0.0
    %2557 = vmatprep.subr.mxu0 0.0
    %2558 = vmatpush2.msra.mxu0 0.0
    %2559 = vmatprep.subr.mxu0 0.0
    %2560 = vmatpush2.msra.mxu0 0.0
    %2561 = vmatprep.subr.mxu0 0.0
    %2562 = vmatpush2.msra.mxu0 0.0
    %2563 = vmatprep.subr.mxu0 0.0
    %2564 = vmatpush2.msra.mxu0 0.0
    %2565 = vmatprep.subr.mxu0 0.0
    %2566 = vmatpush2.msra.mxu0 0.0
    %2567 = vmatprep.subr.mxu0 0.0
    %2568 = vmatpush2.msra.mxu0 0.0
    %2569 = vmatprep.subr.mxu0 0.0
    %2570 = vmatpush2.msra.mxu0 0.0
    %2571 = vmatprep.subr.mxu0 0.0
    %2572 = vmatpush2.msra.mxu0 0.0
    %2573 = vmatprep.subr.mxu0 0.0
    %2574 = vmatpush2.msra.mxu0 0.0
    %2575 = vmatprep.subr.mxu0 0.0
    %2576 = vmatpush2.msra.mxu0 0.0
    %2577 = vmatprep.subr.mxu0 0.0
    %2578 = vmatpush2.msra.mxu0 0.0
    %2579 = vmatprep.subr.mxu0 0.0
    %2580 = vmatpush2.msra.mxu0 0.0
    %2581 = vmatprep.mubr.f32.mxu0 0.0
    %2582 = vmatmul.mubr.f32.gmra.mxu0 %v2492
    %v2583 = vpop.f32.mrf.mxu0
    %v2584 = vadd.f32 0.0, %v2583
    %v2585 = vpop.f32.mrf.mxu0
    %2586 = vdwg.mxu0
    %v2587 = vld [vmem:[#allocation12 + $0x8] sm:$0xff]
    %v2588 = vld [vmem:[#allocation12 + $0x20] sm:$0xff]
    %v2589 = vld [vmem:[#allocation12 + $0x38] sm:$0xff]
    %v2590 = vld [vmem:[#allocation12 + $0x50] sm:$0xff]
    %v2591 = vld [vmem:[#allocation12 + $0x68] sm:$0xff]
    %v2592 = vld [vmem:[#allocation12 + $0x80] sm:$0xff]
    %v2593 = vld [vmem:[#allocation12 + $0x98] sm:$0xff]
    %v2594 = vld [vmem:[#allocation12 + $0xb0] sm:$0xff]
    %v2595 = vld [vmem:[#allocation12 + $0xc8] sm:$0xff]
    %v2596 = vld [vmem:[#allocation12 + $0xe0] sm:$0xff]
    %v2597 = vld [vmem:[#allocation12 + $0xf8] sm:$0xff]
    %v2598 = vld [vmem:[#allocation12 + $0x110] sm:$0xff]
    %v2599 = vld [vmem:[#allocation12 + $0x128] sm:$0xff]
    %v2600 = vld [vmem:[#allocation12 + $0x140] sm:$0xff]
    %v2601 = vld [vmem:[#allocation12 + $0x158] sm:$0xff]
    %v2602 = vld [vmem:[#allocation12 + $0x170] sm:$0xff]
    %2603 = vmatprep.subr.mxu0 0.0
    %2604 = vmatpush1.msra.mxu0 %v2602
    %2605 = vmatprep.subr.mxu0 0.0
    %2606 = vmatpush1.msra.mxu0 %v2601
    %2607 = vmatprep.subr.mxu0 0.0
    %2608 = vmatpush1.msra.mxu0 %v2600
    %2609 = vmatprep.subr.mxu0 0.0
    %2610 = vmatpush1.msra.mxu0 %v2599
    %2611 = vmatprep.subr.mxu0 0.0
    %2612 = vmatpush1.msra.mxu0 %v2598
    %2613 = vmatprep.subr.mxu0 0.0
    %2614 = vmatpush1.msra.mxu0 %v2597
    %2615 = vmatprep.subr.mxu0 0.0
    %2616 = vmatpush1.msra.mxu0 %v2596
    %2617 = vmatprep.subr.mxu0 0.0
    %2618 = vmatpush1.msra.mxu0 %v2595
    %2619 = vmatprep.subr.mxu0 0.0
    %2620 = vmatpush1.msra.mxu0 %v2594
    %2621 = vmatprep.subr.mxu0 0.0
    %2622 = vmatpush1.msra.mxu0 %v2593
    %2623 = vmatprep.subr.mxu0 0.0
    %2624 = vmatpush1.msra.mxu0 %v2592
    %2625 = vmatprep.subr.mxu0 0.0
    %2626 = vmatpush1.msra.mxu0 %v2591
    %2627 = vmatprep.subr.mxu0 0.0
    %2628 = vmatpush1.msra.mxu0 %v2590
    %2629 = vmatprep.subr.mxu0 0.0
    %2630 = vmatpush1.msra.mxu0 %v2589
    %2631 = vmatprep.subr.mxu0 0.0
    %2632 = vmatpush1.msra.mxu0 %v2588
    %2633 = vmatprep.subr.mxu0 0.0
    %2634 = vmatpush1.msra.mxu0 %v2587
    %2635 = vmatprep.subr.mxu0 0.0
    %2636 = vmatpush2.msra.mxu0 0.0
    %2637 = vmatprep.subr.mxu0 0.0
    %2638 = vmatpush2.msra.mxu0 0.0
    %2639 = vmatprep.subr.mxu0 0.0
    %2640 = vmatpush2.msra.mxu0 0.0
    %2641 = vmatprep.subr.mxu0 0.0
    %2642 = vmatpush2.msra.mxu0 0.0
    %2643 = vmatprep.subr.mxu0 0.0
    %2644 = vmatpush2.msra.mxu0 0.0
    %2645 = vmatprep.subr.mxu0 0.0
    %2646 = vmatpush2.msra.mxu0 0.0
    %2647 = vmatprep.subr.mxu0 0.0
    %2648 = vmatpush2.msra.mxu0 0.0
    %2649 = vmatprep.subr.mxu0 0.0
    %2650 = vmatpush2.msra.mxu0 0.0
    %2651 = vmatprep.subr.mxu0 0.0
    %2652 = vmatpush2.msra.mxu0 0.0
    %2653 = vmatprep.subr.mxu0 0.0
    %2654 = vmatpush2.msra.mxu0 0.0
    %2655 = vmatprep.subr.mxu0 0.0
    %2656 = vmatpush2.msra.mxu0 0.0
    %2657 = vmatprep.subr.mxu0 0.0
    %2658 = vmatpush2.msra.mxu0 0.0
    %2659 = vmatprep.subr.mxu0 0.0
    %2660 = vmatpush2.msra.mxu0 0.0
    %2661 = vmatprep.subr.mxu0 0.0
    %2662 = vmatpush2.msra.mxu0 0.0
    %2663 = vmatprep.subr.mxu0 0.0
    %2664 = vmatpush2.msra.mxu0 0.0
    %2665 = vmatprep.subr.mxu0 0.0
    %2666 = vmatpush2.msra.mxu0 0.0
    %2667 = vmatprep.mubr.f32.mxu0 0.0
    %2668 = vmatmul.mubr.f32.gmra.mxu0 %v2492
    %v2669 = vpop.f32.mrf.mxu0
    %v2670 = vadd.f32 0.0, %v2669
    %v2671 = vpop.f32.mrf.mxu0
    %2672 = vdwg.mxu0
    %v2673 = vld [vmem:[#allocation12 + $0x10] sm:$0xff]
    %v2674 = vld [vmem:[#allocation12 + $0x28] sm:$0xff]
    %v2675 = vld [vmem:[#allocation12 + $0x40] sm:$0xff]
    %v2676 = vld [vmem:[#allocation12 + $0x58] sm:$0xff]
    %v2677 = vld [vmem:[#allocation12 + $0x70] sm:$0xff]
    %v2678 = vld [vmem:[#allocation12 + $0x88] sm:$0xff]
    %v2679 = vld [vmem:[#allocation12 + $0xa0] sm:$0xff]
    %v2680 = vld [vmem:[#allocation12 + $0xb8] sm:$0xff]
    %v2681 = vld [vmem:[#allocation12 + $0xd0] sm:$0xff]
    %v2682 = vld [vmem:[#allocation12 + $0xe8] sm:$0xff]
    %v2683 = vld [vmem:[#allocation12 + $0x100] sm:$0xff]
    %v2684 = vld [vmem:[#allocation12 + $0x118] sm:$0xff]
    %v2685 = vld [vmem:[#allocation12 + $0x130] sm:$0xff]
    %v2686 = vld [vmem:[#allocation12 + $0x148] sm:$0xff]
    %v2687 = vld [vmem:[#allocation12 + $0x160] sm:$0xff]
    %v2688 = vld [vmem:[#allocation12 + $0x178] sm:$0xff]
    %v2689 = vadd.f32 %v2498, %v2584
    %v2690 = vxor.u32 %v2689, 2147483648
    %v2691 = vmul.f32 %v2690, 1.442695
    %v2692 = vpow.pop %v2691
    %v2693 = vadd.f32 %v2692, 1.0
    %v2694 = vrcp.pop %v2693
    %v2695 = vmul.f32 1.0, %v2694
    %v2696 = vadd.f32 %v2499, %v2670
    %v2697 = vxor.u32 %v2696, 2147483648
    %v2698 = vmul.f32 %v2697, 1.442695
    %v2699 = vpow.pop %v2698
    %v2700 = vadd.f32 %v2699, 1.0
    %v2701 = vrcp.pop %v2700
    %v2702 = vmul.f32 1.0, %v2701
    %2703 = vmatprep.subr.mxu0 0.0
    %2704 = vmatpush1.msra.mxu0 %v2688
    %2705 = vmatprep.subr.mxu0 0.0
    %2706 = vmatpush1.msra.mxu0 %v2687
    %2707 = vmatprep.subr.mxu0 0.0
    %2708 = vmatpush1.msra.mxu0 %v2686
    %2709 = vmatprep.subr.mxu0 0.0
    %2710 = vmatpush1.msra.mxu0 %v2685
    %2711 = vmatprep.subr.mxu0 0.0
    %2712 = vmatpush1.msra.mxu0 %v2684
    %2713 = vmatprep.subr.mxu0 0.0
    %2714 = vmatpush1.msra.mxu0 %v2683
    %2715 = vmatprep.subr.mxu0 0.0
    %2716 = vmatpush1.msra.mxu0 %v2682
    %2717 = vmatprep.subr.mxu0 0.0
    %2718 = vmatpush1.msra.mxu0 %v2681
    %2719 = vmatprep.subr.mxu0 0.0
    %2720 = vmatpush1.msra.mxu0 %v2680
    %2721 = vmatprep.subr.mxu0 0.0
    %2722 = vmatpush1.msra.mxu0 %v2679
    %2723 = vmatprep.subr.mxu0 0.0
    %2724 = vmatpush1.msra.mxu0 %v2678
    %2725 = vmatprep.subr.mxu0 0.0
    %2726 = vmatpush1.msra.mxu0 %v2677
    %2727 = vmatprep.subr.mxu0 0.0
    %2728 = vmatpush1.msra.mxu0 %v2676
    %2729 = vmatprep.subr.mxu0 0.0
    %2730 = vmatpush1.msra.mxu0 %v2675
    %2731 = vmatprep.subr.mxu0 0.0
    %2732 = vmatpush1.msra.mxu0 %v2674
    %2733 = vmatprep.subr.mxu0 0.0
    %2734 = vmatpush1.msra.mxu0 %v2673
    %2735 = vmatprep.subr.mxu0 0.0
    %2736 = vmatpush2.msra.mxu0 0.0
    %2737 = vmatprep.subr.mxu0 0.0
    %2738 = vmatpush2.msra.mxu0 0.0
    %2739 = vmatprep.subr.mxu0 0.0
    %2740 = vmatpush2.msra.mxu0 0.0
    %2741 = vmatprep.subr.mxu0 0.0
    %2742 = vmatpush2.msra.mxu0 0.0
    %2743 = vmatprep.subr.mxu0 0.0
    %2744 = vmatpush2.msra.mxu0 0.0
    %2745 = vmatprep.subr.mxu0 0.0
    %2746 = vmatpush2.msra.mxu0 0.0
    %2747 = vmatprep.subr.mxu0 0.0
    %2748 = vmatpush2.msra.mxu0 0.0
    %2749 = vmatprep.subr.mxu0 0.0
    %2750 = vmatpush2.msra.mxu0 0.0
    %2751 = vmatprep.subr.mxu0 0.0
    %2752 = vmatpush2.msra.mxu0 0.0
    %2753 = vmatprep.subr.mxu0 0.0
    %2754 = vmatpush2.msra.mxu0 0.0
    %2755 = vmatprep.subr.mxu0 0.0
    %2756 = vmatpush2.msra.mxu0 0.0
    %2757 = vmatprep.subr.mxu0 0.0
    %2758 = vmatpush2.msra.mxu0 0.0
    %2759 = vmatprep.subr.mxu0 0.0
    %2760 = vmatpush2.msra.mxu0 0.0
    %2761 = vmatprep.subr.mxu0 0.0
    %2762 = vmatpush2.msra.mxu0 0.0
    %2763 = vmatprep.subr.mxu0 0.0
    %2764 = vmatpush2.msra.mxu0 0.0
    %2765 = vmatprep.subr.mxu0 0.0
    %2766 = vmatpush2.msra.mxu0 0.0
    %2767 = vmatprep.mubr.f32.mxu0 0.0
    %2768 = vmatmul.mubr.f32.gmra.mxu0 %v2492
    %v2769 = vpop.f32.mrf.mxu0
    %v2770 = vadd.f32 %v485, %v2769
    %v2771 = vpop.f32.mrf.mxu0
    %2772 = vdwg.mxu0
    %v2773 = vmul.f32 %v2695, %v2770
    %v2774 = vadd.f32 %v2500, %v2773
    %v2775 = vtanh.pop %v2774
    %v2776 = vsub.f32 1.0, %v2702
    %v2777 = vmul.f32 %v2776, %v2775
    %v2778 = vmul.f32 %v2702, %v2492
    %v2779 = vadd.f32 %v2777, %v2778
    %s2780 = scalar_lea.vmem [#allocation3], 56
    %2781 = vst [vmem:[%s2780] sm:$0xff] %v2779
    %v2782 = vld [vmem:[#allocation3] sm:$0xff]
    %v2783 = vld [vmem:[#allocation3 + $0x8] sm:$0xff]
    %v2784 = vld [vmem:[#allocation3 + $0x10] sm:$0xff]
    %v2785 = vld [vmem:[#allocation3 + $0x18] sm:$0xff]
    %v2786 = vld [vmem:[#allocation3 + $0x20] sm:$0xff]
    %v2787 = vld [vmem:[#allocation3 + $0x28] sm:$0xff]
    %v2788 = vld [vmem:[#allocation3 + $0x30] sm:$0xff]
    %v2789 = vld [vmem:[#allocation3 + $0x38] sm:$0xff]
    %v2791 = vlaneseq
    %v2792 = vshrl.u32 %v2791, 7
    %v2793 = vsub.s32 0, %v2792
    %v2794 = vrot.slane %v93, %v2793
    %v2796 = vmul.f32 %v2782, %v2794
    %v2797 = vmul.f32 %v2783, %v2794
    %v2798 = vmul.f32 %v2784, %v2794
    %v2799 = vmul.f32 %v2785, %v2794
    %v2800 = vmul.f32 %v2786, %v2794
    %v2801 = vmul.f32 %v2787, %v2794
    %v2802 = vmul.f32 %v2788, %v2794
    %v2803 = vmul.f32 %v2789, %v2794
    %2804 = vadd.xlane.f32.xlu0 %v2796
    %v2805 = vpop.xlane.xlu0 %2804
    %2806 = vadd.xlane.f32.xlu0 %v2797
    %v2807 = vpop.xlane.xlu0 %2806
    %2808 = vadd.xlane.f32.xlu0 %v2798
    %v2809 = vpop.xlane.xlu0 %2808
    %2810 = vadd.xlane.f32.xlu0 %v2799
    %v2811 = vpop.xlane.xlu0 %2810
    %2812 = vadd.xlane.f32.xlu0 %v2800
    %v2813 = vpop.xlane.xlu0 %2812
    %2814 = vadd.xlane.f32.xlu0 %v2801
    %v2815 = vpop.xlane.xlu0 %2814
    %2816 = vadd.xlane.f32.xlu0 %v2802
    %v2817 = vpop.xlane.xlu0 %2816
    %2818 = vadd.xlane.f32.xlu0 %v2803
    %v2819 = vpop.xlane.xlu0 %2818
    %v2821 = vlaneseq
    %v2822 = vshrl.u32 %v2821, 7
    %v2823 = vsub.s32 0, %v2822
    %v2824 = vrot.slane %v94, %v2823
    %2825 = vset.pattern.permute.xlu0 0
    %2826 = vperm.xlu0 %2825, %v2824
    %v2827 = vpop.permute.xlu0 %2826
    %v2829 = vadd.f32 %v2805, %v2827
    %v2830 = vadd.f32 %v2807, %v2827
    %v2831 = vadd.f32 %v2809, %v2827
    %v2832 = vadd.f32 %v2811, %v2827
    %v2833 = vadd.f32 %v2813, %v2827
    %v2834 = vadd.f32 %v2815, %v2827
    %v2835 = vadd.f32 %v2817, %v2827
    %v2836 = vadd.f32 %v2819, %v2827
    %v2845 = vlaneseq
    %v2846 = vand.u32 %v2845, 127
    %v2847 = vlaneseq
    %v2848 = vshrl.u32 %v2847, 7
    %v2849 = vsub.s32 %v2846, %v2848
    %v2850 = vrot.slane %v2829, %v2849
    %v2851 = vlaneseq
    %v2852 = vshrl.u32 %v2851, 7
    %v2853 = vsub.s32 %v2846, %v2852
    %v2854 = vrot.slane %v2830, %v2853
    %v2855 = vlaneseq
    %v2856 = vshrl.u32 %v2855, 7
    %v2857 = vsub.s32 %v2846, %v2856
    %v2858 = vrot.slane %v2831, %v2857
    %v2859 = vlaneseq
    %v2860 = vshrl.u32 %v2859, 7
    %v2861 = vsub.s32 %v2846, %v2860
    %v2862 = vrot.slane %v2832, %v2861
    %v2863 = vlaneseq
    %v2864 = vshrl.u32 %v2863, 7
    %v2865 = vsub.s32 %v2846, %v2864
    %v2866 = vrot.slane %v2833, %v2865
    %v2867 = vlaneseq
    %v2868 = vshrl.u32 %v2867, 7
    %v2869 = vsub.s32 %v2846, %v2868
    %v2870 = vrot.slane %v2834, %v2869
    %v2871 = vlaneseq
    %v2872 = vshrl.u32 %v2871, 7
    %v2873 = vsub.s32 %v2846, %v2872
    %v2874 = vrot.slane %v2835, %v2873
    %v2875 = vlaneseq
    %v2876 = vshrl.u32 %v2875, 7
    %v2877 = vsub.s32 %v2846, %v2876
    %v2878 = vrot.slane %v2836, %v2877
    %vm2879 = vcmask 1041409
    %v2880 = vsel %vm2879, %v2854, %v2850
    %vm2881 = vcmask 1042434
    %v2882 = vsel %vm2881, %v2858, %v2880
    %vm2883 = vcmask 1043459
    %v2884 = vsel %vm2883, %v2862, %v2882
    %vm2885 = vcmask 1044484
    %v2886 = vsel %vm2885, %v2866, %v2884
    %vm2887 = vcmask 1045509
    %v2888 = vsel %vm2887, %v2870, %v2886
    %vm2889 = vcmask 1046534
    %v2890 = vsel %vm2889, %v2874, %v2888
    %vm2891 = vcmask 1047559
    %v2892 = vsel %vm2891, %v2878, %v2890
    %vm2894 = vcmask 64512
    %2895 = vst.msk [vmem:[#allocation13] sm:$0xff] %vm2894, %v2892
    // Predicated region
    $region46: #{tpu_custom_call.1} parent=1 // pred_check
      _
    $region47: #{tpu_custom_call.1} parent=1 // pred_check_branch
      %2897 = sbr.rel (0) target = $region49
    $region48: #{tpu_custom_call.1} parent=1 // pred_region
      %s2899 = ssub.s32 128, 128
      %2900 = vsyncadd [#allocation6], %s2899
      %s2902 = sshll.u32 [#allocation13], 4
      %s2903 = int_to_ptr.vmem [resolvable:$true] %s2902
      %2905 = dma.vmem_to_hbm [thread:$0]  %s2903, 128, %s6, [#allocation6]
    $region49: #{tpu_custom_call.1} parent=1 // pred_fallthru
      _
    // Predicated region
    $region50: #{tpu_custom_call.1} parent=1 // pred_check
      _
    $region51: #{tpu_custom_call.1} parent=1 // pred_check_branch
      %2907 = sbr.rel (0) target = $region53
    $region52: #{tpu_custom_call.1} parent=1 // pred_region
      %2908 = dma.done [#allocation6], 128
    $region53: #{tpu_custom_call.1} parent=1 // pred_fallthru
      _
    %2909 = vsyncpa [#allocation5], 1
    %2910 = vsyncpa [#allocation8], 1
    %2911 = vsyncpa [#allocation11], 1
    %2912 = vsyncpa [#allocation6], 1

</llo_original>
